<compile_context>
chip_gen: v7x
topology: tpu7x:2x2x1
jax: 0.10.0
libtpu: 0.0.40
codegen_flags: <defaults>
</compile_context>

<pallas_src>
import functools

import jax
import jax.numpy as jnp
from jax.experimental import pallas as pl
from jax.experimental.pallas import tpu as pltpu

NEG_INF = -1e9
LEAKY_SLOPE = 0.2  # DGL GATConv default negative_slope


def _round_up(a, b):
    return (a + b - 1) // b * b


def _leaky_relu(x):
    return jnp.where(x > 0, x, LEAKY_SLOPE * x)


def _fast_recip(x):
    # EUP approximate reciprocal + one Newton-Raphson step:
    # avoids the VPU divide while keeping ~f32 accuracy.
    r = pl.reciprocal(x, approx=True)
    return r * (2.0 - x * r)


# ---------------------------------------------------------------------------
# Kernels
# ---------------------------------------------------------------------------

def project_kernel(x_ref, w_ref, alr_ref, z_ref, ee_ref):
    """Per-row-tile projection.

    z  = x @ W                      (TQ, H*D)
    ee = z @ A_lr = [el | er]       (TQ, 2H)  -- all heads' attention scores
                                               in one matmul instead of 2H
                                               per-head reduction passes.
    """
    z = jnp.dot(x_ref[...], w_ref[...], preferred_element_type=jnp.float32)
    z_ref[...] = z
    ee_ref[...] = jnp.dot(z, alr_ref[...], preferred_element_type=jnp.float32)


def gat_attend_kernel(num_heads, out_dim, mode,
                      adj_ref, er_ref, elt_ref, z_ref, b_ref, *rest):
    """Per-dst-row-tile masked edge softmax + neighborhood aggregation.

    mode == "flatten_relu": concat heads + ReLU                  -> (TQ, H*D)
    mode == "mean_head":    mean heads + ReLU + Linear + softmax -> (TQ, out_dim)

    adj_ref : (TQ, N)   streamed destination rows
    er_ref  : (TQ, H)   destination attention scores (node-major)
    elt_ref : (H, N)    source attention scores (lane-major, resident)
    z_ref   : (N, H*D)  projected source features (resident)
    b_ref   : (1, H*D)  per-head bias
    """
    if mode == "mean_head":
        wo_ref, bo_ref, out_ref = rest
    else:
        (out_ref,) = rest

    edge = adj_ref[...] > 0.0                         # hoisted once for all heads

    head_outs = []
    for h in range(num_heads):
        er_h = er_ref[:, h:h + 1]                     # (TQ, 1)  dst scores
        el_h = elt_ref[h:h + 1, :]                    # (1, N)   src scores (lane major)
        e = _leaky_relu(er_h + el_h)                  # (TQ, N)  no transpose needed
        e = jnp.where(edge, e, NEG_INF)               # single mask; exp -> exact 0
        m = jnp.max(e, axis=-1, keepdims=True)
        p = jnp.exp(e - m)
        # Rows are guaranteed >=1 edge (self-loops), so the sum is >= 1.
        alpha = p * _fast_recip(jnp.sum(p, axis=-1, keepdims=True))
        zh = z_ref[:, h * out_dim:(h + 1) * out_dim]  # (N, D)
        bh = b_ref[:, h * out_dim:(h + 1) * out_dim]  # (1, D)
        head_outs.append(
            jnp.dot(alpha, zh, preferred_element_type=jnp.float32) + bh)

    if mode == "flatten_relu":
        out_ref[...] = jnp.maximum(jnp.concatenate(head_outs, axis=-1), 0.0)
    else:
        acc = head_outs[0]
        for o in head_outs[1:]:
            acc = acc + o
        emd = acc * (1.0 / num_heads)                 # mean over heads
        logits = jnp.dot(jnp.maximum(emd, 0.0), wo_ref[...],
                         preferred_element_type=jnp.float32) + bo_ref[...]
        logits = logits - jnp.max(logits, axis=-1, keepdims=True)
        ex = jnp.exp(logits)
        out_ref[...] = ex * _fast_recip(jnp.sum(ex, axis=-1, keepdims=True))


# ---------------------------------------------------------------------------
# Host-side helpers / wrapper
# ---------------------------------------------------------------------------

def _attn_matrix(a_l, a_r):
    """Block matrix A_lr (H*D, 2H) so that z @ A_lr = [el | er] for all heads."""
    num_heads, out_dim = a_l.shape
    hd = num_heads * out_dim
    a = jnp.zeros((hd, 2 * num_heads), jnp.float32)
    for h in range(num_heads):
        a = a.at[h * out_dim:(h + 1) * out_dim, h].set(a_l[h])
        a = a.at[h * out_dim:(h + 1) * out_dim, num_heads + h].set(a_r[h])
    return a


def gat_forward(x, adj, params, num_heads, hidden, row_tile=256):
    """Full forward pass: gat1 -> flatten -> ReLU -> gat2 -> mean -> ReLU -> Linear -> softmax."""
    n = x.shape[0]
    hd = num_heads * hidden
    out_dim = params["wo"].shape[1]

    # Destination-row tile (sublane aligned); pad N if needed.  Zero-padded
    # rows/cols are masked out by adj (all-zero), so they never contaminate
    # real rows, and the padded output rows are sliced off at the end.
    tq = _round_up(min(row_tile, _round_up(n, 8)), 8)
    n_pad = _round_up(n, tq)
    if n_pad != n:
        x = jnp.pad(x, ((0, n_pad - n), (0, 0)))
        adj = jnp.pad(adj, ((0, n_pad - n), (0, n_pad - n)))
    grid = (n_pad // tq,)

    cparams = pltpu.CompilerParams(
        # dst-row tiles are fully independent -> megacore split on v7x.
        dimension_semantics=("parallel",),
        # explicit VMEM ceiling; leaves headroom under v7x's 64 MiB per TC.
        vmem_limit_bytes=48 * 1024 * 1024,
    )

    def project(feat, w, alr):
        fin = feat.shape[1]
        return pl.pallas_call(
            project_kernel,
            grid=grid,
            in_specs=[
                pl.BlockSpec((tq, fin), lambda i: (i, 0)),           # x tile (streamed)
                pl.BlockSpec((fin, hd), lambda i: (0, 0)),           # W (resident)
                pl.BlockSpec((hd, 2 * num_heads), lambda i: (0, 0)),  # A_lr (resident)
            ],
            out_specs=[
                pl.BlockSpec((tq, hd), lambda i: (i, 0)),             # z tile
                pl.BlockSpec((tq, 2 * num_heads), lambda i: (i, 0)),  # [el | er] tile
            ],
            out_shape=[
                jax.ShapeDtypeStruct((n_pad, hd), jnp.float32),
                jax.ShapeDtypeStruct((n_pad, 2 * num_heads), jnp.float32),
            ],
            compiler_params=cparams,
        )(feat, w, alr)

    def attend(z, ee, bias, mode, extra=()):
        # One tiny XLA transpose per layer gives a lane-major el^T (H, N),
        # replacing the H per-head in-kernel transposes of the old version.
        el_t = ee[:, :num_heads].T          # (H, N)
        er = ee[:, num_heads:]              # (N, H)
        kern = functools.partial(gat_attend_kernel, num_heads, hidden, mode)
        in_specs = [
            pl.BlockSpec((tq, n_pad), lambda i: (i, 0)),          # adj dst rows (streamed)
            pl.BlockSpec((tq, num_heads), lambda i: (i, 0)),      # er tile
            pl.BlockSpec((num_heads, n_pad), lambda i: (0, 0)),   # el^T (resident)
            pl.BlockSpec((n_pad, hd), lambda i: (0, 0)),          # z sources (resident)
            pl.BlockSpec((1, hd), lambda i: (0, 0)),              # per-head bias
        ]
        args = [adj, er, el_t, z, bias]
        if mode == "mean_head":
            wo, bo = extra
            in_specs += [
                pl.BlockSpec((hidden, out_dim), lambda i: (0, 0)),
                pl.BlockSpec((1, out_dim), lambda i: (0, 0)),
            ]
            args += [wo, bo]
            out_spec = pl.BlockSpec((tq, out_dim), lambda i: (i, 0))
            out_shape = jax.ShapeDtypeStruct((n_pad, out_dim), jnp.float32)
        else:
            out_spec = pl.BlockSpec((tq, hd), lambda i: (i, 0))
            out_shape = jax.ShapeDtypeStruct((n_pad, hd), jnp.float32)
        return pl.pallas_call(
            kern,
            grid=grid,
            in_specs=in_specs,
            out_specs=out_spec,
            out_shape=out_shape,
            compiler_params=cparams,
        )(*args)

    alr1 = _attn_matrix(params["al1"], params["ar1"])
    alr2 = _attn_matrix(params["al2"], params["ar2"])

    # gat1 -> flatten heads -> ReLU
    z1, ee1 = project(x, params["w1"], alr1)
    h1 = attend(z1, ee1, params["b1"], "flatten_relu")
    # gat2 -> mean heads -> ReLU -> out_linear -> softmax (folded into the kernel)
    z2, ee2 = project(h1, params["w2"], alr2)
    probs = attend(z2, ee2, params["b2"], "mean_head",
                   (params["wo"], params["bo"]))
    return probs[:n]


# ---------------------------------------------------------------------------
# Pure-JAX reference (same math, no Pallas)
# ---------------------------------------------------------------------------

def _gat_layer_ref(x, adj, w, a_l, a_r, b, num_heads, out_dim, combine):
    n = x.shape[0]
    z = jnp.dot(x, w, preferred_element_type=jnp.float32)
    zh = z.reshape(n, num_heads, out_dim)
    el = jnp.einsum("nhd,hd->nh", zh, a_l)          # source scores
    er = jnp.einsum("nhd,hd->nh", zh, a_r)          # destination scores
    e = er[:, None, :] + el[None, :, :]             # (dst, src, H)
    e = _leaky_relu(e)
    e = jnp.where(adj[:, :, None] > 0, e, NEG_INF)
    alpha = jax.nn.softmax(e, axis=1)               # edge softmax over sources
    out = jnp.einsum("nkh,khd->nhd", alpha, zh) + b.reshape(1, num_heads, out_dim)
    if combine == "flatten":
        return out.reshape(n, num_heads * out_dim)
    return out.mean(axis=1)


def gat_reference(x, adj, params, num_heads, hidden):
    h1 = _gat_layer_ref(x, adj, params["w1"], params["al1"], params["ar1"],
                        params["b1"], num_heads, hidden, "flatten")
    h1 = jnp.maximum(h1, 0.0)
    h2 = _gat_layer_ref(h1, adj, params["w2"], params["al2"], params["ar2"],
                        params["b2"], num_heads, hidden, "mean")
    logits = jnp.dot(jnp.maximum(h2, 0.0), params["wo"]) + params["bo"]
    return jax.nn.softmax(logits, axis=-1)


def init_params(key, input_dim, hidden, num_heads, output_dim):
    ks = jax.random.split(key, 10)
    s = 0.1
    return {
        # gat1: fc (input_dim -> H*hidden), attn_l/attn_r (H, hidden), bias (1, H*hidden)
        "w1": s * jax.random.normal(ks[0], (input_dim, num_heads * hidden), jnp.float32),
        "al1": s * jax.random.normal(ks[1], (num_heads, hidden), jnp.float32),
        "ar1": s * jax.random.normal(ks[2], (num_heads, hidden), jnp.float32),
        "b1": s * jax.random.normal(ks[3], (1, num_heads * hidden), jnp.float32),
        # gat2: fc (H*hidden -> H*hidden)
        "w2": s * jax.random.normal(ks[4], (num_heads * hidden, num_heads * hidden), jnp.float32),
        "al2": s * jax.random.normal(ks[5], (num_heads, hidden), jnp.float32),
        "ar2": s * jax.random.normal(ks[6], (num_heads, hidden), jnp.float32),
        "b2": s * jax.random.normal(ks[7], (1, num_heads * hidden), jnp.float32),
        # out_linear: (hidden -> output_dim)
        "wo": s * jax.random.normal(ks[8], (hidden, output_dim), jnp.float32),
        "bo": s * jax.random.normal(ks[9], (1, output_dim), jnp.float32),
    }


if __name__ == "__main__":
    N_NODES = 16
    INPUT_DIM = 8
    HIDDEN = 32
    NUM_HEADS = 4
    OUTPUT_DIM = 2

    key = jax.random.PRNGKey(0)
    k_feat, k_adj, k_par = jax.random.split(key, 3)

    # Node features.
    x = jax.random.normal(k_feat, (N_NODES, INPUT_DIM), jnp.float32)

    # Random graph + self-loops (adj[dst, src]).  Self-loops keep every
    # destination row non-empty (same requirement as DGL's edge_softmax).
    adj = (jax.random.uniform(k_adj, (N_NODES, N_NODES)) < 0.3).astype(jnp.float32)
    adj = jnp.maximum(adj, jnp.eye(N_NODES, dtype=jnp.float32))

    params = init_params(k_par, INPUT_DIM, HIDDEN, NUM_HEADS, OUTPUT_DIM)

    # row_tile=8 so the toy N=16 problem actually runs a 2-step row grid
    # (realistic graphs should use the default 256).
    fwd = jax.jit(lambda xx, aa, pp: gat_forward(xx, aa, pp, NUM_HEADS, HIDDEN, row_tile=8))
    probs = jax.block_until_ready(fwd(x, adj, params))

    ref = gat_reference(x, adj, params, NUM_HEADS, HIDDEN)
    assert probs.shape == (N_NODES, OUTPUT_DIM)
    assert jnp.allclose(probs, ref, atol=5e-4, rtol=5e-4), "mismatch vs JAX reference"
    assert jnp.allclose(jnp.sum(probs, axis=-1), 1.0, atol=1e-5)

    print("KERNEL_OK")
</pallas_src>

<mosaic_0001>
module attributes {stable_mosaic.version = 11 : i64} {
  func.func @project_kernel(%arg0: i32, %arg1: memref<8x8xf32, #tpu.memory_space<vmem>>, %arg2: memref<8x128xf32, #tpu.memory_space<vmem>>, %arg3: memref<128x8xf32, #tpu.memory_space<vmem>>, %arg4: memref<8x128xf32, #tpu.memory_space<vmem>>, %arg5: memref<8x8xf32, #tpu.memory_space<vmem>>) attributes {dimension_semantics = [#tpu.dimension_semantics<parallel>], iteration_bounds = array<i64: 2>, scalar_prefetch = 0 : i64, scratch_operands = 0 : i64, tpu.core_type = #tpu.core_type<tc>, window_params = [{transform_indices = @transform_0, window_bounds = array<i64: 8, 8>}, {pipeline_mode = #tpu.pipeline_mode<synchronous>, transform_indices = @transform_1, window_bounds = array<i64: 8, 128>}, {pipeline_mode = #tpu.pipeline_mode<synchronous>, transform_indices = @transform_2, window_bounds = array<i64: 128, 8>}, {transform_indices = @transform_3, window_bounds = array<i64: 8, 128>}, {transform_indices = @transform_4, window_bounds = array<i64: 8, 8>}]} {
    %c0 = arith.constant 0 : index
    %c0_0 = arith.constant 0 : index
    %0 = vector.load %arg1[%c0, %c0_0] : memref<8x8xf32, #tpu.memory_space<vmem>>, vector<8x8xf32>
    %c0_1 = arith.constant 0 : index
    %c0_2 = arith.constant 0 : index
    %1 = vector.load %arg2[%c0_1, %c0_2] : memref<8x128xf32, #tpu.memory_space<vmem>>, vector<8x128xf32>
    %cst = arith.constant dense<0.000000e+00> : vector<8x128xf32>
    %2 = tpu.matmul %0, %1, %cst {dimension_numbers = #tpu.dot_dimension_numbers<[1], [0], [0], [1], [0, 0, 1, 1], [], []>} : vector<8x8xf32>, vector<8x128xf32>, vector<8x128xf32> -> vector<8x128xf32>
    %c0_3 = arith.constant 0 : index
    %c0_4 = arith.constant 0 : index
    %3 = vector.load %arg4[%c0_3, %c0_4] : memref<8x128xf32, #tpu.memory_space<vmem>>, vector<8x128xf32>
    tpu.vector_store %arg4[%c0_3, %c0_4], %2 {strides = array<i32>} : memref<8x128xf32, #tpu.memory_space<vmem>>, vector<8x128xf32>,
    %c0_5 = arith.constant 0 : index
    %c0_6 = arith.constant 0 : index
    %4 = vector.load %arg3[%c0_5, %c0_6] : memref<128x8xf32, #tpu.memory_space<vmem>>, vector<128x8xf32>
    %cst_7 = arith.constant dense<0.000000e+00> : vector<8x8xf32>
    %5 = tpu.matmul %2, %4, %cst_7 {dimension_numbers = #tpu.dot_dimension_numbers<[1], [0], [0], [1], [0, 0, 1, 1], [], []>} : vector<8x128xf32>, vector<128x8xf32>, vector<8x8xf32> -> vector<8x8xf32>
    %c0_8 = arith.constant 0 : index
    %c0_9 = arith.constant 0 : index
    %6 = vector.load %arg5[%c0_8, %c0_9] : memref<8x8xf32, #tpu.memory_space<vmem>>, vector<8x8xf32>
    tpu.vector_store %arg5[%c0_8, %c0_9], %5 {strides = array<i32>} : memref<8x8xf32, #tpu.memory_space<vmem>>, vector<8x8xf32>,
    return
  }
  func.func @transform_0(%arg0: i32) -> (i32, i32) {
    %c0_i32 = arith.constant 0 : i32
    %c0_i32_0 = arith.constant 0 : i32
    return %arg0, %c0_i32 : i32, i32
  }
  func.func @transform_1(%arg0: i32) -> (i32, i32) {
    %c0_i32 = arith.constant 0 : i32
    %c0_i32_0 = arith.constant 0 : i32
    %c0_i32_1 = arith.constant 0 : i32
    return %c0_i32, %c0_i32_0 : i32, i32
  }
  func.func @transform_2(%arg0: i32) -> (i32, i32) {
    %c0_i32 = arith.constant 0 : i32
    %c0_i32_0 = arith.constant 0 : i32
    %c0_i32_1 = arith.constant 0 : i32
    return %c0_i32, %c0_i32_0 : i32, i32
  }
  func.func @transform_3(%arg0: i32) -> (i32, i32) {
    %c0_i32 = arith.constant 0 : i32
    %c0_i32_0 = arith.constant 0 : i32
    return %arg0, %c0_i32 : i32, i32
  }
  func.func @transform_4(%arg0: i32) -> (i32, i32) {
    %c0_i32 = arith.constant 0 : i32
    %c0_i32_0 = arith.constant 0 : i32
    return %arg0, %c0_i32 : i32, i32
  }
}

module attributes {stable_mosaic.version = 11 : i64} {
  func.func @gat_attend_kernel(%arg0: i32, %arg1: memref<8x16xf32, #tpu.memory_space<vmem>>, %arg2: memref<8x4xf32, #tpu.memory_space<vmem>>, %arg3: memref<4x16xf32, #tpu.memory_space<vmem>>, %arg4: memref<16x128xf32, #tpu.memory_space<vmem>>, %arg5: memref<1x128xf32, #tpu.memory_space<vmem>>, %arg6: memref<8x128xf32, #tpu.memory_space<vmem>>) attributes {dimension_semantics = [#tpu.dimension_semantics<parallel>], iteration_bounds = array<i64: 2>, scalar_prefetch = 0 : i64, scratch_operands = 0 : i64, tpu.core_type = #tpu.core_type<tc>, window_params = [{transform_indices = @transform_0, window_bounds = array<i64: 8, 16>}, {transform_indices = @transform_1, window_bounds = array<i64: 8, 4>}, {pipeline_mode = #tpu.pipeline_mode<synchronous>, transform_indices = @transform_2, window_bounds = array<i64: 4, 16>}, {pipeline_mode = #tpu.pipeline_mode<synchronous>, transform_indices = @transform_3, window_bounds = array<i64: 16, 128>}, {pipeline_mode = #tpu.pipeline_mode<synchronous>, transform_indices = @transform_4, window_bounds = array<i64: 1, 128>}, {transform_indices = @transform_5, window_bounds = array<i64: 8, 128>}]} {
    %c0 = arith.constant 0 : index
    %c0_0 = arith.constant 0 : index
    %0 = vector.load %arg1[%c0, %c0_0] : memref<8x16xf32, #tpu.memory_space<vmem>>, vector<8x16xf32>
    %cst = arith.constant 0.000000e+00 : f32
    %1 = vector.broadcast %cst : f32 to vector<8x16xf32>
    %2 = arith.cmpf ogt, %0, %1 : vector<8x16xf32>
    %c0_1 = arith.constant 0 : index
    %c0_2 = arith.constant 0 : index
    %3 = vector.load %arg2[%c0_1, %c0_2] : memref<8x4xf32, #tpu.memory_space<vmem>>, vector<8x1xf32>
    %c0_3 = arith.constant 0 : index
    %c0_4 = arith.constant 0 : index
    %4 = vector.load %arg3[%c0_3, %c0_4] : memref<4x16xf32, #tpu.memory_space<vmem>>, vector<1x16xf32>
    %5 = vector.broadcast %3 : vector<8x1xf32> to vector<8x16xf32>
    %6 = vector.broadcast %4 : vector<1x16xf32> to vector<8x16xf32>
    %7 = arith.addf %5, %6 : vector<8x16xf32>
    %cst_5 = arith.constant 0.000000e+00 : f32
    %8 = vector.broadcast %cst_5 : f32 to vector<8x16xf32>
    %9 = arith.cmpf ogt, %7, %8 : vector<8x16xf32>
    %cst_6 = arith.constant 2.000000e-01 : f32
    %10 = vector.broadcast %cst_6 : f32 to vector<8x16xf32>
    %11 = arith.mulf %10, %7 : vector<8x16xf32>
    %12 = arith.select %9, %7, %11 : vector<8x16xi1>, vector<8x16xf32>
    %cst_7 = arith.constant -1.000000e+09 : f32
    %13 = vector.broadcast %cst_7 : f32 to vector<8x16xf32>
    %14 = arith.select %2, %12, %13 : vector<8x16xi1>, vector<8x16xf32>
    %cst_8 = arith.constant dense<0xFF800000> : vector<8xf32>
    %15 = vector.multi_reduction <maximumf>, %14, %cst_8 [1] : vector<8x16xf32> to vector<8xf32>
    %16 = vector.shape_cast %15 : vector<8xf32> to vector<8x1xf32>
    %17 = vector.broadcast %16 : vector<8x1xf32> to vector<8x16xf32>
    %18 = arith.subf %14, %17 : vector<8x16xf32>
    %19 = math.exp %18 : vector<8x16xf32>
    %cst_9 = arith.constant dense<0.000000e+00> : vector<8xf32>
    %20 = vector.multi_reduction <add>, %19, %cst_9 [1] : vector<8x16xf32> to vector<8xf32>
    %21 = vector.shape_cast %20 : vector<8xf32> to vector<8x1xf32>
    %22 = tpu.reciprocal %21 {approx = true} : vector<8x1xf32> -> vector<8x1xf32>
    %23 = arith.mulf %21, %22 : vector<8x1xf32>
    %cst_10 = arith.constant 2.000000e+00 : f32
    %24 = vector.broadcast %cst_10 : f32 to vector<8x1xf32>
    %25 = arith.subf %24, %23 : vector<8x1xf32>
    %26 = arith.mulf %22, %25 : vector<8x1xf32>
    %27 = vector.broadcast %26 : vector<8x1xf32> to vector<8x16xf32>
    %28 = arith.mulf %19, %27 : vector<8x16xf32>
    %c0_11 = arith.constant 0 : index
    %c0_12 = arith.constant 0 : index
    %29 = vector.load %arg4[%c0_11, %c0_12] : memref<16x128xf32, #tpu.memory_space<vmem>>, vector<16x32xf32>
    %c0_13 = arith.constant 0 : index
    %c0_14 = arith.constant 0 : index
    %30 = vector.load %arg5[%c0_13, %c0_14] : memref<1x128xf32, #tpu.memory_space<vmem>>, vector<1x32xf32>
    %cst_15 = arith.constant dense<0.000000e+00> : vector<8x32xf32>
    %31 = tpu.matmul %28, %29, %cst_15 {dimension_numbers = #tpu.dot_dimension_numbers<[1], [0], [0], [1], [0, 0, 1, 1], [], []>} : vector<8x16xf32>, vector<16x32xf32>, vector<8x32xf32> -> vector<8x32xf32>
    %32 = vector.broadcast %30 : vector<1x32xf32> to vector<8x32xf32>
    %33 = arith.addf %31, %32 : vector<8x32xf32>
    %c0_16 = arith.constant 0 : index
    %c1 = arith.constant 1 : index
    %34 = vector.load %arg2[%c0_16, %c1] : memref<8x4xf32, #tpu.memory_space<vmem>>, vector<8x1xf32>
    %c1_17 = arith.constant 1 : index
    %c0_18 = arith.constant 0 : index
    %35 = vector.load %arg3[%c1_17, %c0_18] : memref<4x16xf32, #tpu.memory_space<vmem>>, vector<1x16xf32>
    %36 = vector.broadcast %34 : vector<8x1xf32> to vector<8x16xf32>
    %37 = vector.broadcast %35 : vector<1x16xf32> to vector<8x16xf32>
    %38 = arith.addf %36, %37 : vector<8x16xf32>
    %cst_19 = arith.constant 0.000000e+00 : f32
    %39 = vector.broadcast %cst_19 : f32 to vector<8x16xf32>
    %40 = arith.cmpf ogt, %38, %39 : vector<8x16xf32>
    %cst_20 = arith.constant 2.000000e-01 : f32
    %41 = vector.broadcast %cst_20 : f32 to vector<8x16xf32>
    %42 = arith.mulf %41, %38 : vector<8x16xf32>
    %43 = arith.select %40, %38, %42 : vector<8x16xi1>, vector<8x16xf32>
    %cst_21 = arith.constant -1.000000e+09 : f32
    %44 = vector.broadcast %cst_21 : f32 to vector<8x16xf32>
    %45 = arith.select %2, %43, %44 : vector<8x16xi1>, vector<8x16xf32>
    %cst_22 = arith.constant dense<0xFF800000> : vector<8xf32>
    %46 = vector.multi_reduction <maximumf>, %45, %cst_22 [1] : vector<8x16xf32> to vector<8xf32>
    %47 = vector.shape_cast %46 : vector<8xf32> to vector<8x1xf32>
    %48 = vector.broadcast %47 : vector<8x1xf32> to vector<8x16xf32>
    %49 = arith.subf %45, %48 : vector<8x16xf32>
    %50 = math.exp %49 : vector<8x16xf32>
    %cst_23 = arith.constant dense<0.000000e+00> : vector<8xf32>
    %51 = vector.multi_reduction <add>, %50, %cst_23 [1] : vector<8x16xf32> to vector<8xf32>
    %52 = vector.shape_cast %51 : vector<8xf32> to vector<8x1xf32>
    %53 = tpu.reciprocal %52 {approx = true} : vector<8x1xf32> -> vector<8x1xf32>
    %54 = arith.mulf %52, %53 : vector<8x1xf32>
    %cst_24 = arith.constant 2.000000e+00 : f32
    %55 = vector.broadcast %cst_24 : f32 to vector<8x1xf32>
    %56 = arith.subf %55, %54 : vector<8x1xf32>
    %57 = arith.mulf %53, %56 : vector<8x1xf32>
    %58 = vector.broadcast %57 : vector<8x1xf32> to vector<8x16xf32>
    %59 = arith.mulf %50, %58 : vector<8x16xf32>
    %c0_25 = arith.constant 0 : index
    %c32 = arith.constant 32 : index
    %60 = vector.load %arg4[%c0_25, %c32] : memref<16x128xf32, #tpu.memory_space<vmem>>, vector<16x32xf32>
    %c0_26 = arith.constant 0 : index
    %c32_27 = arith.constant 32 : index
    %61 = vector.load %arg5[%c0_26, %c32_27] : memref<1x128xf32, #tpu.memory_space<vmem>>, vector<1x32xf32>
    %cst_28 = arith.constant dense<0.000000e+00> : vector<8x32xf32>
    %62 = tpu.matmul %59, %60, %cst_28 {dimension_numbers = #tpu.dot_dimension_numbers<[1], [0], [0], [1], [0, 0, 1, 1], [], []>} : vector<8x16xf32>, vector<16x32xf32>, vector<8x32xf32> -> vector<8x32xf32>
    %63 = vector.broadcast %61 : vector<1x32xf32> to vector<8x32xf32>
    %64 = arith.addf %62, %63 : vector<8x32xf32>
    %c0_29 = arith.constant 0 : index
    %c2 = arith.constant 2 : index
    %65 = vector.load %arg2[%c0_29, %c2] : memref<8x4xf32, #tpu.memory_space<vmem>>, vector<8x1xf32>
    %c2_30 = arith.constant 2 : index
    %c0_31 = arith.constant 0 : index
    %66 = vector.load %arg3[%c2_30, %c0_31] : memref<4x16xf32, #tpu.memory_space<vmem>>, vector<1x16xf32>
    %67 = vector.broadcast %65 : vector<8x1xf32> to vector<8x16xf32>
    %68 = vector.broadcast %66 : vector<1x16xf32> to vector<8x16xf32>
    %69 = arith.addf %67, %68 : vector<8x16xf32>
    %cst_32 = arith.constant 0.000000e+00 : f32
    %70 = vector.broadcast %cst_32 : f32 to vector<8x16xf32>
    %71 = arith.cmpf ogt, %69, %70 : vector<8x16xf32>
    %cst_33 = arith.constant 2.000000e-01 : f32
    %72 = vector.broadcast %cst_33 : f32 to vector<8x16xf32>
    %73 = arith.mulf %72, %69 : vector<8x16xf32>
    %74 = arith.select %71, %69, %73 : vector<8x16xi1>, vector<8x16xf32>
    %cst_34 = arith.constant -1.000000e+09 : f32
    %75 = vector.broadcast %cst_34 : f32 to vector<8x16xf32>
    %76 = arith.select %2, %74, %75 : vector<8x16xi1>, vector<8x16xf32>
    %cst_35 = arith.constant dense<0xFF800000> : vector<8xf32>
    %77 = vector.multi_reduction <maximumf>, %76, %cst_35 [1] : vector<8x16xf32> to vector<8xf32>
    %78 = vector.shape_cast %77 : vector<8xf32> to vector<8x1xf32>
    %79 = vector.broadcast %78 : vector<8x1xf32> to vector<8x16xf32>
    %80 = arith.subf %76, %79 : vector<8x16xf32>
    %81 = math.exp %80 : vector<8x16xf32>
    %cst_36 = arith.constant dense<0.000000e+00> : vector<8xf32>
    %82 = vector.multi_reduction <add>, %81, %cst_36 [1] : vector<8x16xf32> to vector<8xf32>
    %83 = vector.shape_cast %82 : vector<8xf32> to vector<8x1xf32>
    %84 = tpu.reciprocal %83 {approx = true} : vector<8x1xf32> -> vector<8x1xf32>
    %85 = arith.mulf %83, %84 : vector<8x1xf32>
    %cst_37 = arith.constant 2.000000e+00 : f32
    %86 = vector.broadcast %cst_37 : f32 to vector<8x1xf32>
    %87 = arith.subf %86, %85 : vector<8x1xf32>
    %88 = arith.mulf %84, %87 : vector<8x1xf32>
    %89 = vector.broadcast %88 : vector<8x1xf32> to vector<8x16xf32>
    %90 = arith.mulf %81, %89 : vector<8x16xf32>
    %c0_38 = arith.constant 0 : index
    %c64 = arith.constant 64 : index
    %91 = vector.load %arg4[%c0_38, %c64] : memref<16x128xf32, #tpu.memory_space<vmem>>, vector<16x32xf32>
    %c0_39 = arith.constant 0 : index
    %c64_40 = arith.constant 64 : index
    %92 = vector.load %arg5[%c0_39, %c64_40] : memref<1x128xf32, #tpu.memory_space<vmem>>, vector<1x32xf32>
    %cst_41 = arith.constant dense<0.000000e+00> : vector<8x32xf32>
    %93 = tpu.matmul %90, %91, %cst_41 {dimension_numbers = #tpu.dot_dimension_numbers<[1], [0], [0], [1], [0, 0, 1, 1], [], []>} : vector<8x16xf32>, vector<16x32xf32>, vector<8x32xf32> -> vector<8x32xf32>
    %94 = vector.broadcast %92 : vector<1x32xf32> to vector<8x32xf32>
    %95 = arith.addf %93, %94 : vector<8x32xf32>
    %c0_42 = arith.constant 0 : index
    %c3 = arith.constant 3 : index
    %96 = vector.load %arg2[%c0_42, %c3] : memref<8x4xf32, #tpu.memory_space<vmem>>, vector<8x1xf32>
    %c3_43 = arith.constant 3 : index
    %c0_44 = arith.constant 0 : index
    %97 = vector.load %arg3[%c3_43, %c0_44] : memref<4x16xf32, #tpu.memory_space<vmem>>, vector<1x16xf32>
    %98 = vector.broadcast %96 : vector<8x1xf32> to vector<8x16xf32>
    %99 = vector.broadcast %97 : vector<1x16xf32> to vector<8x16xf32>
    %100 = arith.addf %98, %99 : vector<8x16xf32>
    %cst_45 = arith.constant 0.000000e+00 : f32
    %101 = vector.broadcast %cst_45 : f32 to vector<8x16xf32>
    %102 = arith.cmpf ogt, %100, %101 : vector<8x16xf32>
    %cst_46 = arith.constant 2.000000e-01 : f32
    %103 = vector.broadcast %cst_46 : f32 to vector<8x16xf32>
    %104 = arith.mulf %103, %100 : vector<8x16xf32>
    %105 = arith.select %102, %100, %104 : vector<8x16xi1>, vector<8x16xf32>
    %cst_47 = arith.constant -1.000000e+09 : f32
    %106 = vector.broadcast %cst_47 : f32 to vector<8x16xf32>
    %107 = arith.select %2, %105, %106 : vector<8x16xi1>, vector<8x16xf32>
    %cst_48 = arith.constant dense<0xFF800000> : vector<8xf32>
    %108 = vector.multi_reduction <maximumf>, %107, %cst_48 [1] : vector<8x16xf32> to vector<8xf32>
    %109 = vector.shape_cast %108 : vector<8xf32> to vector<8x1xf32>
    %110 = vector.broadcast %109 : vector<8x1xf32> to vector<8x16xf32>
    %111 = arith.subf %107, %110 : vector<8x16xf32>
    %112 = math.exp %111 : vector<8x16xf32>
    %cst_49 = arith.constant dense<0.000000e+00> : vector<8xf32>
    %113 = vector.multi_reduction <add>, %112, %cst_49 [1] : vector<8x16xf32> to vector<8xf32>
    %114 = vector.shape_cast %113 : vector<8xf32> to vector<8x1xf32>
    %115 = tpu.reciprocal %114 {approx = true} : vector<8x1xf32> -> vector<8x1xf32>
    %116 = arith.mulf %114, %115 : vector<8x1xf32>
    %cst_50 = arith.constant 2.000000e+00 : f32
    %117 = vector.broadcast %cst_50 : f32 to vector<8x1xf32>
    %118 = arith.subf %117, %116 : vector<8x1xf32>
    %119 = arith.mulf %115, %118 : vector<8x1xf32>
    %120 = vector.broadcast %119 : vector<8x1xf32> to vector<8x16xf32>
    %121 = arith.mulf %112, %120 : vector<8x16xf32>
    %c0_51 = arith.constant 0 : index
    %c96 = arith.constant 96 : index
    %122 = vector.load %arg4[%c0_51, %c96] : memref<16x128xf32, #tpu.memory_space<vmem>>, vector<16x32xf32>
    %c0_52 = arith.constant 0 : index
    %c96_53 = arith.constant 96 : index
    %123 = vector.load %arg5[%c0_52, %c96_53] : memref<1x128xf32, #tpu.memory_space<vmem>>, vector<1x32xf32>
    %cst_54 = arith.constant dense<0.000000e+00> : vector<8x32xf32>
    %124 = tpu.matmul %121, %122, %cst_54 {dimension_numbers = #tpu.dot_dimension_numbers<[1], [0], [0], [1], [0, 0, 1, 1], [], []>} : vector<8x16xf32>, vector<16x32xf32>, vector<8x32xf32> -> vector<8x32xf32>
    %125 = vector.broadcast %123 : vector<1x32xf32> to vector<8x32xf32>
    %126 = arith.addf %124, %125 : vector<8x32xf32>
    %127 = tpu.concatenate %33, %64, %95, %126 in 1 : vector<8x32xf32>, vector<8x32xf32>, vector<8x32xf32>, vector<8x32xf32> -> vector<8x128xf32>
    %cst_55 = arith.constant 0.000000e+00 : f32
    %128 = vector.broadcast %cst_55 : f32 to vector<8x128xf32>
    %129 = arith.maximumf %127, %128 : vector<8x128xf32>
    %c0_56 = arith.constant 0 : index
    %c0_57 = arith.constant 0 : index
    %130 = vector.load %arg6[%c0_56, %c0_57] : memref<8x128xf32, #tpu.memory_space<vmem>>, vector<8x128xf32>
    tpu.vector_store %arg6[%c0_56, %c0_57], %129 {strides = array<i32>} : memref<8x128xf32, #tpu.memory_space<vmem>>, vector<8x128xf32>,
    return
  }
  func.func @transform_0(%arg0: i32) -> (i32, i32) {
    %c0_i32 = arith.constant 0 : i32
    %c0_i32_0 = arith.constant 0 : i32
    return %arg0, %c0_i32 : i32, i32
  }
  func.func @transform_1(%arg0: i32) -> (i32, i32) {
    %c0_i32 = arith.constant 0 : i32
    %c0_i32_0 = arith.constant 0 : i32
    return %arg0, %c0_i32 : i32, i32
  }
  func.func @transform_2(%arg0: i32) -> (i32, i32) {
    %c0_i32 = arith.constant 0 : i32
    %c0_i32_0 = arith.constant 0 : i32
    %c0_i32_1 = arith.constant 0 : i32
    return %c0_i32, %c0_i32_0 : i32, i32
  }
  func.func @transform_3(%arg0: i32) -> (i32, i32) {
    %c0_i32 = arith.constant 0 : i32
    %c0_i32_0 = arith.constant 0 : i32
    %c0_i32_1 = arith.constant 0 : i32
    return %c0_i32, %c0_i32_0 : i32, i32
  }
  func.func @transform_4(%arg0: i32) -> (i32, i32) {
    %c0_i32 = arith.constant 0 : i32
    %c0_i32_0 = arith.constant 0 : i32
    %c0_i32_1 = arith.constant 0 : i32
    return %c0_i32, %c0_i32_0 : i32, i32
  }
  func.func @transform_5(%arg0: i32) -> (i32, i32) {
    %c0_i32 = arith.constant 0 : i32
    %c0_i32_0 = arith.constant 0 : i32
    return %arg0, %c0_i32 : i32, i32
  }
}

module attributes {stable_mosaic.version = 11 : i64} {
  func.func @project_kernel(%arg0: i32, %arg1: memref<8x128xf32, #tpu.memory_space<vmem>>, %arg2: memref<128x128xf32, #tpu.memory_space<vmem>>, %arg3: memref<128x8xf32, #tpu.memory_space<vmem>>, %arg4: memref<8x128xf32, #tpu.memory_space<vmem>>, %arg5: memref<8x8xf32, #tpu.memory_space<vmem>>) attributes {dimension_semantics = [#tpu.dimension_semantics<parallel>], iteration_bounds = array<i64: 2>, scalar_prefetch = 0 : i64, scratch_operands = 0 : i64, tpu.core_type = #tpu.core_type<tc>, window_params = [{transform_indices = @transform_0, window_bounds = array<i64: 8, 128>}, {pipeline_mode = #tpu.pipeline_mode<synchronous>, transform_indices = @transform_1, window_bounds = array<i64: 128, 128>}, {pipeline_mode = #tpu.pipeline_mode<synchronous>, transform_indices = @transform_2, window_bounds = array<i64: 128, 8>}, {transform_indices = @transform_3, window_bounds = array<i64: 8, 128>}, {transform_indices = @transform_4, window_bounds = array<i64: 8, 8>}]} {
    %c0 = arith.constant 0 : index
    %c0_0 = arith.constant 0 : index
    %0 = vector.load %arg1[%c0, %c0_0] : memref<8x128xf32, #tpu.memory_space<vmem>>, vector<8x128xf32>
    %c0_1 = arith.constant 0 : index
    %c0_2 = arith.constant 0 : index
    %1 = vector.load %arg2[%c0_1, %c0_2] : memref<128x128xf32, #tpu.memory_space<vmem>>, vector<128x128xf32>
    %cst = arith.constant dense<0.000000e+00> : vector<8x128xf32>
    %2 = tpu.matmul %0, %1, %cst {dimension_numbers = #tpu.dot_dimension_numbers<[1], [0], [0], [1], [0, 0, 1, 1], [], []>} : vector<8x128xf32>, vector<128x128xf32>, vector<8x128xf32> -> vector<8x128xf32>
    %c0_3 = arith.constant 0 : index
    %c0_4 = arith.constant 0 : index
    %3 = vector.load %arg4[%c0_3, %c0_4] : memref<8x128xf32, #tpu.memory_space<vmem>>, vector<8x128xf32>
    tpu.vector_store %arg4[%c0_3, %c0_4], %2 {strides = array<i32>} : memref<8x128xf32, #tpu.memory_space<vmem>>, vector<8x128xf32>,
    %c0_5 = arith.constant 0 : index
    %c0_6 = arith.constant 0 : index
    %4 = vector.load %arg3[%c0_5, %c0_6] : memref<128x8xf32, #tpu.memory_space<vmem>>, vector<128x8xf32>
    %cst_7 = arith.constant dense<0.000000e+00> : vector<8x8xf32>
    %5 = tpu.matmul %2, %4, %cst_7 {dimension_numbers = #tpu.dot_dimension_numbers<[1], [0], [0], [1], [0, 0, 1, 1], [], []>} : vector<8x128xf32>, vector<128x8xf32>, vector<8x8xf32> -> vector<8x8xf32>
    %c0_8 = arith.constant 0 : index
    %c0_9 = arith.constant 0 : index
    %6 = vector.load %arg5[%c0_8, %c0_9] : memref<8x8xf32, #tpu.memory_space<vmem>>, vector<8x8xf32>
    tpu.vector_store %arg5[%c0_8, %c0_9], %5 {strides = array<i32>} : memref<8x8xf32, #tpu.memory_space<vmem>>, vector<8x8xf32>,
    return
  }
  func.func @transform_0(%arg0: i32) -> (i32, i32) {
    %c0_i32 = arith.constant 0 : i32
    %c0_i32_0 = arith.constant 0 : i32
    return %arg0, %c0_i32 : i32, i32
  }
  func.func @transform_1(%arg0: i32) -> (i32, i32) {
    %c0_i32 = arith.constant 0 : i32
    %c0_i32_0 = arith.constant 0 : i32
    %c0_i32_1 = arith.constant 0 : i32
    return %c0_i32, %c0_i32_0 : i32, i32
  }
  func.func @transform_2(%arg0: i32) -> (i32, i32) {
    %c0_i32 = arith.constant 0 : i32
    %c0_i32_0 = arith.constant 0 : i32
    %c0_i32_1 = arith.constant 0 : i32
    return %c0_i32, %c0_i32_0 : i32, i32
  }
  func.func @transform_3(%arg0: i32) -> (i32, i32) {
    %c0_i32 = arith.constant 0 : i32
    %c0_i32_0 = arith.constant 0 : i32
    return %arg0, %c0_i32 : i32, i32
  }
  func.func @transform_4(%arg0: i32) -> (i32, i32) {
    %c0_i32 = arith.constant 0 : i32
    %c0_i32_0 = arith.constant 0 : i32
    return %arg0, %c0_i32 : i32, i32
  }
}

module attributes {stable_mosaic.version = 11 : i64} {
  func.func @gat_attend_kernel(%arg0: i32, %arg1: memref<8x16xf32, #tpu.memory_space<vmem>>, %arg2: memref<8x4xf32, #tpu.memory_space<vmem>>, %arg3: memref<4x16xf32, #tpu.memory_space<vmem>>, %arg4: memref<16x128xf32, #tpu.memory_space<vmem>>, %arg5: memref<1x128xf32, #tpu.memory_space<vmem>>, %arg6: memref<32x2xf32, #tpu.memory_space<vmem>>, %arg7: memref<1x2xf32, #tpu.memory_space<vmem>>, %arg8: memref<8x2xf32, #tpu.memory_space<vmem>>) attributes {dimension_semantics = [#tpu.dimension_semantics<parallel>], iteration_bounds = array<i64: 2>, scalar_prefetch = 0 : i64, scratch_operands = 0 : i64, tpu.core_type = #tpu.core_type<tc>, window_params = [{transform_indices = @transform_0, window_bounds = array<i64: 8, 16>}, {transform_indices = @transform_1, window_bounds = array<i64: 8, 4>}, {pipeline_mode = #tpu.pipeline_mode<synchronous>, transform_indices = @transform_2, window_bounds = array<i64: 4, 16>}, {pipeline_mode = #tpu.pipeline_mode<synchronous>, transform_indices = @transform_3, window_bounds = array<i64: 16, 128>}, {pipeline_mode = #tpu.pipeline_mode<synchronous>, transform_indices = @transform_4, window_bounds = array<i64: 1, 128>}, {pipeline_mode = #tpu.pipeline_mode<synchronous>, transform_indices = @transform_5, window_bounds = array<i64: 32, 2>}, {pipeline_mode = #tpu.pipeline_mode<synchronous>, transform_indices = @transform_6, window_bounds = array<i64: 1, 2>}, {transform_indices = @transform_7, window_bounds = array<i64: 8, 2>}]} {
    %c0 = arith.constant 0 : index
    %c0_0 = arith.constant 0 : index
    %0 = vector.load %arg1[%c0, %c0_0] : memref<8x16xf32, #tpu.memory_space<vmem>>, vector<8x16xf32>
    %cst = arith.constant 0.000000e+00 : f32
    %1 = vector.broadcast %cst : f32 to vector<8x16xf32>
    %2 = arith.cmpf ogt, %0, %1 : vector<8x16xf32>
    %c0_1 = arith.constant 0 : index
    %c0_2 = arith.constant 0 : index
    %3 = vector.load %arg2[%c0_1, %c0_2] : memref<8x4xf32, #tpu.memory_space<vmem>>, vector<8x1xf32>
    %c0_3 = arith.constant 0 : index
    %c0_4 = arith.constant 0 : index
    %4 = vector.load %arg3[%c0_3, %c0_4] : memref<4x16xf32, #tpu.memory_space<vmem>>, vector<1x16xf32>
    %5 = vector.broadcast %3 : vector<8x1xf32> to vector<8x16xf32>
    %6 = vector.broadcast %4 : vector<1x16xf32> to vector<8x16xf32>
    %7 = arith.addf %5, %6 : vector<8x16xf32>
    %cst_5 = arith.constant 0.000000e+00 : f32
    %8 = vector.broadcast %cst_5 : f32 to vector<8x16xf32>
    %9 = arith.cmpf ogt, %7, %8 : vector<8x16xf32>
    %cst_6 = arith.constant 2.000000e-01 : f32
    %10 = vector.broadcast %cst_6 : f32 to vector<8x16xf32>
    %11 = arith.mulf %10, %7 : vector<8x16xf32>
    %12 = arith.select %9, %7, %11 : vector<8x16xi1>, vector<8x16xf32>
    %cst_7 = arith.constant -1.000000e+09 : f32
    %13 = vector.broadcast %cst_7 : f32 to vector<8x16xf32>
    %14 = arith.select %2, %12, %13 : vector<8x16xi1>, vector<8x16xf32>
    %cst_8 = arith.constant dense<0xFF800000> : vector<8xf32>
    %15 = vector.multi_reduction <maximumf>, %14, %cst_8 [1] : vector<8x16xf32> to vector<8xf32>
    %16 = vector.shape_cast %15 : vector<8xf32> to vector<8x1xf32>
    %17 = vector.broadcast %16 : vector<8x1xf32> to vector<8x16xf32>
    %18 = arith.subf %14, %17 : vector<8x16xf32>
    %19 = math.exp %18 : vector<8x16xf32>
    %cst_9 = arith.constant dense<0.000000e+00> : vector<8xf32>
    %20 = vector.multi_reduction <add>, %19, %cst_9 [1] : vector<8x16xf32> to vector<8xf32>
    %21 = vector.shape_cast %20 : vector<8xf32> to vector<8x1xf32>
    %22 = tpu.reciprocal %21 {approx = true} : vector<8x1xf32> -> vector<8x1xf32>
    %23 = arith.mulf %21, %22 : vector<8x1xf32>
    %cst_10 = arith.constant 2.000000e+00 : f32
    %24 = vector.broadcast %cst_10 : f32 to vector<8x1xf32>
    %25 = arith.subf %24, %23 : vector<8x1xf32>
    %26 = arith.mulf %22, %25 : vector<8x1xf32>
    %27 = vector.broadcast %26 : vector<8x1xf32> to vector<8x16xf32>
    %28 = arith.mulf %19, %27 : vector<8x16xf32>
    %c0_11 = arith.constant 0 : index
    %c0_12 = arith.constant 0 : index
    %29 = vector.load %arg4[%c0_11, %c0_12] : memref<16x128xf32, #tpu.memory_space<vmem>>, vector<16x32xf32>
    %c0_13 = arith.constant 0 : index
    %c0_14 = arith.constant 0 : index
    %30 = vector.load %arg5[%c0_13, %c0_14] : memref<1x128xf32, #tpu.memory_space<vmem>>, vector<1x32xf32>
    %cst_15 = arith.constant dense<0.000000e+00> : vector<8x32xf32>
    %31 = tpu.matmul %28, %29, %cst_15 {dimension_numbers = #tpu.dot_dimension_numbers<[1], [0], [0], [1], [0, 0, 1, 1], [], []>} : vector<8x16xf32>, vector<16x32xf32>, vector<8x32xf32> -> vector<8x32xf32>
    %32 = vector.broadcast %30 : vector<1x32xf32> to vector<8x32xf32>
    %33 = arith.addf %31, %32 : vector<8x32xf32>
    %c0_16 = arith.constant 0 : index
    %c1 = arith.constant 1 : index
    %34 = vector.load %arg2[%c0_16, %c1] : memref<8x4xf32, #tpu.memory_space<vmem>>, vector<8x1xf32>
    %c1_17 = arith.constant 1 : index
    %c0_18 = arith.constant 0 : index
    %35 = vector.load %arg3[%c1_17, %c0_18] : memref<4x16xf32, #tpu.memory_space<vmem>>, vector<1x16xf32>
    %36 = vector.broadcast %34 : vector<8x1xf32> to vector<8x16xf32>
    %37 = vector.broadcast %35 : vector<1x16xf32> to vector<8x16xf32>
    %38 = arith.addf %36, %37 : vector<8x16xf32>
    %cst_19 = arith.constant 0.000000e+00 : f32
    %39 = vector.broadcast %cst_19 : f32 to vector<8x16xf32>
    %40 = arith.cmpf ogt, %38, %39 : vector<8x16xf32>
    %cst_20 = arith.constant 2.000000e-01 : f32
    %41 = vector.broadcast %cst_20 : f32 to vector<8x16xf32>
    %42 = arith.mulf %41, %38 : vector<8x16xf32>
    %43 = arith.select %40, %38, %42 : vector<8x16xi1>, vector<8x16xf32>
    %cst_21 = arith.constant -1.000000e+09 : f32
    %44 = vector.broadcast %cst_21 : f32 to vector<8x16xf32>
    %45 = arith.select %2, %43, %44 : vector<8x16xi1>, vector<8x16xf32>
    %cst_22 = arith.constant dense<0xFF800000> : vector<8xf32>
    %46 = vector.multi_reduction <maximumf>, %45, %cst_22 [1] : vector<8x16xf32> to vector<8xf32>
    %47 = vector.shape_cast %46 : vector<8xf32> to vector<8x1xf32>
    %48 = vector.broadcast %47 : vector<8x1xf32> to vector<8x16xf32>
    %49 = arith.subf %45, %48 : vector<8x16xf32>
    %50 = math.exp %49 : vector<8x16xf32>
    %cst_23 = arith.constant dense<0.000000e+00> : vector<8xf32>
    %51 = vector.multi_reduction <add>, %50, %cst_23 [1] : vector<8x16xf32> to vector<8xf32>
    %52 = vector.shape_cast %51 : vector<8xf32> to vector<8x1xf32>
    %53 = tpu.reciprocal %52 {approx = true} : vector<8x1xf32> -> vector<8x1xf32>
    %54 = arith.mulf %52, %53 : vector<8x1xf32>
    %cst_24 = arith.constant 2.000000e+00 : f32
    %55 = vector.broadcast %cst_24 : f32 to vector<8x1xf32>
    %56 = arith.subf %55, %54 : vector<8x1xf32>
    %57 = arith.mulf %53, %56 : vector<8x1xf32>
    %58 = vector.broadcast %57 : vector<8x1xf32> to vector<8x16xf32>
    %59 = arith.mulf %50, %58 : vector<8x16xf32>
    %c0_25 = arith.constant 0 : index
    %c32 = arith.constant 32 : index
    %60 = vector.load %arg4[%c0_25, %c32] : memref<16x128xf32, #tpu.memory_space<vmem>>, vector<16x32xf32>
    %c0_26 = arith.constant 0 : index
    %c32_27 = arith.constant 32 : index
    %61 = vector.load %arg5[%c0_26, %c32_27] : memref<1x128xf32, #tpu.memory_space<vmem>>, vector<1x32xf32>
    %cst_28 = arith.constant dense<0.000000e+00> : vector<8x32xf32>
    %62 = tpu.matmul %59, %60, %cst_28 {dimension_numbers = #tpu.dot_dimension_numbers<[1], [0], [0], [1], [0, 0, 1, 1], [], []>} : vector<8x16xf32>, vector<16x32xf32>, vector<8x32xf32> -> vector<8x32xf32>
    %63 = vector.broadcast %61 : vector<1x32xf32> to vector<8x32xf32>
    %64 = arith.addf %62, %63 : vector<8x32xf32>
    %c0_29 = arith.constant 0 : index
    %c2 = arith.constant 2 : index
    %65 = vector.load %arg2[%c0_29, %c2] : memref<8x4xf32, #tpu.memory_space<vmem>>, vector<8x1xf32>
    %c2_30 = arith.constant 2 : index
    %c0_31 = arith.constant 0 : index
    %66 = vector.load %arg3[%c2_30, %c0_31] : memref<4x16xf32, #tpu.memory_space<vmem>>, vector<1x16xf32>
    %67 = vector.broadcast %65 : vector<8x1xf32> to vector<8x16xf32>
    %68 = vector.broadcast %66 : vector<1x16xf32> to vector<8x16xf32>
    %69 = arith.addf %67, %68 : vector<8x16xf32>
    %cst_32 = arith.constant 0.000000e+00 : f32
    %70 = vector.broadcast %cst_32 : f32 to vector<8x16xf32>
    %71 = arith.cmpf ogt, %69, %70 : vector<8x16xf32>
    %cst_33 = arith.constant 2.000000e-01 : f32
    %72 = vector.broadcast %cst_33 : f32 to vector<8x16xf32>
    %73 = arith.mulf %72, %69 : vector<8x16xf32>
    %74 = arith.select %71, %69, %73 : vector<8x16xi1>, vector<8x16xf32>
    %cst_34 = arith.constant -1.000000e+09 : f32
    %75 = vector.broadcast %cst_34 : f32 to vector<8x16xf32>
    %76 = arith.select %2, %74, %75 : vector<8x16xi1>, vector<8x16xf32>
    %cst_35 = arith.constant dense<0xFF800000> : vector<8xf32>
    %77 = vector.multi_reduction <maximumf>, %76, %cst_35 [1] : vector<8x16xf32> to vector<8xf32>
    %78 = vector.shape_cast %77 : vector<8xf32> to vector<8x1xf32>
    %79 = vector.broadcast %78 : vector<8x1xf32> to vector<8x16xf32>
    %80 = arith.subf %76, %79 : vector<8x16xf32>
    %81 = math.exp %80 : vector<8x16xf32>
    %cst_36 = arith.constant dense<0.000000e+00> : vector<8xf32>
    %82 = vector.multi_reduction <add>, %81, %cst_36 [1] : vector<8x16xf32> to vector<8xf32>
    %83 = vector.shape_cast %82 : vector<8xf32> to vector<8x1xf32>
    %84 = tpu.reciprocal %83 {approx = true} : vector<8x1xf32> -> vector<8x1xf32>
    %85 = arith.mulf %83, %84 : vector<8x1xf32>
    %cst_37 = arith.constant 2.000000e+00 : f32
    %86 = vector.broadcast %cst_37 : f32 to vector<8x1xf32>
    %87 = arith.subf %86, %85 : vector<8x1xf32>
    %88 = arith.mulf %84, %87 : vector<8x1xf32>
    %89 = vector.broadcast %88 : vector<8x1xf32> to vector<8x16xf32>
    %90 = arith.mulf %81, %89 : vector<8x16xf32>
    %c0_38 = arith.constant 0 : index
    %c64 = arith.constant 64 : index
    %91 = vector.load %arg4[%c0_38, %c64] : memref<16x128xf32, #tpu.memory_space<vmem>>, vector<16x32xf32>
    %c0_39 = arith.constant 0 : index
    %c64_40 = arith.constant 64 : index
    %92 = vector.load %arg5[%c0_39, %c64_40] : memref<1x128xf32, #tpu.memory_space<vmem>>, vector<1x32xf32>
    %cst_41 = arith.constant dense<0.000000e+00> : vector<8x32xf32>
    %93 = tpu.matmul %90, %91, %cst_41 {dimension_numbers = #tpu.dot_dimension_numbers<[1], [0], [0], [1], [0, 0, 1, 1], [], []>} : vector<8x16xf32>, vector<16x32xf32>, vector<8x32xf32> -> vector<8x32xf32>
    %94 = vector.broadcast %92 : vector<1x32xf32> to vector<8x32xf32>
    %95 = arith.addf %93, %94 : vector<8x32xf32>
    %c0_42 = arith.constant 0 : index
    %c3 = arith.constant 3 : index
    %96 = vector.load %arg2[%c0_42, %c3] : memref<8x4xf32, #tpu.memory_space<vmem>>, vector<8x1xf32>
    %c3_43 = arith.constant 3 : index
    %c0_44 = arith.constant 0 : index
    %97 = vector.load %arg3[%c3_43, %c0_44] : memref<4x16xf32, #tpu.memory_space<vmem>>, vector<1x16xf32>
    %98 = vector.broadcast %96 : vector<8x1xf32> to vector<8x16xf32>
    %99 = vector.broadcast %97 : vector<1x16xf32> to vector<8x16xf32>
    %100 = arith.addf %98, %99 : vector<8x16xf32>
    %cst_45 = arith.constant 0.000000e+00 : f32
    %101 = vector.broadcast %cst_45 : f32 to vector<8x16xf32>
    %102 = arith.cmpf ogt, %100, %101 : vector<8x16xf32>
    %cst_46 = arith.constant 2.000000e-01 : f32
    %103 = vector.broadcast %cst_46 : f32 to vector<8x16xf32>
    %104 = arith.mulf %103, %100 : vector<8x16xf32>
    %105 = arith.select %102, %100, %104 : vector<8x16xi1>, vector<8x16xf32>
    %cst_47 = arith.constant -1.000000e+09 : f32
    %106 = vector.broadcast %cst_47 : f32 to vector<8x16xf32>
    %107 = arith.select %2, %105, %106 : vector<8x16xi1>, vector<8x16xf32>
    %cst_48 = arith.constant dense<0xFF800000> : vector<8xf32>
    %108 = vector.multi_reduction <maximumf>, %107, %cst_48 [1] : vector<8x16xf32> to vector<8xf32>
    %109 = vector.shape_cast %108 : vector<8xf32> to vector<8x1xf32>
    %110 = vector.broadcast %109 : vector<8x1xf32> to vector<8x16xf32>
    %111 = arith.subf %107, %110 : vector<8x16xf32>
    %112 = math.exp %111 : vector<8x16xf32>
    %cst_49 = arith.constant dense<0.000000e+00> : vector<8xf32>
    %113 = vector.multi_reduction <add>, %112, %cst_49 [1] : vector<8x16xf32> to vector<8xf32>
    %114 = vector.shape_cast %113 : vector<8xf32> to vector<8x1xf32>
    %115 = tpu.reciprocal %114 {approx = true} : vector<8x1xf32> -> vector<8x1xf32>
    %116 = arith.mulf %114, %115 : vector<8x1xf32>
    %cst_50 = arith.constant 2.000000e+00 : f32
    %117 = vector.broadcast %cst_50 : f32 to vector<8x1xf32>
    %118 = arith.subf %117, %116 : vector<8x1xf32>
    %119 = arith.mulf %115, %118 : vector<8x1xf32>
    %120 = vector.broadcast %119 : vector<8x1xf32> to vector<8x16xf32>
    %121 = arith.mulf %112, %120 : vector<8x16xf32>
    %c0_51 = arith.constant 0 : index
    %c96 = arith.constant 96 : index
    %122 = vector.load %arg4[%c0_51, %c96] : memref<16x128xf32, #tpu.memory_space<vmem>>, vector<16x32xf32>
    %c0_52 = arith.constant 0 : index
    %c96_53 = arith.constant 96 : index
    %123 = vector.load %arg5[%c0_52, %c96_53] : memref<1x128xf32, #tpu.memory_space<vmem>>, vector<1x32xf32>
    %cst_54 = arith.constant dense<0.000000e+00> : vector<8x32xf32>
    %124 = tpu.matmul %121, %122, %cst_54 {dimension_numbers = #tpu.dot_dimension_numbers<[1], [0], [0], [1], [0, 0, 1, 1], [], []>} : vector<8x16xf32>, vector<16x32xf32>, vector<8x32xf32> -> vector<8x32xf32>
    %125 = vector.broadcast %123 : vector<1x32xf32> to vector<8x32xf32>
    %126 = arith.addf %124, %125 : vector<8x32xf32>
    %127 = arith.addf %33, %64 : vector<8x32xf32>
    %128 = arith.addf %127, %95 : vector<8x32xf32>
    %129 = arith.addf %128, %126 : vector<8x32xf32>
    %cst_55 = arith.constant 2.500000e-01 : f32
    %130 = vector.broadcast %cst_55 : f32 to vector<8x32xf32>
    %131 = arith.mulf %129, %130 : vector<8x32xf32>
    %cst_56 = arith.constant 0.000000e+00 : f32
    %132 = vector.broadcast %cst_56 : f32 to vector<8x32xf32>
    %133 = arith.maximumf %131, %132 : vector<8x32xf32>
    %c0_57 = arith.constant 0 : index
    %c0_58 = arith.constant 0 : index
    %134 = vector.load %arg6[%c0_57, %c0_58] : memref<32x2xf32, #tpu.memory_space<vmem>>, vector<32x2xf32>
    %cst_59 = arith.constant dense<0.000000e+00> : vector<8x2xf32>
    %135 = tpu.matmul %133, %134, %cst_59 {dimension_numbers = #tpu.dot_dimension_numbers<[1], [0], [0], [1], [0, 0, 1, 1], [], []>} : vector<8x32xf32>, vector<32x2xf32>, vector<8x2xf32> -> vector<8x2xf32>
    %c0_60 = arith.constant 0 : index
    %c0_61 = arith.constant 0 : index
    %136 = vector.load %arg7[%c0_60, %c0_61] : memref<1x2xf32, #tpu.memory_space<vmem>>, vector<1x2xf32>
    %137 = vector.broadcast %136 : vector<1x2xf32> to vector<8x2xf32>
    %138 = arith.addf %135, %137 : vector<8x2xf32>
    %cst_62 = arith.constant dense<0xFF800000> : vector<8xf32>
    %139 = vector.multi_reduction <maximumf>, %138, %cst_62 [1] : vector<8x2xf32> to vector<8xf32>
    %140 = vector.shape_cast %139 : vector<8xf32> to vector<8x1xf32>
    %141 = vector.broadcast %140 : vector<8x1xf32> to vector<8x2xf32>
    %142 = arith.subf %138, %141 : vector<8x2xf32>
    %143 = math.exp %142 : vector<8x2xf32>
    %cst_63 = arith.constant dense<0.000000e+00> : vector<8xf32>
    %144 = vector.multi_reduction <add>, %143, %cst_63 [1] : vector<8x2xf32> to vector<8xf32>
    %145 = vector.shape_cast %144 : vector<8xf32> to vector<8x1xf32>
    %146 = tpu.reciprocal %145 {approx = true} : vector<8x1xf32> -> vector<8x1xf32>
    %147 = arith.mulf %145, %146 : vector<8x1xf32>
    %cst_64 = arith.constant 2.000000e+00 : f32
    %148 = vector.broadcast %cst_64 : f32 to vector<8x1xf32>
    %149 = arith.subf %148, %147 : vector<8x1xf32>
    %150 = arith.mulf %146, %149 : vector<8x1xf32>
    %151 = vector.broadcast %150 : vector<8x1xf32> to vector<8x2xf32>
    %152 = arith.mulf %143, %151 : vector<8x2xf32>
    %c0_65 = arith.constant 0 : index
    %c0_66 = arith.constant 0 : index
    %153 = vector.load %arg8[%c0_65, %c0_66] : memref<8x2xf32, #tpu.memory_space<vmem>>, vector<8x2xf32>
    tpu.vector_store %arg8[%c0_65, %c0_66], %152 {strides = array<i32>} : memref<8x2xf32, #tpu.memory_space<vmem>>, vector<8x2xf32>,
    return
  }
  func.func @transform_0(%arg0: i32) -> (i32, i32) {
    %c0_i32 = arith.constant 0 : i32
    %c0_i32_0 = arith.constant 0 : i32
    return %arg0, %c0_i32 : i32, i32
  }
  func.func @transform_1(%arg0: i32) -> (i32, i32) {
    %c0_i32 = arith.constant 0 : i32
    %c0_i32_0 = arith.constant 0 : i32
    return %arg0, %c0_i32 : i32, i32
  }
  func.func @transform_2(%arg0: i32) -> (i32, i32) {
    %c0_i32 = arith.constant 0 : i32
    %c0_i32_0 = arith.constant 0 : i32
    %c0_i32_1 = arith.constant 0 : i32
    return %c0_i32, %c0_i32_0 : i32, i32
  }
  func.func @transform_3(%arg0: i32) -> (i32, i32) {
    %c0_i32 = arith.constant 0 : i32
    %c0_i32_0 = arith.constant 0 : i32
    %c0_i32_1 = arith.constant 0 : i32
    return %c0_i32, %c0_i32_0 : i32, i32
  }
  func.func @transform_4(%arg0: i32) -> (i32, i32) {
    %c0_i32 = arith.constant 0 : i32
    %c0_i32_0 = arith.constant 0 : i32
    %c0_i32_1 = arith.constant 0 : i32
    return %c0_i32, %c0_i32_0 : i32, i32
  }
  func.func @transform_5(%arg0: i32) -> (i32, i32) {
    %c0_i32 = arith.constant 0 : i32
    %c0_i32_0 = arith.constant 0 : i32
    %c0_i32_1 = arith.constant 0 : i32
    return %c0_i32, %c0_i32_0 : i32, i32
  }
  func.func @transform_6(%arg0: i32) -> (i32, i32) {
    %c0_i32 = arith.constant 0 : i32
    %c0_i32_0 = arith.constant 0 : i32
    %c0_i32_1 = arith.constant 0 : i32
    return %c0_i32, %c0_i32_0 : i32, i32
  }
  func.func @transform_7(%arg0: i32) -> (i32, i32) {
    %c0_i32 = arith.constant 0 : i32
    %c0_i32_0 = arith.constant 0 : i32
    return %arg0, %c0_i32 : i32, i32
  }
}

</mosaic_0001>

<llo_original>
// kernel: _lambda_.4
$region0: #{_lambda_.4}
  #allocation0 [shape = 'u32[]', space=smem, size = 0x4, offset = 0x4, fixed_abs, tag = 'smem constant byte address 0x4 - core index']
  #allocation1 [shape = 'u32[144,128]{1,0:T(1,128)}', space=vmem, size = 0x12000, scoped, tag = 'internal scratch']
  %s0 = inlined_call_operand.vmem [shape: f32[16,8], index: 0, kind: input, shape index: {}]
  %s1 = inlined_call_operand.vmem [shape: f32[8,128], index: 1, kind: input, shape index: {}]
  %s2 = inlined_call_operand.vmem [shape: f32[128,8], index: 2, kind: input, shape index: {}]
  %s3 = inlined_call_operand.vmem [shape: f32[16,128], index: 3, kind: output, shape index: {0}]
  %s4 = inlined_call_operand.vmem [shape: f32[16,8], index: 4, kind: output, shape index: {1}]
  %5 = xla_tuple %s3, %s4
  %s6 = sld [smem:[#allocation0]]
  $region53: #{_lambda_.4} parent=0
    _
  %s8 = ssub.s32 1, %s6
  %s9 = scalar_select 0, %s8, %s6
  loop: start=0, step=1, limit=4
  $region2: #{_lambda_.4} parent=0 // loop_pre_header
    _
  $region3: #{_lambda_.4} parent=0 // loop_header
    %s11 = sphi 0, %s15
    %p12 = scmp.ge.s32.totalorder %s11, 4
    %s21 = sphi 0, %s23
    %s24 = sphi 0, %s21
    %s25 = sphi 0, %s24
    %s41 = sphi 0, %s25
    %s45 = sphi 0, %s45
    %s47 = sphi 0, %s45
    %s48 = sphi 0, %s47
    %s62 = sphi 0, %s48
    %s66 = sphi 0, %s66
    %s68 = sphi 0, %s66
    %s69 = sphi 0, %s68
    %s83 = sphi 0, %s69
    %s89 = sphi 0, %s91
    %s92 = sphi 0, %s89
    %s93 = sphi 0, %s92
    %s109 = sphi 0, %s93
    %s115 = sphi 0, %s117
    %s118 = sphi 0, %s115
    %s119 = sphi 0, %s118
    %s135 = sphi 0, %s119
  $region4: #{_lambda_.4} parent=0 // loop_header_branch
    %14 = sbr.rel (%p12) target = $region8
  $region5: #{_lambda_.4} parent=0 // loop_body
    %s16 = ssub.s32 %s11, 1
    %s17 = ssub.s32 %s11, 2
    %s18 = sadd.s32 %s11, 1
    %s19 = ssub.s32 %s11, %s18
    %p20 = scmp.eq.s32.totalorder %s19, 0
    %s22 = sadd.s32 %s21, 1
    %s23 = scalar_select %p20, %s21, %s22
    %p26 = pneg %p20
    %p27 = scmp.eq.s32.totalorder %s11, 1
    %p28 = por %p26, %p27
    %p29 = scmp.ne.s32.totalorder %s21, %s24
    %p30 = scmp.eq.s32.totalorder %s11, 0
    %p31 = por %p29, %p30
    %p32 = scmp.ne.s32.totalorder %s21, %s24
    %p33 = scmp.eq.s32.totalorder %s16, 1
    %p34 = por %p32, %p33
    %p35 = scmp.ne.s32.totalorder %s24, %s25
    %p36 = scmp.eq.s32.totalorder %s16, 0
    %p37 = por %p35, %p36
    %p38 = scmp.ne.s32.totalorder %s24, %s25
    %p39 = scmp.eq.s32.totalorder %s17, 1
    %p40 = por %p38, %p39
    %p42 = scmp.ne.s32.totalorder %s25, %s41
    %p43 = scmp.eq.s32.totalorder %s17, 0
    %p44 = por %p42, %p43
    %s46 = sadd.s32 %s45, 1
    %p49 = scmp.eq.s32.totalorder %s11, 1
    %p50 = scmp.ne.s32.totalorder %s45, %s47
    %p51 = scmp.eq.s32.totalorder %s11, 0
    %p52 = por %p50, %p51
    %p53 = scmp.ne.s32.totalorder %s45, %s47
    %p54 = scmp.eq.s32.totalorder %s16, 1
    %p55 = por %p53, %p54
    %p56 = scmp.ne.s32.totalorder %s47, %s48
    %p57 = scmp.eq.s32.totalorder %s16, 0
    %p58 = por %p56, %p57
    %p59 = scmp.ne.s32.totalorder %s47, %s48
    %p60 = scmp.eq.s32.totalorder %s17, 1
    %p61 = por %p59, %p60
    %p63 = scmp.ne.s32.totalorder %s48, %s62
    %p64 = scmp.eq.s32.totalorder %s17, 0
    %p65 = por %p63, %p64
    %s67 = sadd.s32 %s66, 1
    %p70 = scmp.eq.s32.totalorder %s11, 1
    %p71 = scmp.ne.s32.totalorder %s66, %s68
    %p72 = scmp.eq.s32.totalorder %s11, 0
    %p73 = por %p71, %p72
    %p74 = scmp.ne.s32.totalorder %s66, %s68
    %p75 = scmp.eq.s32.totalorder %s16, 1
    %p76 = por %p74, %p75
    %p77 = scmp.ne.s32.totalorder %s68, %s69
    %p78 = scmp.eq.s32.totalorder %s16, 0
    %p79 = por %p77, %p78
    %p80 = scmp.ne.s32.totalorder %s68, %s69
    %p81 = scmp.eq.s32.totalorder %s17, 1
    %p82 = por %p80, %p81
    %p84 = scmp.ne.s32.totalorder %s69, %s83
    %p85 = scmp.eq.s32.totalorder %s17, 0
    %p86 = por %p84, %p85
    %s87 = ssub.s32 %s11, %s18
    %p88 = scmp.eq.s32.totalorder %s87, 0
    %s90 = sadd.s32 %s89, 1
    %s91 = scalar_select %p88, %s89, %s90
    %p94 = pneg %p88
    %p95 = scmp.eq.s32.totalorder %s11, 1
    %p96 = por %p94, %p95
    %p97 = scmp.ne.s32.totalorder %s89, %s92
    %p98 = scmp.eq.s32.totalorder %s11, 0
    %p99 = por %p97, %p98
    %p100 = scmp.ne.s32.totalorder %s89, %s92
    %p101 = scmp.eq.s32.totalorder %s16, 1
    %p102 = por %p100, %p101
    %p103 = scmp.ne.s32.totalorder %s92, %s93
    %p104 = scmp.eq.s32.totalorder %s16, 0
    %p105 = por %p103, %p104
    %p106 = scmp.ne.s32.totalorder %s92, %s93
    %p107 = scmp.eq.s32.totalorder %s17, 1
    %p108 = por %p106, %p107
    %p110 = scmp.ne.s32.totalorder %s93, %s109
    %p111 = scmp.eq.s32.totalorder %s17, 0
    %p112 = por %p110, %p111
    %s113 = ssub.s32 %s11, %s18
    %p114 = scmp.eq.s32.totalorder %s113, 0
    %s116 = sadd.s32 %s115, 1
    %s117 = scalar_select %p114, %s115, %s116
    %p120 = pneg %p114
    %p121 = scmp.eq.s32.totalorder %s11, 1
    %p122 = por %p120, %p121
    %p123 = scmp.ne.s32.totalorder %s115, %s118
    %p124 = scmp.eq.s32.totalorder %s11, 0
    %p125 = por %p123, %p124
    %p126 = scmp.ne.s32.totalorder %s115, %s118
    %p127 = scmp.eq.s32.totalorder %s16, 1
    %p128 = por %p126, %p127
    %p129 = scmp.ne.s32.totalorder %s118, %s119
    %p130 = scmp.eq.s32.totalorder %s16, 0
    %p131 = por %p129, %p130
    %p132 = scmp.ne.s32.totalorder %s118, %s119
    %p133 = scmp.eq.s32.totalorder %s17, 1
    %p134 = por %p132, %p133
    %p136 = scmp.ne.s32.totalorder %s119, %s135
    %p137 = scmp.eq.s32.totalorder %s17, 0
    %p138 = por %p136, %p137
    %p139 = scmp.le.s32.totalorder 1, %s11
    %p140 = scmp.lt.s32.totalorder %s11, 3
    %p141 = pnand %p139, %p140
    %p142 = pneg %p141
    // Predicated region
    $region9: #{_lambda_.4} parent=5 // pred_check
      _
    $region10: #{_lambda_.4} parent=5 // pred_check_branch
      %144 = sbr.rel (%p141) target = $region12
    $region11: #{_lambda_.4} parent=5 // pred_region
      %s145 = ssub.s32 %s11, 1
      // Predicated region
      $region13: #{_lambda_.4} parent=11 // pred_check
        %p146 = pneg %p58
      $region14: #{_lambda_.4} parent=11 // pred_check_branch
        %148 = sbr.rel (%p146) target = $region16
      $region15: #{_lambda_.4} parent=11 // pred_region
        _
      $region16: #{_lambda_.4} parent=11 // pred_fallthru
        _
      // Predicated region
      $region17: #{_lambda_.4} parent=11 // pred_check
        %p149 = pneg %p79
      $region18: #{_lambda_.4} parent=11 // pred_check_branch
        %151 = sbr.rel (%p149) target = $region20
      $region19: #{_lambda_.4} parent=11 // pred_region
        _
      $region20: #{_lambda_.4} parent=11 // pred_fallthru
        _
    $region12: #{_lambda_.4} parent=5 // pred_fallthru
      _
    %p152 = scmp.lt.s32.totalorder %s11, 2
    // Predicated region
    $region21: #{_lambda_.4} parent=5 // pred_check
      %p153 = pneg %p152
    $region22: #{_lambda_.4} parent=5 // pred_check_branch
      %155 = sbr.rel (%p153) target = $region24
    $region23: #{_lambda_.4} parent=5 // pred_region
      // Predicated region
      $region25: #{_lambda_.4} parent=23 // pred_check
        %p156 = pneg %p31
      $region26: #{_lambda_.4} parent=23 // pred_check_branch
        %158 = sbr.rel (%p156) target = $region28
      $region27: #{_lambda_.4} parent=23 // pred_region
        %p159 = scmp.lt.s32.totalorder %s11, 1
        %s160 = scalar_select %p159, %s11, 1
        %s161 = smul.addr %s160, 8
        %s162 = scalar_lea.vmem %s0, %s161
      $region28: #{_lambda_.4} parent=23 // pred_fallthru
        _
    $region24: #{_lambda_.4} parent=5 // pred_fallthru
      _
    %p163 = scmp.le.s32.totalorder 1, %s11
    %p164 = scmp.lt.s32.totalorder %s11, 3
    %p165 = pnand %p163, %p164
    %p166 = pneg %p165
    // Predicated region
    $region29: #{_lambda_.4} parent=5 // pred_check
      _
    $region30: #{_lambda_.4} parent=5 // pred_check_branch
      %168 = sbr.rel (%p165) target = $region32
    $region31: #{_lambda_.4} parent=5 // pred_region
      %s169 = ssub.s32 %s11, 1
      %p170 = scmp.lt.s32.totalorder %s16, 1
      %s171 = scalar_select %p170, %s16, 1
      %s172 = smul.addr %s171, 8
      %s173 = scalar_lea.vmem %s0, %s172
      %p174 = pneg %p37
      %p175 = pneg %p34
      %p176 = pneg %p58
      %p177 = pneg %p55
      %p178 = pneg %p79
      %p179 = pneg %p76
      %p180 = pneg %p105
      %p181 = pneg %p102
      %p182 = scmp.lt.s32.totalorder %s16, 1
      %s183 = scalar_select %p182, %s16, 1
      %s184 = smul.addr %s183, 8
      %s185 = scalar_lea.vmem %s3, %s184
      %p186 = pneg %p131
      %p187 = pneg %p128
      %p188 = scmp.lt.s32.totalorder %s16, 1
      %s189 = scalar_select %p188, %s16, 1
      %s190 = smul.addr %s189, 8
      %s191 = scalar_lea.vmem %s4, %s190
      %p192 = scmp.lt.s32.totalorder %s16, 1
      %s193 = scalar_select %p192, %s16, 1
      %s194 = smul.addr %s193, 8
      %s195 = scalar_lea.vmem %s0, %s194
      %p196 = scmp.lt.s32.totalorder %s16, 1
      %s197 = scalar_select %p196, %s16, 1
      %s198 = smul.addr %s197, 8
      %s199 = scalar_lea.vmem %s3, %s198
      %p200 = scmp.lt.s32.totalorder %s16, 1
      %s201 = scalar_select %p200, %s16, 1
      %s202 = smul.addr %s201, 8
      %s203 = scalar_lea.vmem %s4, %s202
      %v204 = vld [vmem:[%s195] sm:$0xff]
      %v205 = vld [vmem:[%s1] sm:$0xff]
      %vm206 = vcmask 64512
      %v208 = vsel %vm206, %v204, 0
      %210 = vmatprep.subr.mxu0 0.0
      %211 = vmatpush1.msra.mxu0 %v205
      %212 = vmatprep.subr.mxu0 0.0
      %213 = vmatpush1.msra.mxu0 0.0
      %214 = vmatprep.subr.mxu0 0.0
      %215 = vmatpush1.msra.mxu0 0.0
      %216 = vmatprep.subr.mxu0 0.0
      %217 = vmatpush1.msra.mxu0 0.0
      %218 = vmatprep.subr.mxu0 0.0
      %219 = vmatpush1.msra.mxu0 0.0
      %220 = vmatprep.subr.mxu0 0.0
      %221 = vmatpush1.msra.mxu0 0.0
      %222 = vmatprep.subr.mxu0 0.0
      %223 = vmatpush1.msra.mxu0 0.0
      %224 = vmatprep.subr.mxu0 0.0
      %225 = vmatpush1.msra.mxu0 0.0
      %226 = vmatprep.subr.mxu0 0.0
      %227 = vmatpush1.msra.mxu0 0.0
      %228 = vmatprep.subr.mxu0 0.0
      %229 = vmatpush1.msra.mxu0 0.0
      %230 = vmatprep.subr.mxu0 0.0
      %231 = vmatpush1.msra.mxu0 0.0
      %232 = vmatprep.subr.mxu0 0.0
      %233 = vmatpush1.msra.mxu0 0.0
      %234 = vmatprep.subr.mxu0 0.0
      %235 = vmatpush1.msra.mxu0 0.0
      %236 = vmatprep.subr.mxu0 0.0
      %237 = vmatpush1.msra.mxu0 0.0
      %238 = vmatprep.subr.mxu0 0.0
      %239 = vmatpush1.msra.mxu0 0.0
      %240 = vmatprep.subr.mxu0 0.0
      %241 = vmatpush1.msra.mxu0 0.0
      %242 = vmatprep.subr.mxu0 0.0
      %243 = vmatpush1.msra.mxu0 0.0
      %244 = vmatprep.subr.mxu0 0.0
      %245 = vmatpush1.msra.mxu0 0.0
      %246 = vmatprep.subr.mxu0 0.0
      %247 = vmatpush1.msra.mxu0 0.0
      %248 = vmatprep.subr.mxu0 0.0
      %249 = vmatpush1.msra.mxu0 0.0
      %250 = vmatprep.subr.mxu0 0.0
      %251 = vmatpush1.msra.mxu0 0.0
      %252 = vmatprep.subr.mxu0 0.0
      %253 = vmatpush1.msra.mxu0 0.0
      %254 = vmatprep.subr.mxu0 0.0
      %255 = vmatpush1.msra.mxu0 0.0
      %256 = vmatprep.subr.mxu0 0.0
      %257 = vmatpush1.msra.mxu0 0.0
      %258 = vmatprep.subr.mxu0 0.0
      %259 = vmatpush1.msra.mxu0 0.0
      %260 = vmatprep.subr.mxu0 0.0
      %261 = vmatpush1.msra.mxu0 0.0
      %262 = vmatprep.subr.mxu0 0.0
      %263 = vmatpush1.msra.mxu0 0.0
      %264 = vmatprep.subr.mxu0 0.0
      %265 = vmatpush1.msra.mxu0 0.0
      %266 = vmatprep.subr.mxu0 0.0
      %267 = vmatpush1.msra.mxu0 0.0
      %268 = vmatprep.subr.mxu0 0.0
      %269 = vmatpush1.msra.mxu0 0.0
      %270 = vmatprep.subr.mxu0 0.0
      %271 = vmatpush1.msra.mxu0 0.0
      %272 = vmatprep.subr.mxu0 0.0
      %273 = vmatpush1.msra.mxu0 0.0
      %274 = vmatprep.mubr.f32.mxu0 0.0
      %275 = vmatmul.mubr.f32.gmra.mrb[0].mxu0 %v208
      %v276 = vpop.f32.mrb[0].mxu0
      %v277 = vadd.f32 0.0, %v276
      %v278 = vpop.f32.mrb[0].mxu0
      %279 = vdwg.mxu0
      %280 = vst [vmem:[%s199] sm:$0xff] %v277
      %v281 = vld [vmem:[%s2] sm:$0xff]
      %v282 = vld [vmem:[%s2 + $0x8] sm:$0xff]
      %v283 = vld [vmem:[%s2 + $0x10] sm:$0xff]
      %v284 = vld [vmem:[%s2 + $0x18] sm:$0xff]
      %v285 = vld [vmem:[%s2 + $0x20] sm:$0xff]
      %v286 = vld [vmem:[%s2 + $0x28] sm:$0xff]
      %v287 = vld [vmem:[%s2 + $0x30] sm:$0xff]
      %v288 = vld [vmem:[%s2 + $0x38] sm:$0xff]
      %v289 = vld [vmem:[%s2 + $0x40] sm:$0xff]
      %v290 = vld [vmem:[%s2 + $0x48] sm:$0xff]
      %v291 = vld [vmem:[%s2 + $0x50] sm:$0xff]
      %v292 = vld [vmem:[%s2 + $0x58] sm:$0xff]
      %v293 = vld [vmem:[%s2 + $0x60] sm:$0xff]
      %v294 = vld [vmem:[%s2 + $0x68] sm:$0xff]
      %v295 = vld [vmem:[%s2 + $0x70] sm:$0xff]
      %v296 = vld [vmem:[%s2 + $0x78] sm:$0xff]
      %297 = vmatprep.subr.mxu0 0.0
      %298 = vmatpush1.msra.mxu0 %v281
      %299 = vmatprep.subr.mxu0 0.0
      %300 = vmatpush1.msra.mxu0 %v282
      %301 = vmatprep.subr.mxu0 0.0
      %302 = vmatpush1.msra.mxu0 %v283
      %303 = vmatprep.subr.mxu0 0.0
      %304 = vmatpush1.msra.mxu0 %v284
      %305 = vmatprep.subr.mxu0 0.0
      %306 = vmatpush1.msra.mxu0 %v285
      %307 = vmatprep.subr.mxu0 0.0
      %308 = vmatpush1.msra.mxu0 %v286
      %309 = vmatprep.subr.mxu0 0.0
      %310 = vmatpush1.msra.mxu0 %v287
      %311 = vmatprep.subr.mxu0 0.0
      %312 = vmatpush1.msra.mxu0 %v288
      %313 = vmatprep.subr.mxu0 0.0
      %314 = vmatpush1.msra.mxu0 %v289
      %315 = vmatprep.subr.mxu0 0.0
      %316 = vmatpush1.msra.mxu0 %v290
      %317 = vmatprep.subr.mxu0 0.0
      %318 = vmatpush1.msra.mxu0 %v291
      %319 = vmatprep.subr.mxu0 0.0
      %320 = vmatpush1.msra.mxu0 %v292
      %321 = vmatprep.subr.mxu0 0.0
      %322 = vmatpush1.msra.mxu0 %v293
      %323 = vmatprep.subr.mxu0 0.0
      %324 = vmatpush1.msra.mxu0 %v294
      %325 = vmatprep.subr.mxu0 0.0
      %326 = vmatpush1.msra.mxu0 %v295
      %327 = vmatprep.subr.mxu0 0.0
      %328 = vmatpush1.msra.mxu0 %v296
      %329 = vmatprep.subr.mxu0 0.0
      %330 = vmatpush1.msra.mxu0 0.0
      %331 = vmatprep.subr.mxu0 0.0
      %332 = vmatpush1.msra.mxu0 0.0
      %333 = vmatprep.subr.mxu0 0.0
      %334 = vmatpush1.msra.mxu0 0.0
      %335 = vmatprep.subr.mxu0 0.0
      %336 = vmatpush1.msra.mxu0 0.0
      %337 = vmatprep.subr.mxu0 0.0
      %338 = vmatpush1.msra.mxu0 0.0
      %339 = vmatprep.subr.mxu0 0.0
      %340 = vmatpush1.msra.mxu0 0.0
      %341 = vmatprep.subr.mxu0 0.0
      %342 = vmatpush1.msra.mxu0 0.0
      %343 = vmatprep.subr.mxu0 0.0
      %344 = vmatpush1.msra.mxu0 0.0
      %345 = vmatprep.subr.mxu0 0.0
      %346 = vmatpush1.msra.mxu0 0.0
      %347 = vmatprep.subr.mxu0 0.0
      %348 = vmatpush1.msra.mxu0 0.0
      %349 = vmatprep.subr.mxu0 0.0
      %350 = vmatpush1.msra.mxu0 0.0
      %351 = vmatprep.subr.mxu0 0.0
      %352 = vmatpush1.msra.mxu0 0.0
      %353 = vmatprep.subr.mxu0 0.0
      %354 = vmatpush1.msra.mxu0 0.0
      %355 = vmatprep.subr.mxu0 0.0
      %356 = vmatpush1.msra.mxu0 0.0
      %357 = vmatprep.subr.mxu0 0.0
      %358 = vmatpush1.msra.mxu0 0.0
      %359 = vmatprep.subr.mxu0 0.0
      %360 = vmatpush1.msra.mxu0 0.0
      %361 = vmatprep.mubr.f32.mxu0 0.0
      %362 = vmatmul.mubr.f32.gmra.mrb[0].mxu0 %v277
      %v363 = vpop.f32.mrb[0].mxu0
      %v364 = vadd.f32 0.0, %v363
      %v365 = vpop.f32.mrb[0].mxu0
      %366 = vdwg.mxu0
      %367 = vst.msk [vmem:[%s203] sm:$0xff] %vm206, %v364
      %p368 = scmp.lt.s32.totalorder %s16, 1
      %s369 = scalar_select %p368, %s16, 1
      %s370 = smul.addr %s369, 8
      %s371 = scalar_lea.vmem %s3, %s370
      %p372 = scmp.lt.s32.totalorder %s16, 1
      %s373 = scalar_select %p372, %s16, 1
      %s374 = smul.addr %s373, 8
      %s375 = scalar_lea.vmem %s4, %s374
      // Predicated region
      $region33: #{_lambda_.4} parent=31 // pred_check
        %p376 = pneg %p102
      $region34: #{_lambda_.4} parent=31 // pred_check_branch
        %378 = sbr.rel (%p376) target = $region36
      $region35: #{_lambda_.4} parent=31 // pred_region
        _
      $region36: #{_lambda_.4} parent=31 // pred_fallthru
        _
      // Predicated region
      $region37: #{_lambda_.4} parent=31 // pred_check
        %p379 = pneg %p128
      $region38: #{_lambda_.4} parent=31 // pred_check_branch
        %381 = sbr.rel (%p379) target = $region40
      $region39: #{_lambda_.4} parent=31 // pred_region
        _
      $region40: #{_lambda_.4} parent=31 // pred_fallthru
        _
    $region32: #{_lambda_.4} parent=5 // pred_fallthru
      _
    %p382 = scmp.le.s32.totalorder 2, %s11
    // Predicated region
    $region41: #{_lambda_.4} parent=5 // pred_check
      %p383 = pneg %p382
    $region42: #{_lambda_.4} parent=5 // pred_check_branch
      %385 = sbr.rel (%p383) target = $region44
    $region43: #{_lambda_.4} parent=5 // pred_region
      %s386 = ssub.s32 %s11, 2
      // Predicated region
      $region45: #{_lambda_.4} parent=43 // pred_check
        %p387 = pneg %p108
      $region46: #{_lambda_.4} parent=43 // pred_check_branch
        %389 = sbr.rel (%p387) target = $region48
      $region47: #{_lambda_.4} parent=43 // pred_region
        %p390 = scmp.lt.s32.totalorder %s17, 1
        %s391 = scalar_select %p390, %s17, 1
        %s392 = smul.addr %s391, 8
        %s393 = scalar_lea.vmem %s3, %s392
      $region48: #{_lambda_.4} parent=43 // pred_fallthru
        _
      // Predicated region
      $region49: #{_lambda_.4} parent=43 // pred_check
        %p394 = pneg %p134
      $region50: #{_lambda_.4} parent=43 // pred_check_branch
        %396 = sbr.rel (%p394) target = $region52
      $region51: #{_lambda_.4} parent=43 // pred_region
        %p397 = scmp.lt.s32.totalorder %s17, 1
        %s398 = scalar_select %p397, %s17, 1
        %s399 = smul.addr %s398, 8
        %s400 = scalar_lea.vmem %s4, %s399
      $region52: #{_lambda_.4} parent=43 // pred_fallthru
        _
    $region44: #{_lambda_.4} parent=5 // pred_fallthru
      _
  $region6: #{_lambda_.4} parent=0 // loop_footer
    %s15 = sadd.s32 1, %s11
  $region7: #{_lambda_.4} parent=0 // loop_footer_branch
    %10 = sbr.rel target = $region3
  $region8: #{_lambda_.4} parent=0 // loop_exit
    _

// kernel: _lambda_.5
$region0: #{_lambda_.5}
  #allocation0 [shape = 'u32[]', space=smem, size = 0x4, offset = 0x4, fixed_abs, tag = 'smem constant byte address 0x4 - core index']
  #allocation1 [shape = 'u32[144,128]{1,0:T(1,128)}', space=vmem, size = 0x12000, scoped, tag = 'internal scratch']
  %s0 = inlined_call_operand.vmem [shape: f32[16,16], index: 0, kind: input, shape index: {}]
  %s1 = inlined_call_operand.vmem [shape: f32[16,4], index: 1, kind: input, shape index: {}]
  %s2 = inlined_call_operand.vmem [shape: f32[4,16], index: 2, kind: input, shape index: {}]
  %s3 = inlined_call_operand.vmem [shape: f32[16,128], index: 3, kind: input, shape index: {}]
  %s4 = inlined_call_operand.vmem [shape: f32[1,128], index: 4, kind: input, shape index: {}]
  %s5 = inlined_call_operand.vmem [shape: f32[16,128], index: 5, kind: output, shape index: {}]
  %s6 = sld [smem:[#allocation0]]
  $region53: #{_lambda_.5} parent=0
    _
  %s8 = ssub.s32 1, %s6
  %s9 = scalar_select 0, %s8, %s6
  loop: start=0, step=1, limit=4
  $region2: #{_lambda_.5} parent=0 // loop_pre_header
    _
  $region3: #{_lambda_.5} parent=0 // loop_header
    %s11 = sphi 0, %s15
    %p12 = scmp.ge.s32.totalorder %s11, 4
    %s21 = sphi 0, %s23
    %s24 = sphi 0, %s21
    %s25 = sphi 0, %s24
    %s41 = sphi 0, %s25
    %s47 = sphi 0, %s49
    %s50 = sphi 0, %s47
    %s51 = sphi 0, %s50
    %s67 = sphi 0, %s51
    %s71 = sphi 0, %s71
    %s73 = sphi 0, %s71
    %s74 = sphi 0, %s73
    %s88 = sphi 0, %s74
    %s92 = sphi 0, %s92
    %s94 = sphi 0, %s92
    %s95 = sphi 0, %s94
    %s109 = sphi 0, %s95
    %s113 = sphi 0, %s113
    %s115 = sphi 0, %s113
    %s116 = sphi 0, %s115
    %s130 = sphi 0, %s116
    %s136 = sphi 0, %s138
    %s139 = sphi 0, %s136
    %s140 = sphi 0, %s139
    %s156 = sphi 0, %s140
  $region4: #{_lambda_.5} parent=0 // loop_header_branch
    %14 = sbr.rel (%p12) target = $region8
  $region5: #{_lambda_.5} parent=0 // loop_body
    %s16 = ssub.s32 %s11, 1
    %s17 = ssub.s32 %s11, 2
    %s18 = sadd.s32 %s11, 1
    %s19 = ssub.s32 %s11, %s18
    %p20 = scmp.eq.s32.totalorder %s19, 0
    %s22 = sadd.s32 %s21, 1
    %s23 = scalar_select %p20, %s21, %s22
    %p26 = pneg %p20
    %p27 = scmp.eq.s32.totalorder %s11, 1
    %p28 = por %p26, %p27
    %p29 = scmp.ne.s32.totalorder %s21, %s24
    %p30 = scmp.eq.s32.totalorder %s11, 0
    %p31 = por %p29, %p30
    %p32 = scmp.ne.s32.totalorder %s21, %s24
    %p33 = scmp.eq.s32.totalorder %s16, 1
    %p34 = por %p32, %p33
    %p35 = scmp.ne.s32.totalorder %s24, %s25
    %p36 = scmp.eq.s32.totalorder %s16, 0
    %p37 = por %p35, %p36
    %p38 = scmp.ne.s32.totalorder %s24, %s25
    %p39 = scmp.eq.s32.totalorder %s17, 1
    %p40 = por %p38, %p39
    %p42 = scmp.ne.s32.totalorder %s25, %s41
    %p43 = scmp.eq.s32.totalorder %s17, 0
    %p44 = por %p42, %p43
    %s45 = ssub.s32 %s11, %s18
    %p46 = scmp.eq.s32.totalorder %s45, 0
    %s48 = sadd.s32 %s47, 1
    %s49 = scalar_select %p46, %s47, %s48
    %p52 = pneg %p46
    %p53 = scmp.eq.s32.totalorder %s11, 1
    %p54 = por %p52, %p53
    %p55 = scmp.ne.s32.totalorder %s47, %s50
    %p56 = scmp.eq.s32.totalorder %s11, 0
    %p57 = por %p55, %p56
    %p58 = scmp.ne.s32.totalorder %s47, %s50
    %p59 = scmp.eq.s32.totalorder %s16, 1
    %p60 = por %p58, %p59
    %p61 = scmp.ne.s32.totalorder %s50, %s51
    %p62 = scmp.eq.s32.totalorder %s16, 0
    %p63 = por %p61, %p62
    %p64 = scmp.ne.s32.totalorder %s50, %s51
    %p65 = scmp.eq.s32.totalorder %s17, 1
    %p66 = por %p64, %p65
    %p68 = scmp.ne.s32.totalorder %s51, %s67
    %p69 = scmp.eq.s32.totalorder %s17, 0
    %p70 = por %p68, %p69
    %s72 = sadd.s32 %s71, 1
    %p75 = scmp.eq.s32.totalorder %s11, 1
    %p76 = scmp.ne.s32.totalorder %s71, %s73
    %p77 = scmp.eq.s32.totalorder %s11, 0
    %p78 = por %p76, %p77
    %p79 = scmp.ne.s32.totalorder %s71, %s73
    %p80 = scmp.eq.s32.totalorder %s16, 1
    %p81 = por %p79, %p80
    %p82 = scmp.ne.s32.totalorder %s73, %s74
    %p83 = scmp.eq.s32.totalorder %s16, 0
    %p84 = por %p82, %p83
    %p85 = scmp.ne.s32.totalorder %s73, %s74
    %p86 = scmp.eq.s32.totalorder %s17, 1
    %p87 = por %p85, %p86
    %p89 = scmp.ne.s32.totalorder %s74, %s88
    %p90 = scmp.eq.s32.totalorder %s17, 0
    %p91 = por %p89, %p90
    %s93 = sadd.s32 %s92, 1
    %p96 = scmp.eq.s32.totalorder %s11, 1
    %p97 = scmp.ne.s32.totalorder %s92, %s94
    %p98 = scmp.eq.s32.totalorder %s11, 0
    %p99 = por %p97, %p98
    %p100 = scmp.ne.s32.totalorder %s92, %s94
    %p101 = scmp.eq.s32.totalorder %s16, 1
    %p102 = por %p100, %p101
    %p103 = scmp.ne.s32.totalorder %s94, %s95
    %p104 = scmp.eq.s32.totalorder %s16, 0
    %p105 = por %p103, %p104
    %p106 = scmp.ne.s32.totalorder %s94, %s95
    %p107 = scmp.eq.s32.totalorder %s17, 1
    %p108 = por %p106, %p107
    %p110 = scmp.ne.s32.totalorder %s95, %s109
    %p111 = scmp.eq.s32.totalorder %s17, 0
    %p112 = por %p110, %p111
    %s114 = sadd.s32 %s113, 1
    %p117 = scmp.eq.s32.totalorder %s11, 1
    %p118 = scmp.ne.s32.totalorder %s113, %s115
    %p119 = scmp.eq.s32.totalorder %s11, 0
    %p120 = por %p118, %p119
    %p121 = scmp.ne.s32.totalorder %s113, %s115
    %p122 = scmp.eq.s32.totalorder %s16, 1
    %p123 = por %p121, %p122
    %p124 = scmp.ne.s32.totalorder %s115, %s116
    %p125 = scmp.eq.s32.totalorder %s16, 0
    %p126 = por %p124, %p125
    %p127 = scmp.ne.s32.totalorder %s115, %s116
    %p128 = scmp.eq.s32.totalorder %s17, 1
    %p129 = por %p127, %p128
    %p131 = scmp.ne.s32.totalorder %s116, %s130
    %p132 = scmp.eq.s32.totalorder %s17, 0
    %p133 = por %p131, %p132
    %s134 = ssub.s32 %s11, %s18
    %p135 = scmp.eq.s32.totalorder %s134, 0
    %s137 = sadd.s32 %s136, 1
    %s138 = scalar_select %p135, %s136, %s137
    %p141 = pneg %p135
    %p142 = scmp.eq.s32.totalorder %s11, 1
    %p143 = por %p141, %p142
    %p144 = scmp.ne.s32.totalorder %s136, %s139
    %p145 = scmp.eq.s32.totalorder %s11, 0
    %p146 = por %p144, %p145
    %p147 = scmp.ne.s32.totalorder %s136, %s139
    %p148 = scmp.eq.s32.totalorder %s16, 1
    %p149 = por %p147, %p148
    %p150 = scmp.ne.s32.totalorder %s139, %s140
    %p151 = scmp.eq.s32.totalorder %s16, 0
    %p152 = por %p150, %p151
    %p153 = scmp.ne.s32.totalorder %s139, %s140
    %p154 = scmp.eq.s32.totalorder %s17, 1
    %p155 = por %p153, %p154
    %p157 = scmp.ne.s32.totalorder %s140, %s156
    %p158 = scmp.eq.s32.totalorder %s17, 0
    %p159 = por %p157, %p158
    %p160 = scmp.le.s32.totalorder 1, %s11
    %p161 = scmp.lt.s32.totalorder %s11, 3
    %p162 = pnand %p160, %p161
    %p163 = pneg %p162
    // Predicated region
    $region9: #{_lambda_.5} parent=5 // pred_check
      _
    $region10: #{_lambda_.5} parent=5 // pred_check_branch
      %165 = sbr.rel (%p162) target = $region12
    $region11: #{_lambda_.5} parent=5 // pred_region
      %s166 = ssub.s32 %s11, 1
      // Predicated region
      $region13: #{_lambda_.5} parent=11 // pred_check
        %p167 = pneg %p84
      $region14: #{_lambda_.5} parent=11 // pred_check_branch
        %169 = sbr.rel (%p167) target = $region16
      $region15: #{_lambda_.5} parent=11 // pred_region
        _
      $region16: #{_lambda_.5} parent=11 // pred_fallthru
        _
      // Predicated region
      $region17: #{_lambda_.5} parent=11 // pred_check
        %p170 = pneg %p105
      $region18: #{_lambda_.5} parent=11 // pred_check_branch
        %172 = sbr.rel (%p170) target = $region20
      $region19: #{_lambda_.5} parent=11 // pred_region
        _
      $region20: #{_lambda_.5} parent=11 // pred_fallthru
        _
      // Predicated region
      $region21: #{_lambda_.5} parent=11 // pred_check
        %p173 = pneg %p126
      $region22: #{_lambda_.5} parent=11 // pred_check_branch
        %175 = sbr.rel (%p173) target = $region24
      $region23: #{_lambda_.5} parent=11 // pred_region
        _
      $region24: #{_lambda_.5} parent=11 // pred_fallthru
        _
    $region12: #{_lambda_.5} parent=5 // pred_fallthru
      _
    %p176 = scmp.lt.s32.totalorder %s11, 2
    // Predicated region
    $region25: #{_lambda_.5} parent=5 // pred_check
      %p177 = pneg %p176
    $region26: #{_lambda_.5} parent=5 // pred_check_branch
      %179 = sbr.rel (%p177) target = $region28
    $region27: #{_lambda_.5} parent=5 // pred_region
      // Predicated region
      $region29: #{_lambda_.5} parent=27 // pred_check
        %p180 = pneg %p31
      $region30: #{_lambda_.5} parent=27 // pred_check_branch
        %182 = sbr.rel (%p180) target = $region32
      $region31: #{_lambda_.5} parent=27 // pred_region
        %p183 = scmp.lt.s32.totalorder %s11, 1
        %s184 = scalar_select %p183, %s11, 1
        %s185 = smul.addr %s184, 8
        %s186 = scalar_lea.vmem %s0, %s185
      $region32: #{_lambda_.5} parent=27 // pred_fallthru
        _
      // Predicated region
      $region33: #{_lambda_.5} parent=27 // pred_check
        %p187 = pneg %p57
      $region34: #{_lambda_.5} parent=27 // pred_check_branch
        %189 = sbr.rel (%p187) target = $region36
      $region35: #{_lambda_.5} parent=27 // pred_region
        %p190 = scmp.lt.s32.totalorder %s11, 1
        %s191 = scalar_select %p190, %s11, 1
        %s192 = smul.addr %s191, 8
        %s193 = scalar_lea.vmem %s1, %s192
      $region36: #{_lambda_.5} parent=27 // pred_fallthru
        _
    $region28: #{_lambda_.5} parent=5 // pred_fallthru
      _
    %p194 = scmp.le.s32.totalorder 1, %s11
    %p195 = scmp.lt.s32.totalorder %s11, 3
    %p196 = pnand %p194, %p195
    %p197 = pneg %p196
    // Predicated region
    $region37: #{_lambda_.5} parent=5 // pred_check
      _
    $region38: #{_lambda_.5} parent=5 // pred_check_branch
      %199 = sbr.rel (%p196) target = $region40
    $region39: #{_lambda_.5} parent=5 // pred_region
      %s200 = ssub.s32 %s11, 1
      %p201 = scmp.lt.s32.totalorder %s16, 1
      %s202 = scalar_select %p201, %s16, 1
      %s203 = smul.addr %s202, 8
      %s204 = scalar_lea.vmem %s0, %s203
      %p205 = pneg %p37
      %p206 = pneg %p34
      %p207 = scmp.lt.s32.totalorder %s16, 1
      %s208 = scalar_select %p207, %s16, 1
      %s209 = smul.addr %s208, 8
      %s210 = scalar_lea.vmem %s1, %s209
      %p211 = pneg %p63
      %p212 = pneg %p60
      %p213 = pneg %p84
      %p214 = pneg %p81
      %p215 = pneg %p105
      %p216 = pneg %p102
      %p217 = pneg %p126
      %p218 = pneg %p123
      %p219 = pneg %p152
      %p220 = pneg %p149
      %p221 = scmp.lt.s32.totalorder %s16, 1
      %s222 = scalar_select %p221, %s16, 1
      %s223 = smul.addr %s222, 8
      %s224 = scalar_lea.vmem %s5, %s223
      %p225 = scmp.lt.s32.totalorder %s16, 1
      %s226 = scalar_select %p225, %s16, 1
      %s227 = smul.addr %s226, 8
      %s228 = scalar_lea.vmem %s0, %s227
      %p229 = scmp.lt.s32.totalorder %s16, 1
      %s230 = scalar_select %p229, %s16, 1
      %s231 = smul.addr %s230, 8
      %s232 = scalar_lea.vmem %s1, %s231
      %p233 = scmp.lt.s32.totalorder %s16, 1
      %s234 = scalar_select %p233, %s16, 1
      %s235 = smul.addr %s234, 8
      %s236 = scalar_lea.vmem %s5, %s235
      %v237 = vld [vmem:[%s228] sm:$0xff]
      %vm238 = vcmp.gt.f32.partialorder %v237, 0.0
      %v239 = vld [vmem:[%s232] sm:$0xff]
      %v240 = vld [vmem:[%s2] sm:$0x1]
      %242 = vset.pattern.permute.xlu0 0
      %243 = vperm.xlu0 %242, %v239
      %v244 = vpop.permute.xlu0 %243
      %v246 = vlaneseq
      %v247 = vshrl.u32 %v246, 7
      %v248 = vsub.s32 0, %v247
      %v249 = vrot.slane %v240, %v248
      %v250 = vadd.f32 %v244, %v249
      %vm251 = vcmp.gt.f32.partialorder %v250, 0.0
      %v252 = vmul.f32 %v250, 0.2
      %v253 = vsel %vm251, %v250, %v252
      %v254 = vsel %vm238, %v253, -1e+09
      %vm255 = vcmask 130048
      %v256 = vsel %vm255, %v254, -inf
      %257 = vmax.xlane.f32.xlu0 %v256
      %v258 = vpop.xlane.xlu0 %257
      %v259 = vsub.f32 %v254, %v258
      %v260 = vmul.f32 %v259, 1.442695
      %v261 = vpow.pop %v260
      %v262 = vsel %vm255, %v261, 0.0
      %263 = vadd.xlane.f32.xlu0 %v262
      %v264 = vpop.xlane.xlu0 %263
      %v265 = vrcp.pop %v264
      %v266 = vmul.f32 %v264, %v265
      %v267 = vsub.f32 2.0, %v266
      %v268 = vmul.f32 %v265, %v267
      %v269 = vmul.f32 %v261, %v268
      %v270 = vld [vmem:[%s3] sm:$0xff]
      %v271 = vld [vmem:[%s3 + $0x8] sm:$0xff]
      %v272 = vld [vmem:[%s4] sm:$0x1]
      %v274 = vlaneseq
      %v275 = vshrl.u32 %v274, 7
      %v276 = vsub.s32 0, %v275
      %v277 = vrot.slane %v272, %v276
      %v280 = vsel %vm255, %v269, 0
      %282 = vmatprep.subr.mxu0 0.0
      %283 = vmatpush1.msra.mxu0 %v270
      %284 = vmatprep.subr.mxu0 0.0
      %285 = vmatpush1.msra.mxu0 %v271
      %286 = vmatprep.subr.mxu0 0.0
      %287 = vmatpush1.msra.mxu0 0.0
      %288 = vmatprep.subr.mxu0 0.0
      %289 = vmatpush1.msra.mxu0 0.0
      %290 = vmatprep.subr.mxu0 0.0
      %291 = vmatpush1.msra.mxu0 0.0
      %292 = vmatprep.subr.mxu0 0.0
      %293 = vmatpush1.msra.mxu0 0.0
      %294 = vmatprep.subr.mxu0 0.0
      %295 = vmatpush1.msra.mxu0 0.0
      %296 = vmatprep.subr.mxu0 0.0
      %297 = vmatpush1.msra.mxu0 0.0
      %298 = vmatprep.subr.mxu0 0.0
      %299 = vmatpush1.msra.mxu0 0.0
      %300 = vmatprep.subr.mxu0 0.0
      %301 = vmatpush1.msra.mxu0 0.0
      %302 = vmatprep.subr.mxu0 0.0
      %303 = vmatpush1.msra.mxu0 0.0
      %304 = vmatprep.subr.mxu0 0.0
      %305 = vmatpush1.msra.mxu0 0.0
      %306 = vmatprep.subr.mxu0 0.0
      %307 = vmatpush1.msra.mxu0 0.0
      %308 = vmatprep.subr.mxu0 0.0
      %309 = vmatpush1.msra.mxu0 0.0
      %310 = vmatprep.subr.mxu0 0.0
      %311 = vmatpush1.msra.mxu0 0.0
      %312 = vmatprep.subr.mxu0 0.0
      %313 = vmatpush1.msra.mxu0 0.0
      %314 = vmatprep.subr.mxu0 0.0
      %315 = vmatpush1.msra.mxu0 0.0
      %316 = vmatprep.subr.mxu0 0.0
      %317 = vmatpush1.msra.mxu0 0.0
      %318 = vmatprep.subr.mxu0 0.0
      %319 = vmatpush1.msra.mxu0 0.0
      %320 = vmatprep.subr.mxu0 0.0
      %321 = vmatpush1.msra.mxu0 0.0
      %322 = vmatprep.subr.mxu0 0.0
      %323 = vmatpush1.msra.mxu0 0.0
      %324 = vmatprep.subr.mxu0 0.0
      %325 = vmatpush1.msra.mxu0 0.0
      %326 = vmatprep.subr.mxu0 0.0
      %327 = vmatpush1.msra.mxu0 0.0
      %328 = vmatprep.subr.mxu0 0.0
      %329 = vmatpush1.msra.mxu0 0.0
      %330 = vmatprep.subr.mxu0 0.0
      %331 = vmatpush1.msra.mxu0 0.0
      %332 = vmatprep.subr.mxu0 0.0
      %333 = vmatpush1.msra.mxu0 0.0
      %334 = vmatprep.subr.mxu0 0.0
      %335 = vmatpush1.msra.mxu0 0.0
      %336 = vmatprep.subr.mxu0 0.0
      %337 = vmatpush1.msra.mxu0 0.0
      %338 = vmatprep.subr.mxu0 0.0
      %339 = vmatpush1.msra.mxu0 0.0
      %340 = vmatprep.subr.mxu0 0.0
      %341 = vmatpush1.msra.mxu0 0.0
      %342 = vmatprep.subr.mxu0 0.0
      %343 = vmatpush1.msra.mxu0 0.0
      %344 = vmatprep.subr.mxu0 0.0
      %345 = vmatpush1.msra.mxu0 0.0
      %346 = vmatprep.mubr.f32.mxu0 0.0
      %347 = vmatmul.mubr.f32.gmra.mrb[0].mxu0 %v280
      %v348 = vpop.f32.mrb[0].mxu0
      %v349 = vadd.f32 %v277, %v348
      %v350 = vpop.f32.mrb[0].mxu0
      %351 = vdwg.mxu0
      %v352 = vld [vmem:[%s2 + $0x1] sm:$0x1]
      %353 = vset.pattern.permute.xlu0 1
      %354 = vperm.xlu0 %353, %v239
      %v355 = vpop.permute.xlu0 %354
      %v357 = vlaneseq
      %v358 = vshrl.u32 %v357, 7
      %v359 = vsub.s32 0, %v358
      %v360 = vrot.slane %v352, %v359
      %v361 = vadd.f32 %v355, %v360
      %vm362 = vcmp.gt.f32.partialorder %v361, 0.0
      %v363 = vmul.f32 %v361, 0.2
      %v364 = vsel %vm362, %v361, %v363
      %v365 = vsel %vm238, %v364, -1e+09
      %v366 = vsel %vm255, %v365, -inf
      %367 = vmax.xlane.f32.xlu0 %v366
      %v368 = vpop.xlane.xlu0 %367
      %v369 = vsub.f32 %v365, %v368
      %v370 = vmul.f32 %v369, 1.442695
      %v371 = vpow.pop %v370
      %v372 = vsel %vm255, %v371, 0.0
      %373 = vadd.xlane.f32.xlu0 %v372
      %v374 = vpop.xlane.xlu0 %373
      %v375 = vrcp.pop %v374
      %v376 = vmul.f32 %v374, %v375
      %v377 = vsub.f32 2.0, %v376
      %v378 = vmul.f32 %v375, %v377
      %v379 = vmul.f32 %v371, %v378
      %382 = vrot.lane.b32.xlu0 %v270, 96
      %v383 = vpop.permute.xlu0 %382
      %384 = vrot.lane.b32.xlu0 %v271, 96
      %v385 = vpop.permute.xlu0 %384
      %388 = vrot.lane.b32.xlu0 %v277, 96
      %v389 = vpop.permute.xlu0 %388
      %v392 = vsel %vm255, %v379, 0
      %394 = vmatprep.subr.mxu0 0.0
      %395 = vmatpush1.msra.mxu0 %v383
      %396 = vmatprep.subr.mxu0 0.0
      %397 = vmatpush1.msra.mxu0 %v385
      %398 = vmatprep.subr.mxu0 0.0
      %399 = vmatpush1.msra.mxu0 0.0
      %400 = vmatprep.subr.mxu0 0.0
      %401 = vmatpush1.msra.mxu0 0.0
      %402 = vmatprep.subr.mxu0 0.0
      %403 = vmatpush1.msra.mxu0 0.0
      %404 = vmatprep.subr.mxu0 0.0
      %405 = vmatpush1.msra.mxu0 0.0
      %406 = vmatprep.subr.mxu0 0.0
      %407 = vmatpush1.msra.mxu0 0.0
      %408 = vmatprep.subr.mxu0 0.0
      %409 = vmatpush1.msra.mxu0 0.0
      %410 = vmatprep.subr.mxu0 0.0
      %411 = vmatpush1.msra.mxu0 0.0
      %412 = vmatprep.subr.mxu0 0.0
      %413 = vmatpush1.msra.mxu0 0.0
      %414 = vmatprep.subr.mxu0 0.0
      %415 = vmatpush1.msra.mxu0 0.0
      %416 = vmatprep.subr.mxu0 0.0
      %417 = vmatpush1.msra.mxu0 0.0
      %418 = vmatprep.subr.mxu0 0.0
      %419 = vmatpush1.msra.mxu0 0.0
      %420 = vmatprep.subr.mxu0 0.0
      %421 = vmatpush1.msra.mxu0 0.0
      %422 = vmatprep.subr.mxu0 0.0
      %423 = vmatpush1.msra.mxu0 0.0
      %424 = vmatprep.subr.mxu0 0.0
      %425 = vmatpush1.msra.mxu0 0.0
      %426 = vmatprep.subr.mxu0 0.0
      %427 = vmatpush1.msra.mxu0 0.0
      %428 = vmatprep.subr.mxu0 0.0
      %429 = vmatpush1.msra.mxu0 0.0
      %430 = vmatprep.subr.mxu0 0.0
      %431 = vmatpush1.msra.mxu0 0.0
      %432 = vmatprep.subr.mxu0 0.0
      %433 = vmatpush1.msra.mxu0 0.0
      %434 = vmatprep.subr.mxu0 0.0
      %435 = vmatpush1.msra.mxu0 0.0
      %436 = vmatprep.subr.mxu0 0.0
      %437 = vmatpush1.msra.mxu0 0.0
      %438 = vmatprep.subr.mxu0 0.0
      %439 = vmatpush1.msra.mxu0 0.0
      %440 = vmatprep.subr.mxu0 0.0
      %441 = vmatpush1.msra.mxu0 0.0
      %442 = vmatprep.subr.mxu0 0.0
      %443 = vmatpush1.msra.mxu0 0.0
      %444 = vmatprep.subr.mxu0 0.0
      %445 = vmatpush1.msra.mxu0 0.0
      %446 = vmatprep.subr.mxu0 0.0
      %447 = vmatpush1.msra.mxu0 0.0
      %448 = vmatprep.subr.mxu0 0.0
      %449 = vmatpush1.msra.mxu0 0.0
      %450 = vmatprep.subr.mxu0 0.0
      %451 = vmatpush1.msra.mxu0 0.0
      %452 = vmatprep.subr.mxu0 0.0
      %453 = vmatpush1.msra.mxu0 0.0
      %454 = vmatprep.subr.mxu0 0.0
      %455 = vmatpush1.msra.mxu0 0.0
      %456 = vmatprep.subr.mxu0 0.0
      %457 = vmatpush1.msra.mxu0 0.0
      %458 = vmatprep.mubr.f32.mxu0 0.0
      %459 = vmatmul.mubr.f32.gmra.mrb[0].mxu0 %v392
      %v460 = vpop.f32.mrb[0].mxu0
      %v461 = vadd.f32 %v389, %v460
      %v462 = vpop.f32.mrb[0].mxu0
      %463 = vdwg.mxu0
      %v464 = vld [vmem:[%s2 + $0x2] sm:$0x1]
      %465 = vset.pattern.permute.xlu0 2
      %466 = vperm.xlu0 %465, %v239
      %v467 = vpop.permute.xlu0 %466
      %v469 = vlaneseq
      %v470 = vshrl.u32 %v469, 7
      %v471 = vsub.s32 0, %v470
      %v472 = vrot.slane %v464, %v471
      %v473 = vadd.f32 %v467, %v472
      %vm474 = vcmp.gt.f32.partialorder %v473, 0.0
      %v475 = vmul.f32 %v473, 0.2
      %v476 = vsel %vm474, %v473, %v475
      %v477 = vsel %vm238, %v476, -1e+09
      %v478 = vsel %vm255, %v477, -inf
      %479 = vmax.xlane.f32.xlu0 %v478
      %v480 = vpop.xlane.xlu0 %479
      %v481 = vsub.f32 %v477, %v480
      %v482 = vmul.f32 %v481, 1.442695
      %v483 = vpow.pop %v482
      %v484 = vsel %vm255, %v483, 0.0
      %485 = vadd.xlane.f32.xlu0 %v484
      %v486 = vpop.xlane.xlu0 %485
      %v487 = vrcp.pop %v486
      %v488 = vmul.f32 %v486, %v487
      %v489 = vsub.f32 2.0, %v488
      %v490 = vmul.f32 %v487, %v489
      %v491 = vmul.f32 %v483, %v490
      %492 = vrot.lane.b32.xlu0 %v270, 64
      %v493 = vpop.permute.xlu0 %492
      %494 = vrot.lane.b32.xlu0 %v271, 64
      %v495 = vpop.permute.xlu0 %494
      %498 = vrot.lane.b32.xlu0 %v277, 64
      %v499 = vpop.permute.xlu0 %498
      %v502 = vsel %vm255, %v491, 0
      %504 = vmatprep.subr.mxu0 0.0
      %505 = vmatpush1.msra.mxu0 %v493
      %506 = vmatprep.subr.mxu0 0.0
      %507 = vmatpush1.msra.mxu0 %v495
      %508 = vmatprep.subr.mxu0 0.0
      %509 = vmatpush1.msra.mxu0 0.0
      %510 = vmatprep.subr.mxu0 0.0
      %511 = vmatpush1.msra.mxu0 0.0
      %512 = vmatprep.subr.mxu0 0.0
      %513 = vmatpush1.msra.mxu0 0.0
      %514 = vmatprep.subr.mxu0 0.0
      %515 = vmatpush1.msra.mxu0 0.0
      %516 = vmatprep.subr.mxu0 0.0
      %517 = vmatpush1.msra.mxu0 0.0
      %518 = vmatprep.subr.mxu0 0.0
      %519 = vmatpush1.msra.mxu0 0.0
      %520 = vmatprep.subr.mxu0 0.0
      %521 = vmatpush1.msra.mxu0 0.0
      %522 = vmatprep.subr.mxu0 0.0
      %523 = vmatpush1.msra.mxu0 0.0
      %524 = vmatprep.subr.mxu0 0.0
      %525 = vmatpush1.msra.mxu0 0.0
      %526 = vmatprep.subr.mxu0 0.0
      %527 = vmatpush1.msra.mxu0 0.0
      %528 = vmatprep.subr.mxu0 0.0
      %529 = vmatpush1.msra.mxu0 0.0
      %530 = vmatprep.subr.mxu0 0.0
      %531 = vmatpush1.msra.mxu0 0.0
      %532 = vmatprep.subr.mxu0 0.0
      %533 = vmatpush1.msra.mxu0 0.0
      %534 = vmatprep.subr.mxu0 0.0
      %535 = vmatpush1.msra.mxu0 0.0
      %536 = vmatprep.subr.mxu0 0.0
      %537 = vmatpush1.msra.mxu0 0.0
      %538 = vmatprep.subr.mxu0 0.0
      %539 = vmatpush1.msra.mxu0 0.0
      %540 = vmatprep.subr.mxu0 0.0
      %541 = vmatpush1.msra.mxu0 0.0
      %542 = vmatprep.subr.mxu0 0.0
      %543 = vmatpush1.msra.mxu0 0.0
      %544 = vmatprep.subr.mxu0 0.0
      %545 = vmatpush1.msra.mxu0 0.0
      %546 = vmatprep.subr.mxu0 0.0
      %547 = vmatpush1.msra.mxu0 0.0
      %548 = vmatprep.subr.mxu0 0.0
      %549 = vmatpush1.msra.mxu0 0.0
      %550 = vmatprep.subr.mxu0 0.0
      %551 = vmatpush1.msra.mxu0 0.0
      %552 = vmatprep.subr.mxu0 0.0
      %553 = vmatpush1.msra.mxu0 0.0
      %554 = vmatprep.subr.mxu0 0.0
      %555 = vmatpush1.msra.mxu0 0.0
      %556 = vmatprep.subr.mxu0 0.0
      %557 = vmatpush1.msra.mxu0 0.0
      %558 = vmatprep.subr.mxu0 0.0
      %559 = vmatpush1.msra.mxu0 0.0
      %560 = vmatprep.subr.mxu0 0.0
      %561 = vmatpush1.msra.mxu0 0.0
      %562 = vmatprep.subr.mxu0 0.0
      %563 = vmatpush1.msra.mxu0 0.0
      %564 = vmatprep.subr.mxu0 0.0
      %565 = vmatpush1.msra.mxu0 0.0
      %566 = vmatprep.subr.mxu0 0.0
      %567 = vmatpush1.msra.mxu0 0.0
      %568 = vmatprep.mubr.f32.mxu0 0.0
      %569 = vmatmul.mubr.f32.gmra.mrb[0].mxu0 %v502
      %v570 = vpop.f32.mrb[0].mxu0
      %v571 = vadd.f32 %v499, %v570
      %v572 = vpop.f32.mrb[0].mxu0
      %573 = vdwg.mxu0
      %v574 = vld [vmem:[%s2 + $0x3] sm:$0x1]
      %575 = vset.pattern.permute.xlu0 3
      %576 = vperm.xlu0 %575, %v239
      %v577 = vpop.permute.xlu0 %576
      %v579 = vlaneseq
      %v580 = vshrl.u32 %v579, 7
      %v581 = vsub.s32 0, %v580
      %v582 = vrot.slane %v574, %v581
      %v583 = vadd.f32 %v577, %v582
      %vm584 = vcmp.gt.f32.partialorder %v583, 0.0
      %v585 = vmul.f32 %v583, 0.2
      %v586 = vsel %vm584, %v583, %v585
      %v587 = vsel %vm238, %v586, -1e+09
      %v588 = vsel %vm255, %v587, -inf
      %589 = vmax.xlane.f32.xlu0 %v588
      %v590 = vpop.xlane.xlu0 %589
      %v591 = vsub.f32 %v587, %v590
      %v592 = vmul.f32 %v591, 1.442695
      %v593 = vpow.pop %v592
      %v594 = vsel %vm255, %v593, 0.0
      %595 = vadd.xlane.f32.xlu0 %v594
      %v596 = vpop.xlane.xlu0 %595
      %v597 = vrcp.pop %v596
      %v598 = vmul.f32 %v596, %v597
      %v599 = vsub.f32 2.0, %v598
      %v600 = vmul.f32 %v597, %v599
      %v601 = vmul.f32 %v593, %v600
      %602 = vrot.lane.b32.xlu0 %v270, 32
      %v603 = vpop.permute.xlu0 %602
      %604 = vrot.lane.b32.xlu0 %v271, 32
      %v605 = vpop.permute.xlu0 %604
      %608 = vrot.lane.b32.xlu0 %v277, 32
      %v609 = vpop.permute.xlu0 %608
      %v612 = vsel %vm255, %v601, 0
      %614 = vmatprep.subr.mxu0 0.0
      %615 = vmatpush1.msra.mxu0 %v603
      %616 = vmatprep.subr.mxu0 0.0
      %617 = vmatpush1.msra.mxu0 %v605
      %618 = vmatprep.subr.mxu0 0.0
      %619 = vmatpush1.msra.mxu0 0.0
      %620 = vmatprep.subr.mxu0 0.0
      %621 = vmatpush1.msra.mxu0 0.0
      %622 = vmatprep.subr.mxu0 0.0
      %623 = vmatpush1.msra.mxu0 0.0
      %624 = vmatprep.subr.mxu0 0.0
      %625 = vmatpush1.msra.mxu0 0.0
      %626 = vmatprep.subr.mxu0 0.0
      %627 = vmatpush1.msra.mxu0 0.0
      %628 = vmatprep.subr.mxu0 0.0
      %629 = vmatpush1.msra.mxu0 0.0
      %630 = vmatprep.subr.mxu0 0.0
      %631 = vmatpush1.msra.mxu0 0.0
      %632 = vmatprep.subr.mxu0 0.0
      %633 = vmatpush1.msra.mxu0 0.0
      %634 = vmatprep.subr.mxu0 0.0
      %635 = vmatpush1.msra.mxu0 0.0
      %636 = vmatprep.subr.mxu0 0.0
      %637 = vmatpush1.msra.mxu0 0.0
      %638 = vmatprep.subr.mxu0 0.0
      %639 = vmatpush1.msra.mxu0 0.0
      %640 = vmatprep.subr.mxu0 0.0
      %641 = vmatpush1.msra.mxu0 0.0
      %642 = vmatprep.subr.mxu0 0.0
      %643 = vmatpush1.msra.mxu0 0.0
      %644 = vmatprep.subr.mxu0 0.0
      %645 = vmatpush1.msra.mxu0 0.0
      %646 = vmatprep.subr.mxu0 0.0
      %647 = vmatpush1.msra.mxu0 0.0
      %648 = vmatprep.subr.mxu0 0.0
      %649 = vmatpush1.msra.mxu0 0.0
      %650 = vmatprep.subr.mxu0 0.0
      %651 = vmatpush1.msra.mxu0 0.0
      %652 = vmatprep.subr.mxu0 0.0
      %653 = vmatpush1.msra.mxu0 0.0
      %654 = vmatprep.subr.mxu0 0.0
      %655 = vmatpush1.msra.mxu0 0.0
      %656 = vmatprep.subr.mxu0 0.0
      %657 = vmatpush1.msra.mxu0 0.0
      %658 = vmatprep.subr.mxu0 0.0
      %659 = vmatpush1.msra.mxu0 0.0
      %660 = vmatprep.subr.mxu0 0.0
      %661 = vmatpush1.msra.mxu0 0.0
      %662 = vmatprep.subr.mxu0 0.0
      %663 = vmatpush1.msra.mxu0 0.0
      %664 = vmatprep.subr.mxu0 0.0
      %665 = vmatpush1.msra.mxu0 0.0
      %666 = vmatprep.subr.mxu0 0.0
      %667 = vmatpush1.msra.mxu0 0.0
      %668 = vmatprep.subr.mxu0 0.0
      %669 = vmatpush1.msra.mxu0 0.0
      %670 = vmatprep.subr.mxu0 0.0
      %671 = vmatpush1.msra.mxu0 0.0
      %672 = vmatprep.subr.mxu0 0.0
      %673 = vmatpush1.msra.mxu0 0.0
      %674 = vmatprep.subr.mxu0 0.0
      %675 = vmatpush1.msra.mxu0 0.0
      %676 = vmatprep.subr.mxu0 0.0
      %677 = vmatpush1.msra.mxu0 0.0
      %678 = vmatprep.mubr.f32.mxu0 0.0
      %679 = vmatmul.mubr.f32.gmra.mrb[0].mxu0 %v612
      %v680 = vpop.f32.mrb[0].mxu0
      %v681 = vadd.f32 %v609, %v680
      %v682 = vpop.f32.mrb[0].mxu0
      %683 = vdwg.mxu0
      %685 = vrot.lane.b32.xlu0 %v461, 32
      %v686 = vpop.permute.xlu0 %685
      %689 = vrot.lane.b32.xlu0 %v571, 64
      %v690 = vpop.permute.xlu0 %689
      %693 = vrot.lane.b32.xlu0 %v681, 96
      %v694 = vpop.permute.xlu0 %693
      %vm696 = vcmask 261120
      %v697 = vsel %vm696, %v349, %v686
      %vm698 = vcmask 523264
      %v699 = vsel %vm698, %v697, %v690
      %vm700 = vcmask 785408
      %v701 = vsel %vm700, %v699, %v694
      %v702 = vmax.f32 %v701, 0.0
      %703 = vst [vmem:[%s236] sm:$0xff] %v702
      %p704 = scmp.lt.s32.totalorder %s16, 1
      %s705 = scalar_select %p704, %s16, 1
      %s706 = smul.addr %s705, 8
      %s707 = scalar_lea.vmem %s5, %s706
      // Predicated region
      $region41: #{_lambda_.5} parent=39 // pred_check
        %p708 = pneg %p149
      $region42: #{_lambda_.5} parent=39 // pred_check_branch
        %710 = sbr.rel (%p708) target = $region44
      $region43: #{_lambda_.5} parent=39 // pred_region
        _
      $region44: #{_lambda_.5} parent=39 // pred_fallthru
        _
    $region40: #{_lambda_.5} parent=5 // pred_fallthru
      _
    %p711 = scmp.le.s32.totalorder 2, %s11
    // Predicated region
    $region45: #{_lambda_.5} parent=5 // pred_check
      %p712 = pneg %p711
    $region46: #{_lambda_.5} parent=5 // pred_check_branch
      %714 = sbr.rel (%p712) target = $region48
    $region47: #{_lambda_.5} parent=5 // pred_region
      %s715 = ssub.s32 %s11, 2
      // Predicated region
      $region49: #{_lambda_.5} parent=47 // pred_check
        %p716 = pneg %p155
      $region50: #{_lambda_.5} parent=47 // pred_check_branch
        %718 = sbr.rel (%p716) target = $region52
      $region51: #{_lambda_.5} parent=47 // pred_region
        %p719 = scmp.lt.s32.totalorder %s17, 1
        %s720 = scalar_select %p719, %s17, 1
        %s721 = smul.addr %s720, 8
        %s722 = scalar_lea.vmem %s5, %s721
      $region52: #{_lambda_.5} parent=47 // pred_fallthru
        _
    $region48: #{_lambda_.5} parent=5 // pred_fallthru
      _
  $region6: #{_lambda_.5} parent=0 // loop_footer
    %s15 = sadd.s32 1, %s11
  $region7: #{_lambda_.5} parent=0 // loop_footer_branch
    %10 = sbr.rel target = $region3
  $region8: #{_lambda_.5} parent=0 // loop_exit
    _

// kernel: _lambda_.6
$region0: #{_lambda_.6}
  #allocation0 [shape = 'u32[]', space=smem, size = 0x4, offset = 0x4, fixed_abs, tag = 'smem constant byte address 0x4 - core index']
  #allocation1 [shape = 'u32[144,128]{1,0:T(1,128)}', space=vmem, size = 0x12000, scoped, tag = 'internal scratch']
  %s0 = inlined_call_operand.vmem [shape: f32[16,128], index: 0, kind: input, shape index: {}]
  %s1 = inlined_call_operand.vmem [shape: f32[128,128], index: 1, kind: input, shape index: {}]
  %s2 = inlined_call_operand.vmem [shape: f32[128,8], index: 2, kind: input, shape index: {}]
  %s3 = inlined_call_operand.vmem [shape: f32[16,128], index: 3, kind: output, shape index: {0}]
  %s4 = inlined_call_operand.vmem [shape: f32[16,8], index: 4, kind: output, shape index: {1}]
  %5 = xla_tuple %s3, %s4
  %s6 = sld [smem:[#allocation0]]
  $region53: #{_lambda_.6} parent=0
    _
  %s8 = ssub.s32 1, %s6
  %s9 = scalar_select 0, %s8, %s6
  loop: start=0, step=1, limit=4
  $region2: #{_lambda_.6} parent=0 // loop_pre_header
    _
  $region3: #{_lambda_.6} parent=0 // loop_header
    %s11 = sphi 0, %s15
    %p12 = scmp.ge.s32.totalorder %s11, 4
    %s21 = sphi 0, %s23
    %s24 = sphi 0, %s21
    %s25 = sphi 0, %s24
    %s41 = sphi 0, %s25
    %s45 = sphi 0, %s45
    %s47 = sphi 0, %s45
    %s48 = sphi 0, %s47
    %s62 = sphi 0, %s48
    %s66 = sphi 0, %s66
    %s68 = sphi 0, %s66
    %s69 = sphi 0, %s68
    %s83 = sphi 0, %s69
    %s89 = sphi 0, %s91
    %s92 = sphi 0, %s89
    %s93 = sphi 0, %s92
    %s109 = sphi 0, %s93
    %s115 = sphi 0, %s117
    %s118 = sphi 0, %s115
    %s119 = sphi 0, %s118
    %s135 = sphi 0, %s119
  $region4: #{_lambda_.6} parent=0 // loop_header_branch
    %14 = sbr.rel (%p12) target = $region8
  $region5: #{_lambda_.6} parent=0 // loop_body
    %s16 = ssub.s32 %s11, 1
    %s17 = ssub.s32 %s11, 2
    %s18 = sadd.s32 %s11, 1
    %s19 = ssub.s32 %s11, %s18
    %p20 = scmp.eq.s32.totalorder %s19, 0
    %s22 = sadd.s32 %s21, 1
    %s23 = scalar_select %p20, %s21, %s22
    %p26 = pneg %p20
    %p27 = scmp.eq.s32.totalorder %s11, 1
    %p28 = por %p26, %p27
    %p29 = scmp.ne.s32.totalorder %s21, %s24
    %p30 = scmp.eq.s32.totalorder %s11, 0
    %p31 = por %p29, %p30
    %p32 = scmp.ne.s32.totalorder %s21, %s24
    %p33 = scmp.eq.s32.totalorder %s16, 1
    %p34 = por %p32, %p33
    %p35 = scmp.ne.s32.totalorder %s24, %s25
    %p36 = scmp.eq.s32.totalorder %s16, 0
    %p37 = por %p35, %p36
    %p38 = scmp.ne.s32.totalorder %s24, %s25
    %p39 = scmp.eq.s32.totalorder %s17, 1
    %p40 = por %p38, %p39
    %p42 = scmp.ne.s32.totalorder %s25, %s41
    %p43 = scmp.eq.s32.totalorder %s17, 0
    %p44 = por %p42, %p43
    %s46 = sadd.s32 %s45, 1
    %p49 = scmp.eq.s32.totalorder %s11, 1
    %p50 = scmp.ne.s32.totalorder %s45, %s47
    %p51 = scmp.eq.s32.totalorder %s11, 0
    %p52 = por %p50, %p51
    %p53 = scmp.ne.s32.totalorder %s45, %s47
    %p54 = scmp.eq.s32.totalorder %s16, 1
    %p55 = por %p53, %p54
    %p56 = scmp.ne.s32.totalorder %s47, %s48
    %p57 = scmp.eq.s32.totalorder %s16, 0
    %p58 = por %p56, %p57
    %p59 = scmp.ne.s32.totalorder %s47, %s48
    %p60 = scmp.eq.s32.totalorder %s17, 1
    %p61 = por %p59, %p60
    %p63 = scmp.ne.s32.totalorder %s48, %s62
    %p64 = scmp.eq.s32.totalorder %s17, 0
    %p65 = por %p63, %p64
    %s67 = sadd.s32 %s66, 1
    %p70 = scmp.eq.s32.totalorder %s11, 1
    %p71 = scmp.ne.s32.totalorder %s66, %s68
    %p72 = scmp.eq.s32.totalorder %s11, 0
    %p73 = por %p71, %p72
    %p74 = scmp.ne.s32.totalorder %s66, %s68
    %p75 = scmp.eq.s32.totalorder %s16, 1
    %p76 = por %p74, %p75
    %p77 = scmp.ne.s32.totalorder %s68, %s69
    %p78 = scmp.eq.s32.totalorder %s16, 0
    %p79 = por %p77, %p78
    %p80 = scmp.ne.s32.totalorder %s68, %s69
    %p81 = scmp.eq.s32.totalorder %s17, 1
    %p82 = por %p80, %p81
    %p84 = scmp.ne.s32.totalorder %s69, %s83
    %p85 = scmp.eq.s32.totalorder %s17, 0
    %p86 = por %p84, %p85
    %s87 = ssub.s32 %s11, %s18
    %p88 = scmp.eq.s32.totalorder %s87, 0
    %s90 = sadd.s32 %s89, 1
    %s91 = scalar_select %p88, %s89, %s90
    %p94 = pneg %p88
    %p95 = scmp.eq.s32.totalorder %s11, 1
    %p96 = por %p94, %p95
    %p97 = scmp.ne.s32.totalorder %s89, %s92
    %p98 = scmp.eq.s32.totalorder %s11, 0
    %p99 = por %p97, %p98
    %p100 = scmp.ne.s32.totalorder %s89, %s92
    %p101 = scmp.eq.s32.totalorder %s16, 1
    %p102 = por %p100, %p101
    %p103 = scmp.ne.s32.totalorder %s92, %s93
    %p104 = scmp.eq.s32.totalorder %s16, 0
    %p105 = por %p103, %p104
    %p106 = scmp.ne.s32.totalorder %s92, %s93
    %p107 = scmp.eq.s32.totalorder %s17, 1
    %p108 = por %p106, %p107
    %p110 = scmp.ne.s32.totalorder %s93, %s109
    %p111 = scmp.eq.s32.totalorder %s17, 0
    %p112 = por %p110, %p111
    %s113 = ssub.s32 %s11, %s18
    %p114 = scmp.eq.s32.totalorder %s113, 0
    %s116 = sadd.s32 %s115, 1
    %s117 = scalar_select %p114, %s115, %s116
    %p120 = pneg %p114
    %p121 = scmp.eq.s32.totalorder %s11, 1
    %p122 = por %p120, %p121
    %p123 = scmp.ne.s32.totalorder %s115, %s118
    %p124 = scmp.eq.s32.totalorder %s11, 0
    %p125 = por %p123, %p124
    %p126 = scmp.ne.s32.totalorder %s115, %s118
    %p127 = scmp.eq.s32.totalorder %s16, 1
    %p128 = por %p126, %p127
    %p129 = scmp.ne.s32.totalorder %s118, %s119
    %p130 = scmp.eq.s32.totalorder %s16, 0
    %p131 = por %p129, %p130
    %p132 = scmp.ne.s32.totalorder %s118, %s119
    %p133 = scmp.eq.s32.totalorder %s17, 1
    %p134 = por %p132, %p133
    %p136 = scmp.ne.s32.totalorder %s119, %s135
    %p137 = scmp.eq.s32.totalorder %s17, 0
    %p138 = por %p136, %p137
    %p139 = scmp.le.s32.totalorder 1, %s11
    %p140 = scmp.lt.s32.totalorder %s11, 3
    %p141 = pnand %p139, %p140
    %p142 = pneg %p141
    // Predicated region
    $region9: #{_lambda_.6} parent=5 // pred_check
      _
    $region10: #{_lambda_.6} parent=5 // pred_check_branch
      %144 = sbr.rel (%p141) target = $region12
    $region11: #{_lambda_.6} parent=5 // pred_region
      %s145 = ssub.s32 %s11, 1
      // Predicated region
      $region13: #{_lambda_.6} parent=11 // pred_check
        %p146 = pneg %p58
      $region14: #{_lambda_.6} parent=11 // pred_check_branch
        %148 = sbr.rel (%p146) target = $region16
      $region15: #{_lambda_.6} parent=11 // pred_region
        _
      $region16: #{_lambda_.6} parent=11 // pred_fallthru
        _
      // Predicated region
      $region17: #{_lambda_.6} parent=11 // pred_check
        %p149 = pneg %p79
      $region18: #{_lambda_.6} parent=11 // pred_check_branch
        %151 = sbr.rel (%p149) target = $region20
      $region19: #{_lambda_.6} parent=11 // pred_region
        _
      $region20: #{_lambda_.6} parent=11 // pred_fallthru
        _
    $region12: #{_lambda_.6} parent=5 // pred_fallthru
      _
    %p152 = scmp.lt.s32.totalorder %s11, 2
    // Predicated region
    $region21: #{_lambda_.6} parent=5 // pred_check
      %p153 = pneg %p152
    $region22: #{_lambda_.6} parent=5 // pred_check_branch
      %155 = sbr.rel (%p153) target = $region24
    $region23: #{_lambda_.6} parent=5 // pred_region
      // Predicated region
      $region25: #{_lambda_.6} parent=23 // pred_check
        %p156 = pneg %p31
      $region26: #{_lambda_.6} parent=23 // pred_check_branch
        %158 = sbr.rel (%p156) target = $region28
      $region27: #{_lambda_.6} parent=23 // pred_region
        %p159 = scmp.lt.s32.totalorder %s11, 1
        %s160 = scalar_select %p159, %s11, 1
        %s161 = smul.addr %s160, 8
        %s162 = scalar_lea.vmem %s0, %s161
      $region28: #{_lambda_.6} parent=23 // pred_fallthru
        _
    $region24: #{_lambda_.6} parent=5 // pred_fallthru
      _
    %p163 = scmp.le.s32.totalorder 1, %s11
    %p164 = scmp.lt.s32.totalorder %s11, 3
    %p165 = pnand %p163, %p164
    %p166 = pneg %p165
    // Predicated region
    $region29: #{_lambda_.6} parent=5 // pred_check
      _
    $region30: #{_lambda_.6} parent=5 // pred_check_branch
      %168 = sbr.rel (%p165) target = $region32
    $region31: #{_lambda_.6} parent=5 // pred_region
      %s169 = ssub.s32 %s11, 1
      %p170 = scmp.lt.s32.totalorder %s16, 1
      %s171 = scalar_select %p170, %s16, 1
      %s172 = smul.addr %s171, 8
      %s173 = scalar_lea.vmem %s0, %s172
      %p174 = pneg %p37
      %p175 = pneg %p34
      %p176 = pneg %p58
      %p177 = pneg %p55
      %p178 = pneg %p79
      %p179 = pneg %p76
      %p180 = pneg %p105
      %p181 = pneg %p102
      %p182 = scmp.lt.s32.totalorder %s16, 1
      %s183 = scalar_select %p182, %s16, 1
      %s184 = smul.addr %s183, 8
      %s185 = scalar_lea.vmem %s3, %s184
      %p186 = pneg %p131
      %p187 = pneg %p128
      %p188 = scmp.lt.s32.totalorder %s16, 1
      %s189 = scalar_select %p188, %s16, 1
      %s190 = smul.addr %s189, 8
      %s191 = scalar_lea.vmem %s4, %s190
      %p192 = scmp.lt.s32.totalorder %s16, 1
      %s193 = scalar_select %p192, %s16, 1
      %s194 = smul.addr %s193, 8
      %s195 = scalar_lea.vmem %s0, %s194
      %p196 = scmp.lt.s32.totalorder %s16, 1
      %s197 = scalar_select %p196, %s16, 1
      %s198 = smul.addr %s197, 8
      %s199 = scalar_lea.vmem %s3, %s198
      %p200 = scmp.lt.s32.totalorder %s16, 1
      %s201 = scalar_select %p200, %s16, 1
      %s202 = smul.addr %s201, 8
      %s203 = scalar_lea.vmem %s4, %s202
      %v204 = vld [vmem:[%s195] sm:$0xff]
      %v205 = vld [vmem:[%s1] sm:$0xff]
      %v206 = vld [vmem:[%s1 + $0x8] sm:$0xff]
      %v207 = vld [vmem:[%s1 + $0x10] sm:$0xff]
      %v208 = vld [vmem:[%s1 + $0x18] sm:$0xff]
      %v209 = vld [vmem:[%s1 + $0x20] sm:$0xff]
      %v210 = vld [vmem:[%s1 + $0x28] sm:$0xff]
      %v211 = vld [vmem:[%s1 + $0x30] sm:$0xff]
      %v212 = vld [vmem:[%s1 + $0x38] sm:$0xff]
      %v213 = vld [vmem:[%s1 + $0x40] sm:$0xff]
      %v214 = vld [vmem:[%s1 + $0x48] sm:$0xff]
      %v215 = vld [vmem:[%s1 + $0x50] sm:$0xff]
      %v216 = vld [vmem:[%s1 + $0x58] sm:$0xff]
      %v217 = vld [vmem:[%s1 + $0x60] sm:$0xff]
      %v218 = vld [vmem:[%s1 + $0x68] sm:$0xff]
      %v219 = vld [vmem:[%s1 + $0x70] sm:$0xff]
      %v220 = vld [vmem:[%s1 + $0x78] sm:$0xff]
      %221 = vmatprep.subr.mxu0 0.0
      %222 = vmatpush1.msra.mxu0 %v205
      %223 = vmatprep.subr.mxu0 0.0
      %224 = vmatpush1.msra.mxu0 %v206
      %225 = vmatprep.subr.mxu0 0.0
      %226 = vmatpush1.msra.mxu0 %v207
      %227 = vmatprep.subr.mxu0 0.0
      %228 = vmatpush1.msra.mxu0 %v208
      %229 = vmatprep.subr.mxu0 0.0
      %230 = vmatpush1.msra.mxu0 %v209
      %231 = vmatprep.subr.mxu0 0.0
      %232 = vmatpush1.msra.mxu0 %v210
      %233 = vmatprep.subr.mxu0 0.0
      %234 = vmatpush1.msra.mxu0 %v211
      %235 = vmatprep.subr.mxu0 0.0
      %236 = vmatpush1.msra.mxu0 %v212
      %237 = vmatprep.subr.mxu0 0.0
      %238 = vmatpush1.msra.mxu0 %v213
      %239 = vmatprep.subr.mxu0 0.0
      %240 = vmatpush1.msra.mxu0 %v214
      %241 = vmatprep.subr.mxu0 0.0
      %242 = vmatpush1.msra.mxu0 %v215
      %243 = vmatprep.subr.mxu0 0.0
      %244 = vmatpush1.msra.mxu0 %v216
      %245 = vmatprep.subr.mxu0 0.0
      %246 = vmatpush1.msra.mxu0 %v217
      %247 = vmatprep.subr.mxu0 0.0
      %248 = vmatpush1.msra.mxu0 %v218
      %249 = vmatprep.subr.mxu0 0.0
      %250 = vmatpush1.msra.mxu0 %v219
      %251 = vmatprep.subr.mxu0 0.0
      %252 = vmatpush1.msra.mxu0 %v220
      %253 = vmatprep.subr.mxu0 0.0
      %254 = vmatpush1.msra.mxu0 0.0
      %255 = vmatprep.subr.mxu0 0.0
      %256 = vmatpush1.msra.mxu0 0.0
      %257 = vmatprep.subr.mxu0 0.0
      %258 = vmatpush1.msra.mxu0 0.0
      %259 = vmatprep.subr.mxu0 0.0
      %260 = vmatpush1.msra.mxu0 0.0
      %261 = vmatprep.subr.mxu0 0.0
      %262 = vmatpush1.msra.mxu0 0.0
      %263 = vmatprep.subr.mxu0 0.0
      %264 = vmatpush1.msra.mxu0 0.0
      %265 = vmatprep.subr.mxu0 0.0
      %266 = vmatpush1.msra.mxu0 0.0
      %267 = vmatprep.subr.mxu0 0.0
      %268 = vmatpush1.msra.mxu0 0.0
      %269 = vmatprep.subr.mxu0 0.0
      %270 = vmatpush1.msra.mxu0 0.0
      %271 = vmatprep.subr.mxu0 0.0
      %272 = vmatpush1.msra.mxu0 0.0
      %273 = vmatprep.subr.mxu0 0.0
      %274 = vmatpush1.msra.mxu0 0.0
      %275 = vmatprep.subr.mxu0 0.0
      %276 = vmatpush1.msra.mxu0 0.0
      %277 = vmatprep.subr.mxu0 0.0
      %278 = vmatpush1.msra.mxu0 0.0
      %279 = vmatprep.subr.mxu0 0.0
      %280 = vmatpush1.msra.mxu0 0.0
      %281 = vmatprep.subr.mxu0 0.0
      %282 = vmatpush1.msra.mxu0 0.0
      %283 = vmatprep.subr.mxu0 0.0
      %284 = vmatpush1.msra.mxu0 0.0
      %285 = vmatprep.mubr.f32.mxu0 0.0
      %286 = vmatmul.mubr.f32.gmra.mrb[0].mxu0 %v204
      %v287 = vpop.f32.mrb[0].mxu0
      %v288 = vadd.f32 0.0, %v287
      %v289 = vpop.f32.mrb[0].mxu0
      %290 = vdwg.mxu0
      %291 = vst [vmem:[%s199] sm:$0xff] %v288
      %v292 = vld [vmem:[%s2] sm:$0xff]
      %v293 = vld [vmem:[%s2 + $0x8] sm:$0xff]
      %v294 = vld [vmem:[%s2 + $0x10] sm:$0xff]
      %v295 = vld [vmem:[%s2 + $0x18] sm:$0xff]
      %v296 = vld [vmem:[%s2 + $0x20] sm:$0xff]
      %v297 = vld [vmem:[%s2 + $0x28] sm:$0xff]
      %v298 = vld [vmem:[%s2 + $0x30] sm:$0xff]
      %v299 = vld [vmem:[%s2 + $0x38] sm:$0xff]
      %v300 = vld [vmem:[%s2 + $0x40] sm:$0xff]
      %v301 = vld [vmem:[%s2 + $0x48] sm:$0xff]
      %v302 = vld [vmem:[%s2 + $0x50] sm:$0xff]
      %v303 = vld [vmem:[%s2 + $0x58] sm:$0xff]
      %v304 = vld [vmem:[%s2 + $0x60] sm:$0xff]
      %v305 = vld [vmem:[%s2 + $0x68] sm:$0xff]
      %v306 = vld [vmem:[%s2 + $0x70] sm:$0xff]
      %v307 = vld [vmem:[%s2 + $0x78] sm:$0xff]
      %308 = vmatprep.subr.mxu0 0.0
      %309 = vmatpush1.msra.mxu0 %v292
      %310 = vmatprep.subr.mxu0 0.0
      %311 = vmatpush1.msra.mxu0 %v293
      %312 = vmatprep.subr.mxu0 0.0
      %313 = vmatpush1.msra.mxu0 %v294
      %314 = vmatprep.subr.mxu0 0.0
      %315 = vmatpush1.msra.mxu0 %v295
      %316 = vmatprep.subr.mxu0 0.0
      %317 = vmatpush1.msra.mxu0 %v296
      %318 = vmatprep.subr.mxu0 0.0
      %319 = vmatpush1.msra.mxu0 %v297
      %320 = vmatprep.subr.mxu0 0.0
      %321 = vmatpush1.msra.mxu0 %v298
      %322 = vmatprep.subr.mxu0 0.0
      %323 = vmatpush1.msra.mxu0 %v299
      %324 = vmatprep.subr.mxu0 0.0
      %325 = vmatpush1.msra.mxu0 %v300
      %326 = vmatprep.subr.mxu0 0.0
      %327 = vmatpush1.msra.mxu0 %v301
      %328 = vmatprep.subr.mxu0 0.0
      %329 = vmatpush1.msra.mxu0 %v302
      %330 = vmatprep.subr.mxu0 0.0
      %331 = vmatpush1.msra.mxu0 %v303
      %332 = vmatprep.subr.mxu0 0.0
      %333 = vmatpush1.msra.mxu0 %v304
      %334 = vmatprep.subr.mxu0 0.0
      %335 = vmatpush1.msra.mxu0 %v305
      %336 = vmatprep.subr.mxu0 0.0
      %337 = vmatpush1.msra.mxu0 %v306
      %338 = vmatprep.subr.mxu0 0.0
      %339 = vmatpush1.msra.mxu0 %v307
      %340 = vmatprep.subr.mxu0 0.0
      %341 = vmatpush1.msra.mxu0 0.0
      %342 = vmatprep.subr.mxu0 0.0
      %343 = vmatpush1.msra.mxu0 0.0
      %344 = vmatprep.subr.mxu0 0.0
      %345 = vmatpush1.msra.mxu0 0.0
      %346 = vmatprep.subr.mxu0 0.0
      %347 = vmatpush1.msra.mxu0 0.0
      %348 = vmatprep.subr.mxu0 0.0
      %349 = vmatpush1.msra.mxu0 0.0
      %350 = vmatprep.subr.mxu0 0.0
      %351 = vmatpush1.msra.mxu0 0.0
      %352 = vmatprep.subr.mxu0 0.0
      %353 = vmatpush1.msra.mxu0 0.0
      %354 = vmatprep.subr.mxu0 0.0
      %355 = vmatpush1.msra.mxu0 0.0
      %356 = vmatprep.subr.mxu0 0.0
      %357 = vmatpush1.msra.mxu0 0.0
      %358 = vmatprep.subr.mxu0 0.0
      %359 = vmatpush1.msra.mxu0 0.0
      %360 = vmatprep.subr.mxu0 0.0
      %361 = vmatpush1.msra.mxu0 0.0
      %362 = vmatprep.subr.mxu0 0.0
      %363 = vmatpush1.msra.mxu0 0.0
      %364 = vmatprep.subr.mxu0 0.0
      %365 = vmatpush1.msra.mxu0 0.0
      %366 = vmatprep.subr.mxu0 0.0
      %367 = vmatpush1.msra.mxu0 0.0
      %368 = vmatprep.subr.mxu0 0.0
      %369 = vmatpush1.msra.mxu0 0.0
      %370 = vmatprep.subr.mxu0 0.0
      %371 = vmatpush1.msra.mxu0 0.0
      %372 = vmatprep.mubr.f32.mxu0 0.0
      %373 = vmatmul.mubr.f32.gmra.mrb[0].mxu0 %v288
      %v374 = vpop.f32.mrb[0].mxu0
      %v375 = vadd.f32 0.0, %v374
      %v376 = vpop.f32.mrb[0].mxu0
      %377 = vdwg.mxu0
      %vm378 = vcmask 64512
      %379 = vst.msk [vmem:[%s203] sm:$0xff] %vm378, %v375
      %p380 = scmp.lt.s32.totalorder %s16, 1
      %s381 = scalar_select %p380, %s16, 1
      %s382 = smul.addr %s381, 8
      %s383 = scalar_lea.vmem %s3, %s382
      %p384 = scmp.lt.s32.totalorder %s16, 1
      %s385 = scalar_select %p384, %s16, 1
      %s386 = smul.addr %s385, 8
      %s387 = scalar_lea.vmem %s4, %s386
      // Predicated region
      $region33: #{_lambda_.6} parent=31 // pred_check
        %p388 = pneg %p102
      $region34: #{_lambda_.6} parent=31 // pred_check_branch
        %390 = sbr.rel (%p388) target = $region36
      $region35: #{_lambda_.6} parent=31 // pred_region
        _
      $region36: #{_lambda_.6} parent=31 // pred_fallthru
        _
      // Predicated region
      $region37: #{_lambda_.6} parent=31 // pred_check
        %p391 = pneg %p128
      $region38: #{_lambda_.6} parent=31 // pred_check_branch
        %393 = sbr.rel (%p391) target = $region40
      $region39: #{_lambda_.6} parent=31 // pred_region
        _
      $region40: #{_lambda_.6} parent=31 // pred_fallthru
        _
    $region32: #{_lambda_.6} parent=5 // pred_fallthru
      _
    %p394 = scmp.le.s32.totalorder 2, %s11
    // Predicated region
    $region41: #{_lambda_.6} parent=5 // pred_check
      %p395 = pneg %p394
    $region42: #{_lambda_.6} parent=5 // pred_check_branch
      %397 = sbr.rel (%p395) target = $region44
    $region43: #{_lambda_.6} parent=5 // pred_region
      %s398 = ssub.s32 %s11, 2
      // Predicated region
      $region45: #{_lambda_.6} parent=43 // pred_check
        %p399 = pneg %p108
      $region46: #{_lambda_.6} parent=43 // pred_check_branch
        %401 = sbr.rel (%p399) target = $region48
      $region47: #{_lambda_.6} parent=43 // pred_region
        %p402 = scmp.lt.s32.totalorder %s17, 1
        %s403 = scalar_select %p402, %s17, 1
        %s404 = smul.addr %s403, 8
        %s405 = scalar_lea.vmem %s3, %s404
      $region48: #{_lambda_.6} parent=43 // pred_fallthru
        _
      // Predicated region
      $region49: #{_lambda_.6} parent=43 // pred_check
        %p406 = pneg %p134
      $region50: #{_lambda_.6} parent=43 // pred_check_branch
        %408 = sbr.rel (%p406) target = $region52
      $region51: #{_lambda_.6} parent=43 // pred_region
        %p409 = scmp.lt.s32.totalorder %s17, 1
        %s410 = scalar_select %p409, %s17, 1
        %s411 = smul.addr %s410, 8
        %s412 = scalar_lea.vmem %s4, %s411
      $region52: #{_lambda_.6} parent=43 // pred_fallthru
        _
    $region44: #{_lambda_.6} parent=5 // pred_fallthru
      _
  $region6: #{_lambda_.6} parent=0 // loop_footer
    %s15 = sadd.s32 1, %s11
  $region7: #{_lambda_.6} parent=0 // loop_footer_branch
    %10 = sbr.rel target = $region3
  $region8: #{_lambda_.6} parent=0 // loop_exit
    _

// kernel: _lambda_.7
$region0: #{_lambda_.7}
  #allocation0 [shape = 'u32[]', space=smem, size = 0x4, offset = 0x4, fixed_abs, tag = 'smem constant byte address 0x4 - core index']
  #allocation1 [shape = 'u32[144,128]{1,0:T(1,128)}', space=vmem, size = 0x12000, scoped, tag = 'internal scratch']
  %s0 = inlined_call_operand.vmem [shape: f32[16,16], index: 0, kind: input, shape index: {}]
  %s1 = inlined_call_operand.vmem [shape: f32[16,4], index: 1, kind: input, shape index: {}]
  %s2 = inlined_call_operand.vmem [shape: f32[4,16], index: 2, kind: input, shape index: {}]
  %s3 = inlined_call_operand.vmem [shape: f32[16,128], index: 3, kind: input, shape index: {}]
  %s4 = inlined_call_operand.vmem [shape: f32[1,128], index: 4, kind: input, shape index: {}]
  %s5 = inlined_call_operand.vmem [shape: f32[32,2], index: 5, kind: input, shape index: {}]
  %s6 = inlined_call_operand.vmem [shape: f32[1,2], index: 6, kind: input, shape index: {}]
  %s7 = inlined_call_operand.vmem [shape: f32[16,2], index: 7, kind: output, shape index: {}]
  %s8 = sld [smem:[#allocation0]]
  $region61: #{_lambda_.7} parent=0
    _
  %s10 = ssub.s32 1, %s8
  %s11 = scalar_select 0, %s10, %s8
  loop: start=0, step=1, limit=4
  $region2: #{_lambda_.7} parent=0 // loop_pre_header
    _
  $region3: #{_lambda_.7} parent=0 // loop_header
    %s13 = sphi 0, %s17
    %p14 = scmp.ge.s32.totalorder %s13, 4
    %s23 = sphi 0, %s25
    %s26 = sphi 0, %s23
    %s27 = sphi 0, %s26
    %s43 = sphi 0, %s27
    %s49 = sphi 0, %s51
    %s52 = sphi 0, %s49
    %s53 = sphi 0, %s52
    %s69 = sphi 0, %s53
    %s73 = sphi 0, %s73
    %s75 = sphi 0, %s73
    %s76 = sphi 0, %s75
    %s90 = sphi 0, %s76
    %s94 = sphi 0, %s94
    %s96 = sphi 0, %s94
    %s97 = sphi 0, %s96
    %s111 = sphi 0, %s97
    %s115 = sphi 0, %s115
    %s117 = sphi 0, %s115
    %s118 = sphi 0, %s117
    %s132 = sphi 0, %s118
    %s136 = sphi 0, %s136
    %s138 = sphi 0, %s136
    %s139 = sphi 0, %s138
    %s153 = sphi 0, %s139
    %s157 = sphi 0, %s157
    %s159 = sphi 0, %s157
    %s160 = sphi 0, %s159
    %s174 = sphi 0, %s160
    %s180 = sphi 0, %s182
    %s183 = sphi 0, %s180
    %s184 = sphi 0, %s183
    %s200 = sphi 0, %s184
  $region4: #{_lambda_.7} parent=0 // loop_header_branch
    %16 = sbr.rel (%p14) target = $region8
  $region5: #{_lambda_.7} parent=0 // loop_body
    %s18 = ssub.s32 %s13, 1
    %s19 = ssub.s32 %s13, 2
    %s20 = sadd.s32 %s13, 1
    %s21 = ssub.s32 %s13, %s20
    %p22 = scmp.eq.s32.totalorder %s21, 0
    %s24 = sadd.s32 %s23, 1
    %s25 = scalar_select %p22, %s23, %s24
    %p28 = pneg %p22
    %p29 = scmp.eq.s32.totalorder %s13, 1
    %p30 = por %p28, %p29
    %p31 = scmp.ne.s32.totalorder %s23, %s26
    %p32 = scmp.eq.s32.totalorder %s13, 0
    %p33 = por %p31, %p32
    %p34 = scmp.ne.s32.totalorder %s23, %s26
    %p35 = scmp.eq.s32.totalorder %s18, 1
    %p36 = por %p34, %p35
    %p37 = scmp.ne.s32.totalorder %s26, %s27
    %p38 = scmp.eq.s32.totalorder %s18, 0
    %p39 = por %p37, %p38
    %p40 = scmp.ne.s32.totalorder %s26, %s27
    %p41 = scmp.eq.s32.totalorder %s19, 1
    %p42 = por %p40, %p41
    %p44 = scmp.ne.s32.totalorder %s27, %s43
    %p45 = scmp.eq.s32.totalorder %s19, 0
    %p46 = por %p44, %p45
    %s47 = ssub.s32 %s13, %s20
    %p48 = scmp.eq.s32.totalorder %s47, 0
    %s50 = sadd.s32 %s49, 1
    %s51 = scalar_select %p48, %s49, %s50
    %p54 = pneg %p48
    %p55 = scmp.eq.s32.totalorder %s13, 1
    %p56 = por %p54, %p55
    %p57 = scmp.ne.s32.totalorder %s49, %s52
    %p58 = scmp.eq.s32.totalorder %s13, 0
    %p59 = por %p57, %p58
    %p60 = scmp.ne.s32.totalorder %s49, %s52
    %p61 = scmp.eq.s32.totalorder %s18, 1
    %p62 = por %p60, %p61
    %p63 = scmp.ne.s32.totalorder %s52, %s53
    %p64 = scmp.eq.s32.totalorder %s18, 0
    %p65 = por %p63, %p64
    %p66 = scmp.ne.s32.totalorder %s52, %s53
    %p67 = scmp.eq.s32.totalorder %s19, 1
    %p68 = por %p66, %p67
    %p70 = scmp.ne.s32.totalorder %s53, %s69
    %p71 = scmp.eq.s32.totalorder %s19, 0
    %p72 = por %p70, %p71
    %s74 = sadd.s32 %s73, 1
    %p77 = scmp.eq.s32.totalorder %s13, 1
    %p78 = scmp.ne.s32.totalorder %s73, %s75
    %p79 = scmp.eq.s32.totalorder %s13, 0
    %p80 = por %p78, %p79
    %p81 = scmp.ne.s32.totalorder %s73, %s75
    %p82 = scmp.eq.s32.totalorder %s18, 1
    %p83 = por %p81, %p82
    %p84 = scmp.ne.s32.totalorder %s75, %s76
    %p85 = scmp.eq.s32.totalorder %s18, 0
    %p86 = por %p84, %p85
    %p87 = scmp.ne.s32.totalorder %s75, %s76
    %p88 = scmp.eq.s32.totalorder %s19, 1
    %p89 = por %p87, %p88
    %p91 = scmp.ne.s32.totalorder %s76, %s90
    %p92 = scmp.eq.s32.totalorder %s19, 0
    %p93 = por %p91, %p92
    %s95 = sadd.s32 %s94, 1
    %p98 = scmp.eq.s32.totalorder %s13, 1
    %p99 = scmp.ne.s32.totalorder %s94, %s96
    %p100 = scmp.eq.s32.totalorder %s13, 0
    %p101 = por %p99, %p100
    %p102 = scmp.ne.s32.totalorder %s94, %s96
    %p103 = scmp.eq.s32.totalorder %s18, 1
    %p104 = por %p102, %p103
    %p105 = scmp.ne.s32.totalorder %s96, %s97
    %p106 = scmp.eq.s32.totalorder %s18, 0
    %p107 = por %p105, %p106
    %p108 = scmp.ne.s32.totalorder %s96, %s97
    %p109 = scmp.eq.s32.totalorder %s19, 1
    %p110 = por %p108, %p109
    %p112 = scmp.ne.s32.totalorder %s97, %s111
    %p113 = scmp.eq.s32.totalorder %s19, 0
    %p114 = por %p112, %p113
    %s116 = sadd.s32 %s115, 1
    %p119 = scmp.eq.s32.totalorder %s13, 1
    %p120 = scmp.ne.s32.totalorder %s115, %s117
    %p121 = scmp.eq.s32.totalorder %s13, 0
    %p122 = por %p120, %p121
    %p123 = scmp.ne.s32.totalorder %s115, %s117
    %p124 = scmp.eq.s32.totalorder %s18, 1
    %p125 = por %p123, %p124
    %p126 = scmp.ne.s32.totalorder %s117, %s118
    %p127 = scmp.eq.s32.totalorder %s18, 0
    %p128 = por %p126, %p127
    %p129 = scmp.ne.s32.totalorder %s117, %s118
    %p130 = scmp.eq.s32.totalorder %s19, 1
    %p131 = por %p129, %p130
    %p133 = scmp.ne.s32.totalorder %s118, %s132
    %p134 = scmp.eq.s32.totalorder %s19, 0
    %p135 = por %p133, %p134
    %s137 = sadd.s32 %s136, 1
    %p140 = scmp.eq.s32.totalorder %s13, 1
    %p141 = scmp.ne.s32.totalorder %s136, %s138
    %p142 = scmp.eq.s32.totalorder %s13, 0
    %p143 = por %p141, %p142
    %p144 = scmp.ne.s32.totalorder %s136, %s138
    %p145 = scmp.eq.s32.totalorder %s18, 1
    %p146 = por %p144, %p145
    %p147 = scmp.ne.s32.totalorder %s138, %s139
    %p148 = scmp.eq.s32.totalorder %s18, 0
    %p149 = por %p147, %p148
    %p150 = scmp.ne.s32.totalorder %s138, %s139
    %p151 = scmp.eq.s32.totalorder %s19, 1
    %p152 = por %p150, %p151
    %p154 = scmp.ne.s32.totalorder %s139, %s153
    %p155 = scmp.eq.s32.totalorder %s19, 0
    %p156 = por %p154, %p155
    %s158 = sadd.s32 %s157, 1
    %p161 = scmp.eq.s32.totalorder %s13, 1
    %p162 = scmp.ne.s32.totalorder %s157, %s159
    %p163 = scmp.eq.s32.totalorder %s13, 0
    %p164 = por %p162, %p163
    %p165 = scmp.ne.s32.totalorder %s157, %s159
    %p166 = scmp.eq.s32.totalorder %s18, 1
    %p167 = por %p165, %p166
    %p168 = scmp.ne.s32.totalorder %s159, %s160
    %p169 = scmp.eq.s32.totalorder %s18, 0
    %p170 = por %p168, %p169
    %p171 = scmp.ne.s32.totalorder %s159, %s160
    %p172 = scmp.eq.s32.totalorder %s19, 1
    %p173 = por %p171, %p172
    %p175 = scmp.ne.s32.totalorder %s160, %s174
    %p176 = scmp.eq.s32.totalorder %s19, 0
    %p177 = por %p175, %p176
    %s178 = ssub.s32 %s13, %s20
    %p179 = scmp.eq.s32.totalorder %s178, 0
    %s181 = sadd.s32 %s180, 1
    %s182 = scalar_select %p179, %s180, %s181
    %p185 = pneg %p179
    %p186 = scmp.eq.s32.totalorder %s13, 1
    %p187 = por %p185, %p186
    %p188 = scmp.ne.s32.totalorder %s180, %s183
    %p189 = scmp.eq.s32.totalorder %s13, 0
    %p190 = por %p188, %p189
    %p191 = scmp.ne.s32.totalorder %s180, %s183
    %p192 = scmp.eq.s32.totalorder %s18, 1
    %p193 = por %p191, %p192
    %p194 = scmp.ne.s32.totalorder %s183, %s184
    %p195 = scmp.eq.s32.totalorder %s18, 0
    %p196 = por %p194, %p195
    %p197 = scmp.ne.s32.totalorder %s183, %s184
    %p198 = scmp.eq.s32.totalorder %s19, 1
    %p199 = por %p197, %p198
    %p201 = scmp.ne.s32.totalorder %s184, %s200
    %p202 = scmp.eq.s32.totalorder %s19, 0
    %p203 = por %p201, %p202
    %p204 = scmp.le.s32.totalorder 1, %s13
    %p205 = scmp.lt.s32.totalorder %s13, 3
    %p206 = pnand %p204, %p205
    %p207 = pneg %p206
    // Predicated region
    $region9: #{_lambda_.7} parent=5 // pred_check
      _
    $region10: #{_lambda_.7} parent=5 // pred_check_branch
      %209 = sbr.rel (%p206) target = $region12
    $region11: #{_lambda_.7} parent=5 // pred_region
      %s210 = ssub.s32 %s13, 1
      // Predicated region
      $region13: #{_lambda_.7} parent=11 // pred_check
        %p211 = pneg %p86
      $region14: #{_lambda_.7} parent=11 // pred_check_branch
        %213 = sbr.rel (%p211) target = $region16
      $region15: #{_lambda_.7} parent=11 // pred_region
        _
      $region16: #{_lambda_.7} parent=11 // pred_fallthru
        _
      // Predicated region
      $region17: #{_lambda_.7} parent=11 // pred_check
        %p214 = pneg %p107
      $region18: #{_lambda_.7} parent=11 // pred_check_branch
        %216 = sbr.rel (%p214) target = $region20
      $region19: #{_lambda_.7} parent=11 // pred_region
        _
      $region20: #{_lambda_.7} parent=11 // pred_fallthru
        _
      // Predicated region
      $region21: #{_lambda_.7} parent=11 // pred_check
        %p217 = pneg %p128
      $region22: #{_lambda_.7} parent=11 // pred_check_branch
        %219 = sbr.rel (%p217) target = $region24
      $region23: #{_lambda_.7} parent=11 // pred_region
        _
      $region24: #{_lambda_.7} parent=11 // pred_fallthru
        _
      // Predicated region
      $region25: #{_lambda_.7} parent=11 // pred_check
        %p220 = pneg %p149
      $region26: #{_lambda_.7} parent=11 // pred_check_branch
        %222 = sbr.rel (%p220) target = $region28
      $region27: #{_lambda_.7} parent=11 // pred_region
        _
      $region28: #{_lambda_.7} parent=11 // pred_fallthru
        _
      // Predicated region
      $region29: #{_lambda_.7} parent=11 // pred_check
        %p223 = pneg %p170
      $region30: #{_lambda_.7} parent=11 // pred_check_branch
        %225 = sbr.rel (%p223) target = $region32
      $region31: #{_lambda_.7} parent=11 // pred_region
        _
      $region32: #{_lambda_.7} parent=11 // pred_fallthru
        _
    $region12: #{_lambda_.7} parent=5 // pred_fallthru
      _
    %p226 = scmp.lt.s32.totalorder %s13, 2
    // Predicated region
    $region33: #{_lambda_.7} parent=5 // pred_check
      %p227 = pneg %p226
    $region34: #{_lambda_.7} parent=5 // pred_check_branch
      %229 = sbr.rel (%p227) target = $region36
    $region35: #{_lambda_.7} parent=5 // pred_region
      // Predicated region
      $region37: #{_lambda_.7} parent=35 // pred_check
        %p230 = pneg %p33
      $region38: #{_lambda_.7} parent=35 // pred_check_branch
        %232 = sbr.rel (%p230) target = $region40
      $region39: #{_lambda_.7} parent=35 // pred_region
        %p233 = scmp.lt.s32.totalorder %s13, 1
        %s234 = scalar_select %p233, %s13, 1
        %s235 = smul.addr %s234, 8
        %s236 = scalar_lea.vmem %s0, %s235
      $region40: #{_lambda_.7} parent=35 // pred_fallthru
        _
      // Predicated region
      $region41: #{_lambda_.7} parent=35 // pred_check
        %p237 = pneg %p59
      $region42: #{_lambda_.7} parent=35 // pred_check_branch
        %239 = sbr.rel (%p237) target = $region44
      $region43: #{_lambda_.7} parent=35 // pred_region
        %p240 = scmp.lt.s32.totalorder %s13, 1
        %s241 = scalar_select %p240, %s13, 1
        %s242 = smul.addr %s241, 8
        %s243 = scalar_lea.vmem %s1, %s242
      $region44: #{_lambda_.7} parent=35 // pred_fallthru
        _
    $region36: #{_lambda_.7} parent=5 // pred_fallthru
      _
    %p244 = scmp.le.s32.totalorder 1, %s13
    %p245 = scmp.lt.s32.totalorder %s13, 3
    %p246 = pnand %p244, %p245
    %p247 = pneg %p246
    // Predicated region
    $region45: #{_lambda_.7} parent=5 // pred_check
      _
    $region46: #{_lambda_.7} parent=5 // pred_check_branch
      %249 = sbr.rel (%p246) target = $region48
    $region47: #{_lambda_.7} parent=5 // pred_region
      %s250 = ssub.s32 %s13, 1
      %p251 = scmp.lt.s32.totalorder %s18, 1
      %s252 = scalar_select %p251, %s18, 1
      %s253 = smul.addr %s252, 8
      %s254 = scalar_lea.vmem %s0, %s253
      %p255 = pneg %p39
      %p256 = pneg %p36
      %p257 = scmp.lt.s32.totalorder %s18, 1
      %s258 = scalar_select %p257, %s18, 1
      %s259 = smul.addr %s258, 8
      %s260 = scalar_lea.vmem %s1, %s259
      %p261 = pneg %p65
      %p262 = pneg %p62
      %p263 = pneg %p86
      %p264 = pneg %p83
      %p265 = pneg %p107
      %p266 = pneg %p104
      %p267 = pneg %p128
      %p268 = pneg %p125
      %p269 = pneg %p149
      %p270 = pneg %p146
      %p271 = pneg %p170
      %p272 = pneg %p167
      %p273 = pneg %p196
      %p274 = pneg %p193
      %p275 = scmp.lt.s32.totalorder %s18, 1
      %s276 = scalar_select %p275, %s18, 1
      %s277 = smul.addr %s276, 8
      %s278 = scalar_lea.vmem %s7, %s277
      %p279 = scmp.lt.s32.totalorder %s18, 1
      %s280 = scalar_select %p279, %s18, 1
      %s281 = smul.addr %s280, 8
      %s282 = scalar_lea.vmem %s0, %s281
      %p283 = scmp.lt.s32.totalorder %s18, 1
      %s284 = scalar_select %p283, %s18, 1
      %s285 = smul.addr %s284, 8
      %s286 = scalar_lea.vmem %s1, %s285
      %p287 = scmp.lt.s32.totalorder %s18, 1
      %s288 = scalar_select %p287, %s18, 1
      %s289 = smul.addr %s288, 8
      %s290 = scalar_lea.vmem %s7, %s289
      %v291 = vld [vmem:[%s282] sm:$0xff]
      %vm292 = vcmp.gt.f32.partialorder %v291, 0.0
      %v293 = vld [vmem:[%s286] sm:$0xff]
      %v294 = vld [vmem:[%s2] sm:$0x1]
      %296 = vset.pattern.permute.xlu0 0
      %297 = vperm.xlu0 %296, %v293
      %v298 = vpop.permute.xlu0 %297
      %v300 = vlaneseq
      %v301 = vshrl.u32 %v300, 7
      %v302 = vsub.s32 0, %v301
      %v303 = vrot.slane %v294, %v302
      %v304 = vadd.f32 %v298, %v303
      %vm305 = vcmp.gt.f32.partialorder %v304, 0.0
      %v306 = vmul.f32 %v304, 0.2
      %v307 = vsel %vm305, %v304, %v306
      %v308 = vsel %vm292, %v307, -1e+09
      %vm309 = vcmask 130048
      %v310 = vsel %vm309, %v308, -inf
      %311 = vmax.xlane.f32.xlu0 %v310
      %v312 = vpop.xlane.xlu0 %311
      %v313 = vsub.f32 %v308, %v312
      %v314 = vmul.f32 %v313, 1.442695
      %v315 = vpow.pop %v314
      %v316 = vsel %vm309, %v315, 0.0
      %317 = vadd.xlane.f32.xlu0 %v316
      %v318 = vpop.xlane.xlu0 %317
      %v319 = vrcp.pop %v318
      %v320 = vmul.f32 %v318, %v319
      %v321 = vsub.f32 2.0, %v320
      %v322 = vmul.f32 %v319, %v321
      %v323 = vmul.f32 %v315, %v322
      %v324 = vld [vmem:[%s3] sm:$0xff]
      %v325 = vld [vmem:[%s3 + $0x8] sm:$0xff]
      %v326 = vld [vmem:[%s4] sm:$0x1]
      %v328 = vlaneseq
      %v329 = vshrl.u32 %v328, 7
      %v330 = vsub.s32 0, %v329
      %v331 = vrot.slane %v326, %v330
      %v334 = vsel %vm309, %v323, 0
      %336 = vmatprep.subr.mxu0 0.0
      %337 = vmatpush1.msra.mxu0 %v324
      %338 = vmatprep.subr.mxu0 0.0
      %339 = vmatpush1.msra.mxu0 %v325
      %340 = vmatprep.subr.mxu0 0.0
      %341 = vmatpush1.msra.mxu0 0.0
      %342 = vmatprep.subr.mxu0 0.0
      %343 = vmatpush1.msra.mxu0 0.0
      %344 = vmatprep.subr.mxu0 0.0
      %345 = vmatpush1.msra.mxu0 0.0
      %346 = vmatprep.subr.mxu0 0.0
      %347 = vmatpush1.msra.mxu0 0.0
      %348 = vmatprep.subr.mxu0 0.0
      %349 = vmatpush1.msra.mxu0 0.0
      %350 = vmatprep.subr.mxu0 0.0
      %351 = vmatpush1.msra.mxu0 0.0
      %352 = vmatprep.subr.mxu0 0.0
      %353 = vmatpush1.msra.mxu0 0.0
      %354 = vmatprep.subr.mxu0 0.0
      %355 = vmatpush1.msra.mxu0 0.0
      %356 = vmatprep.subr.mxu0 0.0
      %357 = vmatpush1.msra.mxu0 0.0
      %358 = vmatprep.subr.mxu0 0.0
      %359 = vmatpush1.msra.mxu0 0.0
      %360 = vmatprep.subr.mxu0 0.0
      %361 = vmatpush1.msra.mxu0 0.0
      %362 = vmatprep.subr.mxu0 0.0
      %363 = vmatpush1.msra.mxu0 0.0
      %364 = vmatprep.subr.mxu0 0.0
      %365 = vmatpush1.msra.mxu0 0.0
      %366 = vmatprep.subr.mxu0 0.0
      %367 = vmatpush1.msra.mxu0 0.0
      %368 = vmatprep.subr.mxu0 0.0
      %369 = vmatpush1.msra.mxu0 0.0
      %370 = vmatprep.subr.mxu0 0.0
      %371 = vmatpush1.msra.mxu0 0.0
      %372 = vmatprep.subr.mxu0 0.0
      %373 = vmatpush1.msra.mxu0 0.0
      %374 = vmatprep.subr.mxu0 0.0
      %375 = vmatpush1.msra.mxu0 0.0
      %376 = vmatprep.subr.mxu0 0.0
      %377 = vmatpush1.msra.mxu0 0.0
      %378 = vmatprep.subr.mxu0 0.0
      %379 = vmatpush1.msra.mxu0 0.0
      %380 = vmatprep.subr.mxu0 0.0
      %381 = vmatpush1.msra.mxu0 0.0
      %382 = vmatprep.subr.mxu0 0.0
      %383 = vmatpush1.msra.mxu0 0.0
      %384 = vmatprep.subr.mxu0 0.0
      %385 = vmatpush1.msra.mxu0 0.0
      %386 = vmatprep.subr.mxu0 0.0
      %387 = vmatpush1.msra.mxu0 0.0
      %388 = vmatprep.subr.mxu0 0.0
      %389 = vmatpush1.msra.mxu0 0.0
      %390 = vmatprep.subr.mxu0 0.0
      %391 = vmatpush1.msra.mxu0 0.0
      %392 = vmatprep.subr.mxu0 0.0
      %393 = vmatpush1.msra.mxu0 0.0
      %394 = vmatprep.subr.mxu0 0.0
      %395 = vmatpush1.msra.mxu0 0.0
      %396 = vmatprep.subr.mxu0 0.0
      %397 = vmatpush1.msra.mxu0 0.0
      %398 = vmatprep.subr.mxu0 0.0
      %399 = vmatpush1.msra.mxu0 0.0
      %400 = vmatprep.mubr.f32.mxu0 0.0
      %401 = vmatmul.mubr.f32.gmra.mrb[0].mxu0 %v334
      %v402 = vpop.f32.mrb[0].mxu0
      %v403 = vadd.f32 %v331, %v402
      %v404 = vpop.f32.mrb[0].mxu0
      %405 = vdwg.mxu0
      %v406 = vld [vmem:[%s2 + $0x1] sm:$0x1]
      %407 = vset.pattern.permute.xlu0 1
      %408 = vperm.xlu0 %407, %v293
      %v409 = vpop.permute.xlu0 %408
      %v411 = vlaneseq
      %v412 = vshrl.u32 %v411, 7
      %v413 = vsub.s32 0, %v412
      %v414 = vrot.slane %v406, %v413
      %v415 = vadd.f32 %v409, %v414
      %vm416 = vcmp.gt.f32.partialorder %v415, 0.0
      %v417 = vmul.f32 %v415, 0.2
      %v418 = vsel %vm416, %v415, %v417
      %v419 = vsel %vm292, %v418, -1e+09
      %v420 = vsel %vm309, %v419, -inf
      %421 = vmax.xlane.f32.xlu0 %v420
      %v422 = vpop.xlane.xlu0 %421
      %v423 = vsub.f32 %v419, %v422
      %v424 = vmul.f32 %v423, 1.442695
      %v425 = vpow.pop %v424
      %v426 = vsel %vm309, %v425, 0.0
      %427 = vadd.xlane.f32.xlu0 %v426
      %v428 = vpop.xlane.xlu0 %427
      %v429 = vrcp.pop %v428
      %v430 = vmul.f32 %v428, %v429
      %v431 = vsub.f32 2.0, %v430
      %v432 = vmul.f32 %v429, %v431
      %v433 = vmul.f32 %v425, %v432
      %436 = vrot.lane.b32.xlu0 %v324, 96
      %v437 = vpop.permute.xlu0 %436
      %438 = vrot.lane.b32.xlu0 %v325, 96
      %v439 = vpop.permute.xlu0 %438
      %442 = vrot.lane.b32.xlu0 %v331, 96
      %v443 = vpop.permute.xlu0 %442
      %v446 = vsel %vm309, %v433, 0
      %448 = vmatprep.subr.mxu0 0.0
      %449 = vmatpush1.msra.mxu0 %v437
      %450 = vmatprep.subr.mxu0 0.0
      %451 = vmatpush1.msra.mxu0 %v439
      %452 = vmatprep.subr.mxu0 0.0
      %453 = vmatpush1.msra.mxu0 0.0
      %454 = vmatprep.subr.mxu0 0.0
      %455 = vmatpush1.msra.mxu0 0.0
      %456 = vmatprep.subr.mxu0 0.0
      %457 = vmatpush1.msra.mxu0 0.0
      %458 = vmatprep.subr.mxu0 0.0
      %459 = vmatpush1.msra.mxu0 0.0
      %460 = vmatprep.subr.mxu0 0.0
      %461 = vmatpush1.msra.mxu0 0.0
      %462 = vmatprep.subr.mxu0 0.0
      %463 = vmatpush1.msra.mxu0 0.0
      %464 = vmatprep.subr.mxu0 0.0
      %465 = vmatpush1.msra.mxu0 0.0
      %466 = vmatprep.subr.mxu0 0.0
      %467 = vmatpush1.msra.mxu0 0.0
      %468 = vmatprep.subr.mxu0 0.0
      %469 = vmatpush1.msra.mxu0 0.0
      %470 = vmatprep.subr.mxu0 0.0
      %471 = vmatpush1.msra.mxu0 0.0
      %472 = vmatprep.subr.mxu0 0.0
      %473 = vmatpush1.msra.mxu0 0.0
      %474 = vmatprep.subr.mxu0 0.0
      %475 = vmatpush1.msra.mxu0 0.0
      %476 = vmatprep.subr.mxu0 0.0
      %477 = vmatpush1.msra.mxu0 0.0
      %478 = vmatprep.subr.mxu0 0.0
      %479 = vmatpush1.msra.mxu0 0.0
      %480 = vmatprep.subr.mxu0 0.0
      %481 = vmatpush1.msra.mxu0 0.0
      %482 = vmatprep.subr.mxu0 0.0
      %483 = vmatpush1.msra.mxu0 0.0
      %484 = vmatprep.subr.mxu0 0.0
      %485 = vmatpush1.msra.mxu0 0.0
      %486 = vmatprep.subr.mxu0 0.0
      %487 = vmatpush1.msra.mxu0 0.0
      %488 = vmatprep.subr.mxu0 0.0
      %489 = vmatpush1.msra.mxu0 0.0
      %490 = vmatprep.subr.mxu0 0.0
      %491 = vmatpush1.msra.mxu0 0.0
      %492 = vmatprep.subr.mxu0 0.0
      %493 = vmatpush1.msra.mxu0 0.0
      %494 = vmatprep.subr.mxu0 0.0
      %495 = vmatpush1.msra.mxu0 0.0
      %496 = vmatprep.subr.mxu0 0.0
      %497 = vmatpush1.msra.mxu0 0.0
      %498 = vmatprep.subr.mxu0 0.0
      %499 = vmatpush1.msra.mxu0 0.0
      %500 = vmatprep.subr.mxu0 0.0
      %501 = vmatpush1.msra.mxu0 0.0
      %502 = vmatprep.subr.mxu0 0.0
      %503 = vmatpush1.msra.mxu0 0.0
      %504 = vmatprep.subr.mxu0 0.0
      %505 = vmatpush1.msra.mxu0 0.0
      %506 = vmatprep.subr.mxu0 0.0
      %507 = vmatpush1.msra.mxu0 0.0
      %508 = vmatprep.subr.mxu0 0.0
      %509 = vmatpush1.msra.mxu0 0.0
      %510 = vmatprep.subr.mxu0 0.0
      %511 = vmatpush1.msra.mxu0 0.0
      %512 = vmatprep.mubr.f32.mxu0 0.0
      %513 = vmatmul.mubr.f32.gmra.mrb[0].mxu0 %v446
      %v514 = vpop.f32.mrb[0].mxu0
      %v515 = vadd.f32 %v443, %v514
      %v516 = vpop.f32.mrb[0].mxu0
      %517 = vdwg.mxu0
      %v518 = vld [vmem:[%s2 + $0x2] sm:$0x1]
      %519 = vset.pattern.permute.xlu0 2
      %520 = vperm.xlu0 %519, %v293
      %v521 = vpop.permute.xlu0 %520
      %v523 = vlaneseq
      %v524 = vshrl.u32 %v523, 7
      %v525 = vsub.s32 0, %v524
      %v526 = vrot.slane %v518, %v525
      %v527 = vadd.f32 %v521, %v526
      %vm528 = vcmp.gt.f32.partialorder %v527, 0.0
      %v529 = vmul.f32 %v527, 0.2
      %v530 = vsel %vm528, %v527, %v529
      %v531 = vsel %vm292, %v530, -1e+09
      %v532 = vsel %vm309, %v531, -inf
      %533 = vmax.xlane.f32.xlu0 %v532
      %v534 = vpop.xlane.xlu0 %533
      %v535 = vsub.f32 %v531, %v534
      %v536 = vmul.f32 %v535, 1.442695
      %v537 = vpow.pop %v536
      %v538 = vsel %vm309, %v537, 0.0
      %539 = vadd.xlane.f32.xlu0 %v538
      %v540 = vpop.xlane.xlu0 %539
      %v541 = vrcp.pop %v540
      %v542 = vmul.f32 %v540, %v541
      %v543 = vsub.f32 2.0, %v542
      %v544 = vmul.f32 %v541, %v543
      %v545 = vmul.f32 %v537, %v544
      %546 = vrot.lane.b32.xlu0 %v324, 64
      %v547 = vpop.permute.xlu0 %546
      %548 = vrot.lane.b32.xlu0 %v325, 64
      %v549 = vpop.permute.xlu0 %548
      %552 = vrot.lane.b32.xlu0 %v331, 64
      %v553 = vpop.permute.xlu0 %552
      %v556 = vsel %vm309, %v545, 0
      %558 = vmatprep.subr.mxu0 0.0
      %559 = vmatpush1.msra.mxu0 %v547
      %560 = vmatprep.subr.mxu0 0.0
      %561 = vmatpush1.msra.mxu0 %v549
      %562 = vmatprep.subr.mxu0 0.0
      %563 = vmatpush1.msra.mxu0 0.0
      %564 = vmatprep.subr.mxu0 0.0
      %565 = vmatpush1.msra.mxu0 0.0
      %566 = vmatprep.subr.mxu0 0.0
      %567 = vmatpush1.msra.mxu0 0.0
      %568 = vmatprep.subr.mxu0 0.0
      %569 = vmatpush1.msra.mxu0 0.0
      %570 = vmatprep.subr.mxu0 0.0
      %571 = vmatpush1.msra.mxu0 0.0
      %572 = vmatprep.subr.mxu0 0.0
      %573 = vmatpush1.msra.mxu0 0.0
      %574 = vmatprep.subr.mxu0 0.0
      %575 = vmatpush1.msra.mxu0 0.0
      %576 = vmatprep.subr.mxu0 0.0
      %577 = vmatpush1.msra.mxu0 0.0
      %578 = vmatprep.subr.mxu0 0.0
      %579 = vmatpush1.msra.mxu0 0.0
      %580 = vmatprep.subr.mxu0 0.0
      %581 = vmatpush1.msra.mxu0 0.0
      %582 = vmatprep.subr.mxu0 0.0
      %583 = vmatpush1.msra.mxu0 0.0
      %584 = vmatprep.subr.mxu0 0.0
      %585 = vmatpush1.msra.mxu0 0.0
      %586 = vmatprep.subr.mxu0 0.0
      %587 = vmatpush1.msra.mxu0 0.0
      %588 = vmatprep.subr.mxu0 0.0
      %589 = vmatpush1.msra.mxu0 0.0
      %590 = vmatprep.subr.mxu0 0.0
      %591 = vmatpush1.msra.mxu0 0.0
      %592 = vmatprep.subr.mxu0 0.0
      %593 = vmatpush1.msra.mxu0 0.0
      %594 = vmatprep.subr.mxu0 0.0
      %595 = vmatpush1.msra.mxu0 0.0
      %596 = vmatprep.subr.mxu0 0.0
      %597 = vmatpush1.msra.mxu0 0.0
      %598 = vmatprep.subr.mxu0 0.0
      %599 = vmatpush1.msra.mxu0 0.0
      %600 = vmatprep.subr.mxu0 0.0
      %601 = vmatpush1.msra.mxu0 0.0
      %602 = vmatprep.subr.mxu0 0.0
      %603 = vmatpush1.msra.mxu0 0.0
      %604 = vmatprep.subr.mxu0 0.0
      %605 = vmatpush1.msra.mxu0 0.0
      %606 = vmatprep.subr.mxu0 0.0
      %607 = vmatpush1.msra.mxu0 0.0
      %608 = vmatprep.subr.mxu0 0.0
      %609 = vmatpush1.msra.mxu0 0.0
      %610 = vmatprep.subr.mxu0 0.0
      %611 = vmatpush1.msra.mxu0 0.0
      %612 = vmatprep.subr.mxu0 0.0
      %613 = vmatpush1.msra.mxu0 0.0
      %614 = vmatprep.subr.mxu0 0.0
      %615 = vmatpush1.msra.mxu0 0.0
      %616 = vmatprep.subr.mxu0 0.0
      %617 = vmatpush1.msra.mxu0 0.0
      %618 = vmatprep.subr.mxu0 0.0
      %619 = vmatpush1.msra.mxu0 0.0
      %620 = vmatprep.subr.mxu0 0.0
      %621 = vmatpush1.msra.mxu0 0.0
      %622 = vmatprep.mubr.f32.mxu0 0.0
      %623 = vmatmul.mubr.f32.gmra.mrb[0].mxu0 %v556
      %v624 = vpop.f32.mrb[0].mxu0
      %v625 = vadd.f32 %v553, %v624
      %v626 = vpop.f32.mrb[0].mxu0
      %627 = vdwg.mxu0
      %v628 = vld [vmem:[%s2 + $0x3] sm:$0x1]
      %629 = vset.pattern.permute.xlu0 3
      %630 = vperm.xlu0 %629, %v293
      %v631 = vpop.permute.xlu0 %630
      %v633 = vlaneseq
      %v634 = vshrl.u32 %v633, 7
      %v635 = vsub.s32 0, %v634
      %v636 = vrot.slane %v628, %v635
      %v637 = vadd.f32 %v631, %v636
      %vm638 = vcmp.gt.f32.partialorder %v637, 0.0
      %v639 = vmul.f32 %v637, 0.2
      %v640 = vsel %vm638, %v637, %v639
      %v641 = vsel %vm292, %v640, -1e+09
      %v642 = vsel %vm309, %v641, -inf
      %643 = vmax.xlane.f32.xlu0 %v642
      %v644 = vpop.xlane.xlu0 %643
      %v645 = vsub.f32 %v641, %v644
      %v646 = vmul.f32 %v645, 1.442695
      %v647 = vpow.pop %v646
      %v648 = vsel %vm309, %v647, 0.0
      %649 = vadd.xlane.f32.xlu0 %v648
      %v650 = vpop.xlane.xlu0 %649
      %v651 = vrcp.pop %v650
      %v652 = vmul.f32 %v650, %v651
      %v653 = vsub.f32 2.0, %v652
      %v654 = vmul.f32 %v651, %v653
      %v655 = vmul.f32 %v647, %v654
      %656 = vrot.lane.b32.xlu0 %v324, 32
      %v657 = vpop.permute.xlu0 %656
      %658 = vrot.lane.b32.xlu0 %v325, 32
      %v659 = vpop.permute.xlu0 %658
      %662 = vrot.lane.b32.xlu0 %v331, 32
      %v663 = vpop.permute.xlu0 %662
      %v666 = vsel %vm309, %v655, 0
      %668 = vmatprep.subr.mxu0 0.0
      %669 = vmatpush1.msra.mxu0 %v657
      %670 = vmatprep.subr.mxu0 0.0
      %671 = vmatpush1.msra.mxu0 %v659
      %672 = vmatprep.subr.mxu0 0.0
      %673 = vmatpush1.msra.mxu0 0.0
      %674 = vmatprep.subr.mxu0 0.0
      %675 = vmatpush1.msra.mxu0 0.0
      %676 = vmatprep.subr.mxu0 0.0
      %677 = vmatpush1.msra.mxu0 0.0
      %678 = vmatprep.subr.mxu0 0.0
      %679 = vmatpush1.msra.mxu0 0.0
      %680 = vmatprep.subr.mxu0 0.0
      %681 = vmatpush1.msra.mxu0 0.0
      %682 = vmatprep.subr.mxu0 0.0
      %683 = vmatpush1.msra.mxu0 0.0
      %684 = vmatprep.subr.mxu0 0.0
      %685 = vmatpush1.msra.mxu0 0.0
      %686 = vmatprep.subr.mxu0 0.0
      %687 = vmatpush1.msra.mxu0 0.0
      %688 = vmatprep.subr.mxu0 0.0
      %689 = vmatpush1.msra.mxu0 0.0
      %690 = vmatprep.subr.mxu0 0.0
      %691 = vmatpush1.msra.mxu0 0.0
      %692 = vmatprep.subr.mxu0 0.0
      %693 = vmatpush1.msra.mxu0 0.0
      %694 = vmatprep.subr.mxu0 0.0
      %695 = vmatpush1.msra.mxu0 0.0
      %696 = vmatprep.subr.mxu0 0.0
      %697 = vmatpush1.msra.mxu0 0.0
      %698 = vmatprep.subr.mxu0 0.0
      %699 = vmatpush1.msra.mxu0 0.0
      %700 = vmatprep.subr.mxu0 0.0
      %701 = vmatpush1.msra.mxu0 0.0
      %702 = vmatprep.subr.mxu0 0.0
      %703 = vmatpush1.msra.mxu0 0.0
      %704 = vmatprep.subr.mxu0 0.0
      %705 = vmatpush1.msra.mxu0 0.0
      %706 = vmatprep.subr.mxu0 0.0
      %707 = vmatpush1.msra.mxu0 0.0
      %708 = vmatprep.subr.mxu0 0.0
      %709 = vmatpush1.msra.mxu0 0.0
      %710 = vmatprep.subr.mxu0 0.0
      %711 = vmatpush1.msra.mxu0 0.0
      %712 = vmatprep.subr.mxu0 0.0
      %713 = vmatpush1.msra.mxu0 0.0
      %714 = vmatprep.subr.mxu0 0.0
      %715 = vmatpush1.msra.mxu0 0.0
      %716 = vmatprep.subr.mxu0 0.0
      %717 = vmatpush1.msra.mxu0 0.0
      %718 = vmatprep.subr.mxu0 0.0
      %719 = vmatpush1.msra.mxu0 0.0
      %720 = vmatprep.subr.mxu0 0.0
      %721 = vmatpush1.msra.mxu0 0.0
      %722 = vmatprep.subr.mxu0 0.0
      %723 = vmatpush1.msra.mxu0 0.0
      %724 = vmatprep.subr.mxu0 0.0
      %725 = vmatpush1.msra.mxu0 0.0
      %726 = vmatprep.subr.mxu0 0.0
      %727 = vmatpush1.msra.mxu0 0.0
      %728 = vmatprep.subr.mxu0 0.0
      %729 = vmatpush1.msra.mxu0 0.0
      %730 = vmatprep.subr.mxu0 0.0
      %731 = vmatpush1.msra.mxu0 0.0
      %732 = vmatprep.mubr.f32.mxu0 0.0
      %733 = vmatmul.mubr.f32.gmra.mrb[0].mxu0 %v666
      %v734 = vpop.f32.mrb[0].mxu0
      %v735 = vadd.f32 %v663, %v734
      %v736 = vpop.f32.mrb[0].mxu0
      %737 = vdwg.mxu0
      %v738 = vadd.f32 %v403, %v515
      %v739 = vadd.f32 %v738, %v625
      %v740 = vadd.f32 %v739, %v735
      %v741 = vmul.f32 %v740, 0.25
      %v742 = vmax.f32 %v741, 0.0
      %v743 = vld [vmem:[%s5] sm:$0xff]
      %v744 = vld [vmem:[%s5 + $0x8] sm:$0xff]
      %v745 = vld [vmem:[%s5 + $0x10] sm:$0xff]
      %v746 = vld [vmem:[%s5 + $0x18] sm:$0xff]
      %v747 = vld [vmem:[%s6] sm:$0x1]
      %v749 = vlaneseq
      %v750 = vshrl.u32 %v749, 7
      %v751 = vsub.s32 0, %v750
      %v752 = vrot.slane %v747, %v751
      %vm754 = vcmask 261120
      %v756 = vsel %vm754, %v742, 0
      %758 = vmatprep.subr.mxu0 0.0
      %759 = vmatpush1.msra.mxu0 %v743
      %760 = vmatprep.subr.mxu0 0.0
      %761 = vmatpush1.msra.mxu0 %v744
      %762 = vmatprep.subr.mxu0 0.0
      %763 = vmatpush1.msra.mxu0 %v745
      %764 = vmatprep.subr.mxu0 0.0
      %765 = vmatpush1.msra.mxu0 %v746
      %766 = vmatprep.subr.mxu0 0.0
      %767 = vmatpush1.msra.mxu0 0.0
      %768 = vmatprep.subr.mxu0 0.0
      %769 = vmatpush1.msra.mxu0 0.0
      %770 = vmatprep.subr.mxu0 0.0
      %771 = vmatpush1.msra.mxu0 0.0
      %772 = vmatprep.subr.mxu0 0.0
      %773 = vmatpush1.msra.mxu0 0.0
      %774 = vmatprep.subr.mxu0 0.0
      %775 = vmatpush1.msra.mxu0 0.0
      %776 = vmatprep.subr.mxu0 0.0
      %777 = vmatpush1.msra.mxu0 0.0
      %778 = vmatprep.subr.mxu0 0.0
      %779 = vmatpush1.msra.mxu0 0.0
      %780 = vmatprep.subr.mxu0 0.0
      %781 = vmatpush1.msra.mxu0 0.0
      %782 = vmatprep.subr.mxu0 0.0
      %783 = vmatpush1.msra.mxu0 0.0
      %784 = vmatprep.subr.mxu0 0.0
      %785 = vmatpush1.msra.mxu0 0.0
      %786 = vmatprep.subr.mxu0 0.0
      %787 = vmatpush1.msra.mxu0 0.0
      %788 = vmatprep.subr.mxu0 0.0
      %789 = vmatpush1.msra.mxu0 0.0
      %790 = vmatprep.subr.mxu0 0.0
      %791 = vmatpush1.msra.mxu0 0.0
      %792 = vmatprep.subr.mxu0 0.0
      %793 = vmatpush1.msra.mxu0 0.0
      %794 = vmatprep.subr.mxu0 0.0
      %795 = vmatpush1.msra.mxu0 0.0
      %796 = vmatprep.subr.mxu0 0.0
      %797 = vmatpush1.msra.mxu0 0.0
      %798 = vmatprep.subr.mxu0 0.0
      %799 = vmatpush1.msra.mxu0 0.0
      %800 = vmatprep.subr.mxu0 0.0
      %801 = vmatpush1.msra.mxu0 0.0
      %802 = vmatprep.subr.mxu0 0.0
      %803 = vmatpush1.msra.mxu0 0.0
      %804 = vmatprep.subr.mxu0 0.0
      %805 = vmatpush1.msra.mxu0 0.0
      %806 = vmatprep.subr.mxu0 0.0
      %807 = vmatpush1.msra.mxu0 0.0
      %808 = vmatprep.subr.mxu0 0.0
      %809 = vmatpush1.msra.mxu0 0.0
      %810 = vmatprep.subr.mxu0 0.0
      %811 = vmatpush1.msra.mxu0 0.0
      %812 = vmatprep.subr.mxu0 0.0
      %813 = vmatpush1.msra.mxu0 0.0
      %814 = vmatprep.subr.mxu0 0.0
      %815 = vmatpush1.msra.mxu0 0.0
      %816 = vmatprep.subr.mxu0 0.0
      %817 = vmatpush1.msra.mxu0 0.0
      %818 = vmatprep.subr.mxu0 0.0
      %819 = vmatpush1.msra.mxu0 0.0
      %820 = vmatprep.subr.mxu0 0.0
      %821 = vmatpush1.msra.mxu0 0.0
      %822 = vmatprep.mubr.f32.mxu0 0.0
      %823 = vmatmul.mubr.f32.gmra.mrb[0].mxu0 %v756
      %v824 = vpop.f32.mrb[0].mxu0
      %v825 = vadd.f32 %v752, %v824
      %v826 = vpop.f32.mrb[0].mxu0
      %827 = vdwg.mxu0
      %vm828 = vcmask 15360
      %v829 = vsel %vm828, %v825, -inf
      %830 = vmax.xlane.f32.xlu0 %v829
      %v831 = vpop.xlane.xlu0 %830
      %v832 = vsub.f32 %v825, %v831
      %v833 = vmul.f32 %v832, 1.442695
      %v834 = vpow.pop %v833
      %v835 = vsel %vm828, %v834, 0.0
      %836 = vadd.xlane.f32.xlu0 %v835
      %v837 = vpop.xlane.xlu0 %836
      %v838 = vrcp.pop %v837
      %v839 = vmul.f32 %v837, %v838
      %v840 = vsub.f32 2.0, %v839
      %v841 = vmul.f32 %v838, %v840
      %v842 = vmul.f32 %v834, %v841
      %843 = vst.msk [vmem:[%s290] sm:$0xff] %vm828, %v842
      %p844 = scmp.lt.s32.totalorder %s18, 1
      %s845 = scalar_select %p844, %s18, 1
      %s846 = smul.addr %s845, 8
      %s847 = scalar_lea.vmem %s7, %s846
      // Predicated region
      $region49: #{_lambda_.7} parent=47 // pred_check
        %p848 = pneg %p193
      $region50: #{_lambda_.7} parent=47 // pred_check_branch
        %850 = sbr.rel (%p848) target = $region52
      $region51: #{_lambda_.7} parent=47 // pred_region
        _
      $region52: #{_lambda_.7} parent=47 // pred_fallthru
        _
    $region48: #{_lambda_.7} parent=5 // pred_fallthru
      _
    %p851 = scmp.le.s32.totalorder 2, %s13
    // Predicated region
    $region53: #{_lambda_.7} parent=5 // pred_check
      %p852 = pneg %p851
    $region54: #{_lambda_.7} parent=5 // pred_check_branch
      %854 = sbr.rel (%p852) target = $region56
    $region55: #{_lambda_.7} parent=5 // pred_region
      %s855 = ssub.s32 %s13, 2
      // Predicated region
      $region57: #{_lambda_.7} parent=55 // pred_check
        %p856 = pneg %p199
      $region58: #{_lambda_.7} parent=55 // pred_check_branch
        %858 = sbr.rel (%p856) target = $region60
      $region59: #{_lambda_.7} parent=55 // pred_region
        %p859 = scmp.lt.s32.totalorder %s19, 1
        %s860 = scalar_select %p859, %s19, 1
        %s861 = smul.addr %s860, 8
        %s862 = scalar_lea.vmem %s7, %s861
      $region60: #{_lambda_.7} parent=55 // pred_fallthru
        _
    $region56: #{_lambda_.7} parent=5 // pred_fallthru
      _
  $region6: #{_lambda_.7} parent=0 // loop_footer
    %s17 = sadd.s32 1, %s13
  $region7: #{_lambda_.7} parent=0 // loop_footer_branch
    %12 = sbr.rel target = $region3
  $region8: #{_lambda_.7} parent=0 // loop_exit
    _

</llo_original>
